<compile_context>
chip_gen: v7x
topology: tpu7x:2x2x1
jax: 0.10.0
libtpu: 0.0.40
codegen_flags: <defaults>
</compile_context>

<pallas_src>
import functools

import jax
import jax.numpy as jnp
import numpy as np
from jax.experimental import pallas as pl
from jax.experimental.pallas import tpu as pltpu

DILATION_RATE = 1  # dilation = DILATION_RATE ** layer  (== 1 for all layers here)


# ------------------------- flip-folding bookkeeping --------------------------

def _flip_parities(n_flows):
    """Parities p_a[t], p_b[t] (t=0..n_flows): true_half = reverse_rows^p(stored)."""
    p_a, p_b = [0], [0]
    for t in range(1, n_flows + 1):
        p_a.append((1 + p_b[t - 1]) % 2)
        p_b.append((1 + p_a[t - 1]) % 2)
    return p_a, p_b


def pack_block_params(flow_params, matmul_dtype=jnp.bfloat16):
    """Stack per-flow params along n_flows, fold the channel Flip into the
    pre/post 1x1 weights, fold the post 1x1 into the skip half of the per-layer
    res/skip weights, and reshape the K-tap conv weights for im2col.

    Returns dict:
      pre_w  (F, H, half)        f32   flip-folded columns (VPU rank-1 path)
      pre_b  (F, H, 1)           f32
      in_w   (F, L, 2H, K*H)     mm    im2col, tap-major columns
      in_b   (F, L, 2H, 1)       f32
      rsf_w  (F, L, H+half, H)   mm    rows [:H] residual, rows [H:] = post_w @ skip_w
      res_b  (F, L, H, 1)        f32   residual bias (last layer unused)
      postb  (F, half, 1)        f32   post_b + post_w @ sum_i skip_bias_i (flip-folded)
    """
    n_flows = len(flow_params)
    H, half = flow_params[0]['pre_w'].shape
    n_layers, K = flow_params[0]['in_w'].shape[:2]
    p_a, _ = _flip_parities(n_flows)

    acc = {k: [] for k in ('pre_w', 'pre_b', 'in_w', 'in_b',
                           'rsf_w', 'res_b', 'postb')}
    for f, p in enumerate(flow_params):
        # pre consumes the stored half whose rows are reversed iff p_a[f] == 1
        pre_w = p['pre_w'][:, ::-1] if p_a[f] == 1 else p['pre_w']
        # post must emit R^(p_a[f+1]+1)(m); apply row reversal iff p_a[f+1] == 0
        if p_a[f + 1] == 0:
            post_w, post_b = p['post_w'][::-1, :], p['post_b'][::-1, :]
        else:
            post_w, post_b = p['post_w'], p['post_b']
        # (L, K, 2H, H) -> (L, 2H, K*H): columns are tap-major, matching the tap
        # stacking order used inside the kernel.
        in_w = jnp.transpose(p['in_w'], (0, 2, 1, 3)).reshape(
            n_layers, 2 * H, K * H)

        # Fold post_w into the skip half of the per-layer res/skip weights.
        # Exact: the time mask is a column mask and commutes with the left
        # multiply, and mask*mask == mask.
        rsf_w, res_b = [], []
        postb = post_b
        for i in range(n_layers):
            if i < n_layers - 1:
                res_w_i = p['rs_w'][i][:H]
                res_b_i = p['rs_b'][i][:H]
                skip_w_i = post_w @ p['rs_w'][i][H:]
                skip_b_i = post_w @ p['rs_b'][i][H:]
            else:  # last WN layer feeds skip only
                res_w_i = jnp.zeros((H, H), jnp.float32)
                res_b_i = jnp.zeros((H, 1), jnp.float32)
                skip_w_i = post_w @ p['rs_w'][i][:H]
                skip_b_i = post_w @ p['rs_b'][i][:H]
            rsf_w.append(jnp.concatenate([res_w_i, skip_w_i], axis=0))
            res_b.append(res_b_i)
            postb = postb + skip_b_i

        acc['pre_w'].append(pre_w)
        acc['pre_b'].append(p['pre_b'])
        acc['in_w'].append(in_w)
        acc['in_b'].append(p['in_b'])
        acc['rsf_w'].append(jnp.stack(rsf_w))
        acc['res_b'].append(jnp.stack(res_b))
        acc['postb'].append(postb)

    packed = {k: jnp.stack(v) for k, v in acc.items()}
    packed['in_w'] = packed['in_w'].astype(matmul_dtype)
    packed['rsf_w'] = packed['rsf_w'].astype(matmul_dtype)
    return packed


# --------------------------------- kernel ------------------------------------

def _fused_block_kernel(x_ref, mask_ref, pre_w_ref, pre_b_ref, in_w_ref,
                        in_b_ref, rsf_w_ref, res_b_ref, postb_ref,
                        o_ref, a_ref, b_ref, stk_ref, *, seg_len):
    f = pl.program_id(0)
    n_flows = pl.num_programs(0)
    C, Ttot = x_ref.shape
    half = C // 2
    H = pre_w_ref.shape[0]
    n_layers = in_w_ref.shape[0]
    K = in_w_ref.shape[2] // H
    mm_dtype = stk_ref.dtype

    # Seed the VMEM-resident carry with the (already lane-folded) input.
    @pl.when(f == 0)
    def _():
        a_ref[...] = x_ref[:half, :].astype(jnp.float32)
        b_ref[...] = x_ref[half:, :].astype(jnp.float32)

    maskf = mask_ref[...].astype(jnp.float32)                 # (1, Ttot) row

    # Per-shift segment-validity rows (1, Ttot): a conv tap must not read across
    # a batch-segment boundary of the folded lane axis (== per-batch SAME zero
    # padding).  Cheap VPU iota/compare, recomputed per flow; kept as rows (not
    # pre-broadcast to (H, Ttot)) to keep vreg pressure low.
    tpos = jax.lax.broadcasted_iota(jnp.int32, (1, Ttot), 1) % seg_len
    shifts = sorted({(k - K // 2) * (DILATION_RATE ** i)
                     for i in range(n_layers) for k in range(K)} - {0})
    seg_row = {}
    for s in shifts:
        ok = ((tpos + s) >= 0) & ((tpos + s) <= seg_len - 1)
        seg_row[s] = ok.astype(jnp.float32)

    a = a_ref[...]   # stored "x0" half (flip folded into weights)
    b = b_ref[...]   # stored "x1" half

    # pre: Conv1d(half, H, 1).  Contraction depth = half (2) would fill 2/256 of
    # the MXU rows; do it as rank-1 VPU multiply-adds instead.
    if half <= 8:
        pw = pre_w_ref[...]
        h = pw[:, 0:1] * a[0:1, :]
        for c in range(1, half):
            h = h + pw[:, c:c + 1] * a[c:c + 1, :]
    else:  # generic fallback for wide halves
        h = jnp.dot(pre_w_ref[...], a, preferred_element_type=jnp.float32)
    h = (h + pre_b_ref[...]) * maskf

    # WaveNet stack: im2col'ed K-tap conv -> gated unit -> fused res/skip 1x1
    # (post 1x1 already folded into the skip rows on the host).
    skip = None
    for i in range(n_layers):
        dil = DILATION_RATE ** i
        for k in range(K):
            s = (k - K // 2) * dil
            if s == 0:
                tap = h
            else:
                # tap[t] = h[t + s] within the same batch segment, else 0
                tap = pltpu.roll(h, (-s) % Ttot, axis=1) * seg_row[s]
            stk_ref[k * H:(k + 1) * H, :] = tap.astype(mm_dtype)
        z = jnp.dot(in_w_ref[i], stk_ref[...],
                    preferred_element_type=jnp.float32) + in_b_ref[i]
        acts = (jnp.tanh(z[:H, :]) * jax.nn.sigmoid(z[H:, :])).astype(mm_dtype)
        rs = jnp.dot(rsf_w_ref[i], acts, preferred_element_type=jnp.float32)
        if i < n_layers - 1:
            h = (h + rs[:H, :] + res_b_ref[i]) * maskf
        skip = rs[H:, :] if skip is None else skip + rs[H:, :]

    # mean_only -> logs = 0; coupling update (channel Flip folded into weights).
    m = (skip + postb_ref[...]) * maskf
    new_a = m + b * maskf

    @pl.when(f < n_flows - 1)
    def _():
        a_ref[...] = new_a
        b_ref[...] = a

    @pl.when(f == n_flows - 1)
    def _():
        o_ref[:half, :] = new_a.astype(o_ref.dtype)
        o_ref[half:, :] = a.astype(o_ref.dtype)


def _vits_residual_coupling_block_impl(x, x_mask, packed):
    B, C, T = x.shape
    half = C // 2
    n_flows, H, _ = packed['pre_w'].shape
    n_layers = packed['in_w'].shape[1]
    KH = packed['in_w'].shape[3]
    Ttot = B * T
    mm_dtype = packed['in_w'].dtype

    # Host-side batch->lane fold: (B, C, T) -> (C, B*T), mask -> (1, B*T).
    xf = jnp.transpose(x, (1, 0, 2)).reshape(C, Ttot)
    maskf = jnp.transpose(x_mask, (1, 0, 2)).reshape(1, Ttot)

    kernel = functools.partial(_fused_block_kernel, seg_len=T)

    # TODO(synk): for production T (500-2000 frames) add a lane-axis grid tile
    # with +/-2 halo handling, and on v7x split the folded lane axis (or batch)
    # across the 2 TensorCores; at this test shape the kernel is latency-bound
    # and a single program per flow is the right form.
    in_specs = [
        pl.BlockSpec((C, Ttot), lambda f: (0, 0)),                            # x (resident)
        pl.BlockSpec((1, Ttot), lambda f: (0, 0)),                            # mask (resident)
        pl.BlockSpec((None, H, half), lambda f: (f, 0, 0)),                   # pre_w
        pl.BlockSpec((None, H, 1), lambda f: (f, 0, 0)),                      # pre_b
        pl.BlockSpec((None, n_layers, 2 * H, KH), lambda f: (f, 0, 0, 0)),    # in_w
        pl.BlockSpec((None, n_layers, 2 * H, 1), lambda f: (f, 0, 0, 0)),     # in_b
        pl.BlockSpec((None, n_layers, H + half, H), lambda f: (f, 0, 0, 0)),  # rsf_w
        pl.BlockSpec((None, n_layers, H, 1), lambda f: (f, 0, 0, 0)),         # res_b
        pl.BlockSpec((None, half, 1), lambda f: (f, 0, 0)),                   # postb
    ]

    out = pl.pallas_call(
        kernel,
        out_shape=jax.ShapeDtypeStruct((C, Ttot), x.dtype),
        grid=(n_flows,),
        in_specs=in_specs,
        out_specs=pl.BlockSpec((C, Ttot), lambda f: (0, 0)),
        scratch_shapes=[pltpu.VMEM((half, Ttot), jnp.float32),   # carry: x0 half
                        pltpu.VMEM((half, Ttot), jnp.float32),   # carry: x1 half
                        pltpu.VMEM((KH, Ttot), mm_dtype)],       # im2col tap buffer
        compiler_params=pltpu.CompilerParams(
            dimension_semantics=("arbitrary",)),                 # serial flow chain
    )(xf, maskf, packed['pre_w'], packed['pre_b'], packed['in_w'],
      packed['in_b'], packed['rsf_w'], packed['res_b'], packed['postb'])

    # Residual flip parity after the last flow (identity when n_flows is even).
    p_a, p_b = _flip_parities(n_flows)
    if p_a[n_flows] == 1:
        out = out.at[:half].set(out[:half][::-1])
    if p_b[n_flows] == 1:
        out = out.at[half:].set(out[half:][::-1])

    # Unfold lanes back to (B, C, T).
    return jnp.transpose(out.reshape(C, B, T), (1, 0, 2))


@jax.jit
def vits_residual_coupling_block(x, x_mask, packed):
    # forward (reverse=False): 4 x [coupling -> flip], fused into one kernel
    return _vits_residual_coupling_block_impl(x, x_mask, packed)


# --------------------------- parameters & reference ---------------------------

def init_flow_params(key, half, hidden, kernel_size, n_layers):
    ks = jax.random.split(key, 8)
    s = 0.1
    # NOTE: PyTorch __init__ zero-inits `post` (training init); small random
    # values are used so the synthetic test exercises non-trivial math.
    # weight_norm is folded into effective weights.
    return {
        'pre_w':  jax.random.normal(ks[0], (hidden, half), jnp.float32) * s,
        'pre_b':  jax.random.normal(ks[1], (hidden, 1), jnp.float32) * s,
        'in_w':   jax.random.normal(ks[2], (n_layers, kernel_size, 2 * hidden, hidden), jnp.float32) * s,
        'in_b':   jax.random.normal(ks[3], (n_layers, 2 * hidden, 1), jnp.float32) * s,
        'rs_w':   jax.random.normal(ks[4], (n_layers, 2 * hidden, hidden), jnp.float32) * s,
        'rs_b':   jax.random.normal(ks[5], (n_layers, 2 * hidden, 1), jnp.float32) * s,
        'post_w': jax.random.normal(ks[6], (half, hidden), jnp.float32) * s,
        'post_b': jax.random.normal(ks[7], (half, 1), jnp.float32) * s,
    }


def _shift_time_b(x, s):
    B, C, T = x.shape
    if s == 0:
        return x
    z = jnp.zeros((B, C, abs(s)), x.dtype)
    if s > 0:
        return jnp.concatenate([x[:, :, s:], z], axis=2)
    return jnp.concatenate([z, x[:, :, :T + s]], axis=2)


def _flow_reference(x, mask, p):
    hi = jax.lax.Precision.HIGHEST
    half = x.shape[1] // 2
    x0, x1 = x[:, :half], x[:, half:]
    h = (jnp.einsum('oc,bct->bot', p['pre_w'], x0, precision=hi) + p['pre_b'][None]) * mask
    H = h.shape[1]
    skip = jnp.zeros_like(h)
    L, K = p['in_w'].shape[0], p['in_w'].shape[1]
    for i in range(L):
        dil = DILATION_RATE ** i
        x_in = jnp.zeros((x.shape[0], 2 * H, x.shape[2]), jnp.float32)
        for k in range(K):
            x_in = x_in + jnp.einsum('oc,bct->bot', p['in_w'][i, k],
                                     _shift_time_b(h, (k - K // 2) * dil), precision=hi)
        x_in = x_in + p['in_b'][i][None]
        acts = jnp.tanh(x_in[:, :H]) * jax.nn.sigmoid(x_in[:, H:])
        rs = jnp.einsum('oc,bct->bot', p['rs_w'][i], acts, precision=hi) + p['rs_b'][i][None]
        if i < L - 1:
            h = (h + rs[:, :H]) * mask
            skip = skip + rs[:, H:]
        else:
            skip = skip + rs[:, :H]
    wn_out = skip * mask
    m = (jnp.einsum('oc,bct->bot', p['post_w'], wn_out, precision=hi) + p['post_b'][None]) * mask
    x1n = m + x1 * mask
    return jnp.flip(jnp.concatenate([x0, x1n], axis=1), axis=1)


def block_reference(x, mask, flow_params):
    for p in flow_params:
        x = _flow_reference(x, mask, p)
    return x


if __name__ == "__main__":
    B, inter_channels, hidden_channels, T = 2, 4, 32, 128
    kernel_size, wn_layers, n_flows = 5, 4, 4
    half = inter_channels // 2

    key = jax.random.PRNGKey(0)
    kx, kp = jax.random.split(key)
    x = jax.random.normal(kx, (B, inter_channels, T), jnp.float32)
    lengths = jnp.array([T, (3 * T) // 4], jnp.int32)
    x_mask = (jnp.arange(T)[None, None, :] < lengths[:, None, None]).astype(jnp.float32)

    flow_keys = jax.random.split(kp, n_flows)
    flow_params = [init_flow_params(k, half, hidden_channels, kernel_size, wn_layers)
                   for k in flow_keys]

    ref = block_reference(x, x_mask, flow_params)

    # f32 MXU operands: tight tolerance validates flip folding / post fold /
    # segment masking / coupling update exactly.
    packed_f32 = pack_block_params(flow_params, matmul_dtype=jnp.float32)
    out_f32 = jax.block_until_ready(vits_residual_coupling_block(x, x_mask, packed_f32))
    assert out_f32.shape == x.shape and out_f32.dtype == x.dtype
    np.testing.assert_allclose(np.asarray(out_f32), np.asarray(ref), rtol=2e-3, atol=2e-3)

    # bf16 MXU operands (default fast path on v6e/v7x; f32 accumulation and f32
    # elementwise math): looser tolerance for bf16 rounding accumulated across
    # 4 flows x 4 WN layers.
    packed_bf16 = pack_block_params(flow_params, matmul_dtype=jnp.bfloat16)
    out_bf16 = jax.block_until_ready(vits_residual_coupling_block(x, x_mask, packed_bf16))
    assert out_bf16.shape == x.shape and out_bf16.dtype == x.dtype
    np.testing.assert_allclose(np.asarray(out_bf16), np.asarray(ref), rtol=1e-2, atol=1e-2)

    print("KERNEL_OK")
</pallas_src>

<mosaic_0001>
module attributes {stable_mosaic.version = 11 : i64} {
  func.func @_fused_block_kernel(%arg0: i32, %arg1: memref<4x256xf32, #tpu.memory_space<vmem>>, %arg2: memref<1x256xf32, #tpu.memory_space<vmem>>, %arg3: memref<1x32x2xf32, #tpu.memory_space<vmem>>, %arg4: memref<1x32x1xf32, #tpu.memory_space<vmem>>, %arg5: memref<1x4x64x160xf32, #tpu.memory_space<vmem>>, %arg6: memref<1x4x64x1xf32, #tpu.memory_space<vmem>>, %arg7: memref<1x4x34x32xf32, #tpu.memory_space<vmem>>, %arg8: memref<1x4x32x1xf32, #tpu.memory_space<vmem>>, %arg9: memref<1x2x1xf32, #tpu.memory_space<vmem>>, %arg10: memref<4x256xf32, #tpu.memory_space<vmem>>, %arg11: memref<2x256xf32, #tpu.memory_space<vmem>>, %arg12: memref<2x256xf32, #tpu.memory_space<vmem>>, %arg13: memref<160x256xf32, #tpu.memory_space<vmem>>) attributes {dimension_semantics = [#tpu.dimension_semantics<arbitrary>], iteration_bounds = array<i64: 4>, scalar_prefetch = 0 : i64, scratch_operands = 3 : i64, tpu.core_type = #tpu.core_type<tc>, window_params = [{pipeline_mode = #tpu.pipeline_mode<synchronous>, transform_indices = @transform_0, window_bounds = array<i64: 4, 256>}, {pipeline_mode = #tpu.pipeline_mode<synchronous>, transform_indices = @transform_1, window_bounds = array<i64: 1, 256>}, {transform_indices = @transform_2, window_bounds = array<i64: 1, 32, 2>}, {transform_indices = @transform_3, window_bounds = array<i64: 1, 32, 1>}, {transform_indices = @transform_4, window_bounds = array<i64: 1, 4, 64, 160>}, {transform_indices = @transform_5, window_bounds = array<i64: 1, 4, 64, 1>}, {transform_indices = @transform_6, window_bounds = array<i64: 1, 4, 34, 32>}, {transform_indices = @transform_7, window_bounds = array<i64: 1, 4, 32, 1>}, {transform_indices = @transform_8, window_bounds = array<i64: 1, 2, 1>}, {pipeline_mode = #tpu.pipeline_mode<synchronous>, transform_indices = @transform_9, window_bounds = array<i64: 4, 256>}]} {
    %c0_i32 = arith.constant 0 : i32
    %0 = arith.cmpi eq, %arg0, %c0_i32 : i32
    %1 = arith.extui %0 : i1 to i32
    %c0_i32_0 = arith.constant 0 : i32
    %2 = arith.cmpi ne, %1, %c0_i32_0 : i32
    scf.if %2 {
      %c0_160 = arith.constant 0 : index
      %c0_161 = arith.constant 0 : index
      %280 = vector.load %arg1[%c0_160, %c0_161] : memref<4x256xf32, #tpu.memory_space<vmem>>, vector<2x256xf32>
      %c0_162 = arith.constant 0 : index
      %c0_163 = arith.constant 0 : index
      %281 = vector.load %arg11[%c0_162, %c0_163] : memref<2x256xf32, #tpu.memory_space<vmem>>, vector<2x256xf32>
      tpu.vector_store %arg11[%c0_162, %c0_163], %280 {strides = array<i32>} : memref<2x256xf32, #tpu.memory_space<vmem>>, vector<2x256xf32>,
      %c2_164 = arith.constant 2 : index
      %c0_165 = arith.constant 0 : index
      %282 = vector.load %arg1[%c2_164, %c0_165] : memref<4x256xf32, #tpu.memory_space<vmem>>, vector<2x256xf32>
      %c0_166 = arith.constant 0 : index
      %c0_167 = arith.constant 0 : index
      %283 = vector.load %arg12[%c0_166, %c0_167] : memref<2x256xf32, #tpu.memory_space<vmem>>, vector<2x256xf32>
      tpu.vector_store %arg12[%c0_166, %c0_167], %282 {strides = array<i32>} : memref<2x256xf32, #tpu.memory_space<vmem>>, vector<2x256xf32>,
    } else {
    }
    %c0 = arith.constant 0 : index
    %c0_1 = arith.constant 0 : index
    %3 = vector.load %arg2[%c0, %c0_1] : memref<1x256xf32, #tpu.memory_space<vmem>>, vector<1x256xf32>
    %4 = tpu.iota {dimensions = array<i32: 1>} : vector<1x256xi32>
    %c128_i32 = arith.constant 128 : i32
    %c0_i32_2 = arith.constant 0 : i32
    %5 = arith.cmpi eq, %c128_i32, %c0_i32_2 : i32
    %c1_i32 = arith.constant 1 : i32
    %6 = arith.select %5, %c1_i32, %c128_i32 : i32
    %7 = vector.broadcast %6 : i32 to vector<1x256xi32>
    %8 = arith.remsi %4, %7 : vector<1x256xi32>
    %c0_i32_3 = arith.constant 0 : i32
    %9 = vector.broadcast %c0_i32_3 : i32 to vector<1x256xi32>
    %10 = arith.cmpi ne, %8, %9 : vector<1x256xi32>
    %c0_i32_4 = arith.constant 0 : i32
    %11 = vector.broadcast %c0_i32_4 : i32 to vector<1x256xi32>
    %12 = arith.cmpi slt, %8, %11 : vector<1x256xi32>
    %c0_i32_5 = arith.constant 0 : i32
    %13 = arith.cmpi slt, %6, %c0_i32_5 : i32
    %14 = vector.broadcast %13 : i1 to vector<1x256xi1>
    %15 = vector.broadcast %14 : vector<1x256xi1> to vector<1x256xi1>
    %16 = arith.xori %12, %15 : vector<1x256xi1>
    %17 = arith.andi %16, %10 : vector<1x256xi1>
    %18 = vector.broadcast %6 : i32 to vector<1x256xi32>
    %19 = arith.addi %8, %18 : vector<1x256xi32>
    %20 = arith.select %17, %19, %8 : vector<1x256xi1>, vector<1x256xi32>
    %c-2_i32 = arith.constant -2 : i32
    %21 = vector.broadcast %c-2_i32 : i32 to vector<1x256xi32>
    %22 = arith.addi %20, %21 : vector<1x256xi32>
    %c0_i32_6 = arith.constant 0 : i32
    %23 = vector.broadcast %c0_i32_6 : i32 to vector<1x256xi32>
    %24 = arith.cmpi sge, %22, %23 : vector<1x256xi32>
    %c-2_i32_7 = arith.constant -2 : i32
    %25 = vector.broadcast %c-2_i32_7 : i32 to vector<1x256xi32>
    %26 = arith.addi %20, %25 : vector<1x256xi32>
    %c127_i32 = arith.constant 127 : i32
    %27 = vector.broadcast %c127_i32 : i32 to vector<1x256xi32>
    %28 = arith.cmpi sle, %26, %27 : vector<1x256xi32>
    %29 = arith.andi %24, %28 : vector<1x256xi1>
    %30 = arith.extui %29 : vector<1x256xi1> to vector<1x256xi32>
    %31 = arith.sitofp %30 : vector<1x256xi32> to vector<1x256xf32>
    %c-1_i32 = arith.constant -1 : i32
    %32 = vector.broadcast %c-1_i32 : i32 to vector<1x256xi32>
    %33 = arith.addi %20, %32 : vector<1x256xi32>
    %c0_i32_8 = arith.constant 0 : i32
    %34 = vector.broadcast %c0_i32_8 : i32 to vector<1x256xi32>
    %35 = arith.cmpi sge, %33, %34 : vector<1x256xi32>
    %c-1_i32_9 = arith.constant -1 : i32
    %36 = vector.broadcast %c-1_i32_9 : i32 to vector<1x256xi32>
    %37 = arith.addi %20, %36 : vector<1x256xi32>
    %c127_i32_10 = arith.constant 127 : i32
    %38 = vector.broadcast %c127_i32_10 : i32 to vector<1x256xi32>
    %39 = arith.cmpi sle, %37, %38 : vector<1x256xi32>
    %40 = arith.andi %35, %39 : vector<1x256xi1>
    %41 = arith.extui %40 : vector<1x256xi1> to vector<1x256xi32>
    %42 = arith.sitofp %41 : vector<1x256xi32> to vector<1x256xf32>
    %c1_i32_11 = arith.constant 1 : i32
    %43 = vector.broadcast %c1_i32_11 : i32 to vector<1x256xi32>
    %44 = arith.addi %20, %43 : vector<1x256xi32>
    %c0_i32_12 = arith.constant 0 : i32
    %45 = vector.broadcast %c0_i32_12 : i32 to vector<1x256xi32>
    %46 = arith.cmpi sge, %44, %45 : vector<1x256xi32>
    %c1_i32_13 = arith.constant 1 : i32
    %47 = vector.broadcast %c1_i32_13 : i32 to vector<1x256xi32>
    %48 = arith.addi %20, %47 : vector<1x256xi32>
    %c127_i32_14 = arith.constant 127 : i32
    %49 = vector.broadcast %c127_i32_14 : i32 to vector<1x256xi32>
    %50 = arith.cmpi sle, %48, %49 : vector<1x256xi32>
    %51 = arith.andi %46, %50 : vector<1x256xi1>
    %52 = arith.extui %51 : vector<1x256xi1> to vector<1x256xi32>
    %53 = arith.sitofp %52 : vector<1x256xi32> to vector<1x256xf32>
    %c2_i32 = arith.constant 2 : i32
    %54 = vector.broadcast %c2_i32 : i32 to vector<1x256xi32>
    %55 = arith.addi %20, %54 : vector<1x256xi32>
    %c0_i32_15 = arith.constant 0 : i32
    %56 = vector.broadcast %c0_i32_15 : i32 to vector<1x256xi32>
    %57 = arith.cmpi sge, %55, %56 : vector<1x256xi32>
    %c2_i32_16 = arith.constant 2 : i32
    %58 = vector.broadcast %c2_i32_16 : i32 to vector<1x256xi32>
    %59 = arith.addi %20, %58 : vector<1x256xi32>
    %c127_i32_17 = arith.constant 127 : i32
    %60 = vector.broadcast %c127_i32_17 : i32 to vector<1x256xi32>
    %61 = arith.cmpi sle, %59, %60 : vector<1x256xi32>
    %62 = arith.andi %57, %61 : vector<1x256xi1>
    %63 = arith.extui %62 : vector<1x256xi1> to vector<1x256xi32>
    %64 = arith.sitofp %63 : vector<1x256xi32> to vector<1x256xf32>
    %c0_18 = arith.constant 0 : index
    %c0_19 = arith.constant 0 : index
    %65 = vector.load %arg11[%c0_18, %c0_19] : memref<2x256xf32, #tpu.memory_space<vmem>>, vector<2x256xf32>
    %c0_20 = arith.constant 0 : index
    %c0_21 = arith.constant 0 : index
    %66 = vector.load %arg12[%c0_20, %c0_21] : memref<2x256xf32, #tpu.memory_space<vmem>>, vector<2x256xf32>
    %c0_22 = arith.constant 0 : index
    %c0_23 = arith.constant 0 : index
    %c0_24 = arith.constant 0 : index
    %67 = vector.load %arg3[%c0_22, %c0_23, %c0_24] : memref<1x32x2xf32, #tpu.memory_space<vmem>>, vector<1x32x2xf32>
    %68 = vector.shape_cast %67 : vector<1x32x2xf32> to vector<32x2xf32>
    %69 = vector.extract_strided_slice %68 {offsets = [0, 0], sizes = [32, 1], strides = [1, 1]} : vector<32x2xf32> to vector<32x1xf32>
    %70 = vector.extract_strided_slice %65 {offsets = [0, 0], sizes = [1, 256], strides = [1, 1]} : vector<2x256xf32> to vector<1x256xf32>
    %71 = vector.broadcast %69 : vector<32x1xf32> to vector<32x256xf32>
    %72 = vector.broadcast %70 : vector<1x256xf32> to vector<32x256xf32>
    %73 = arith.mulf %71, %72 : vector<32x256xf32>
    %74 = vector.extract_strided_slice %68 {offsets = [0, 1], sizes = [32, 1], strides = [1, 1]} : vector<32x2xf32> to vector<32x1xf32>
    %75 = vector.extract_strided_slice %65 {offsets = [1, 0], sizes = [1, 256], strides = [1, 1]} : vector<2x256xf32> to vector<1x256xf32>
    %76 = vector.broadcast %74 : vector<32x1xf32> to vector<32x256xf32>
    %77 = vector.broadcast %75 : vector<1x256xf32> to vector<32x256xf32>
    %78 = arith.mulf %76, %77 : vector<32x256xf32>
    %79 = arith.addf %73, %78 : vector<32x256xf32>
    %c0_25 = arith.constant 0 : index
    %c0_26 = arith.constant 0 : index
    %c0_27 = arith.constant 0 : index
    %80 = vector.load %arg4[%c0_25, %c0_26, %c0_27] : memref<1x32x1xf32, #tpu.memory_space<vmem>>, vector<1x32x1xf32>
    %81 = vector.shape_cast %80 : vector<1x32x1xf32> to vector<32x1xf32>
    %82 = vector.broadcast %81 : vector<32x1xf32> to vector<32x256xf32>
    %83 = arith.addf %79, %82 : vector<32x256xf32>
    %84 = vector.broadcast %3 : vector<1x256xf32> to vector<32x256xf32>
    %85 = arith.mulf %83, %84 : vector<32x256xf32>
    %c2_i32_28 = arith.constant 2 : i32
    %86 = tpu.dynamic_rotate %85 by %c2_i32_28 dim 1 : vector<32x256xf32>, i32 -> vector<32x256xf32>
    %87 = vector.broadcast %31 : vector<1x256xf32> to vector<32x256xf32>
    %88 = arith.mulf %86, %87 : vector<32x256xf32>
    %c0_29 = arith.constant 0 : index
    %c0_30 = arith.constant 0 : index
    %89 = vector.load %arg13[%c0_29, %c0_30] : memref<160x256xf32, #tpu.memory_space<vmem>>, vector<32x256xf32>
    tpu.vector_store %arg13[%c0_29, %c0_30], %88 {strides = array<i32>} : memref<160x256xf32, #tpu.memory_space<vmem>>, vector<32x256xf32>,
    %c1_i32_31 = arith.constant 1 : i32
    %90 = tpu.dynamic_rotate %85 by %c1_i32_31 dim 1 : vector<32x256xf32>, i32 -> vector<32x256xf32>
    %91 = vector.broadcast %42 : vector<1x256xf32> to vector<32x256xf32>
    %92 = arith.mulf %90, %91 : vector<32x256xf32>
    %c32 = arith.constant 32 : index
    %c0_32 = arith.constant 0 : index
    %93 = vector.load %arg13[%c32, %c0_32] : memref<160x256xf32, #tpu.memory_space<vmem>>, vector<32x256xf32>
    tpu.vector_store %arg13[%c32, %c0_32], %92 {strides = array<i32>} : memref<160x256xf32, #tpu.memory_space<vmem>>, vector<32x256xf32>,
    %c64 = arith.constant 64 : index
    %c0_33 = arith.constant 0 : index
    %94 = vector.load %arg13[%c64, %c0_33] : memref<160x256xf32, #tpu.memory_space<vmem>>, vector<32x256xf32>
    tpu.vector_store %arg13[%c64, %c0_33], %85 {strides = array<i32>} : memref<160x256xf32, #tpu.memory_space<vmem>>, vector<32x256xf32>,
    %c255_i32 = arith.constant 255 : i32
    %95 = tpu.dynamic_rotate %85 by %c255_i32 dim 1 : vector<32x256xf32>, i32 -> vector<32x256xf32>
    %96 = vector.broadcast %53 : vector<1x256xf32> to vector<32x256xf32>
    %97 = arith.mulf %95, %96 : vector<32x256xf32>
    %c96 = arith.constant 96 : index
    %c0_34 = arith.constant 0 : index
    %98 = vector.load %arg13[%c96, %c0_34] : memref<160x256xf32, #tpu.memory_space<vmem>>, vector<32x256xf32>
    tpu.vector_store %arg13[%c96, %c0_34], %97 {strides = array<i32>} : memref<160x256xf32, #tpu.memory_space<vmem>>, vector<32x256xf32>,
    %c254_i32 = arith.constant 254 : i32
    %99 = tpu.dynamic_rotate %85 by %c254_i32 dim 1 : vector<32x256xf32>, i32 -> vector<32x256xf32>
    %100 = vector.broadcast %64 : vector<1x256xf32> to vector<32x256xf32>
    %101 = arith.mulf %99, %100 : vector<32x256xf32>
    %c128 = arith.constant 128 : index
    %c0_35 = arith.constant 0 : index
    %102 = vector.load %arg13[%c128, %c0_35] : memref<160x256xf32, #tpu.memory_space<vmem>>, vector<32x256xf32>
    tpu.vector_store %arg13[%c128, %c0_35], %101 {strides = array<i32>} : memref<160x256xf32, #tpu.memory_space<vmem>>, vector<32x256xf32>,
    %c0_36 = arith.constant 0 : index
    %c0_37 = arith.constant 0 : index
    %c0_38 = arith.constant 0 : index
    %c0_39 = arith.constant 0 : index
    %103 = vector.load %arg5[%c0_36, %c0_37, %c0_38, %c0_39] : memref<1x4x64x160xf32, #tpu.memory_space<vmem>>, vector<1x1x64x160xf32>
    %104 = vector.shape_cast %103 : vector<1x1x64x160xf32> to vector<64x160xf32>
    %c0_40 = arith.constant 0 : index
    %c0_41 = arith.constant 0 : index
    %105 = vector.load %arg13[%c0_40, %c0_41] : memref<160x256xf32, #tpu.memory_space<vmem>>, vector<160x256xf32>
    %cst = arith.constant dense<0.000000e+00> : vector<64x256xf32>
    %106 = tpu.matmul %104, %105, %cst {dimension_numbers = #tpu.dot_dimension_numbers<[1], [0], [0], [1], [0, 0, 1, 1], [], []>} : vector<64x160xf32>, vector<160x256xf32>, vector<64x256xf32> -> vector<64x256xf32>
    %c0_42 = arith.constant 0 : index
    %c0_43 = arith.constant 0 : index
    %c0_44 = arith.constant 0 : index
    %c0_45 = arith.constant 0 : index
    %107 = vector.load %arg6[%c0_42, %c0_43, %c0_44, %c0_45] : memref<1x4x64x1xf32, #tpu.memory_space<vmem>>, vector<1x1x64x1xf32>
    %108 = vector.shape_cast %107 : vector<1x1x64x1xf32> to vector<64x1xf32>
    %109 = vector.broadcast %108 : vector<64x1xf32> to vector<64x256xf32>
    %110 = arith.addf %106, %109 : vector<64x256xf32>
    %111 = vector.extract_strided_slice %110 {offsets = [0, 0], sizes = [32, 256], strides = [1, 1]} : vector<64x256xf32> to vector<32x256xf32>
    %112 = math.tanh %111 : vector<32x256xf32>
    %113 = vector.extract_strided_slice %110 {offsets = [32, 0], sizes = [32, 256], strides = [1, 1]} : vector<64x256xf32> to vector<32x256xf32>
    %114 = arith.negf %113 : vector<32x256xf32>
    %115 = math.exp %114 : vector<32x256xf32>
    %cst_46 = arith.constant 1.000000e+00 : f32
    %116 = vector.broadcast %cst_46 : f32 to vector<32x256xf32>
    %117 = arith.addf %116, %115 : vector<32x256xf32>
    %118 = arith.divf %116, %117 : vector<32x256xf32>
    %119 = arith.mulf %112, %118 : vector<32x256xf32>
    %c0_47 = arith.constant 0 : index
    %c0_48 = arith.constant 0 : index
    %c0_49 = arith.constant 0 : index
    %c0_50 = arith.constant 0 : index
    %120 = vector.load %arg7[%c0_47, %c0_48, %c0_49, %c0_50] : memref<1x4x34x32xf32, #tpu.memory_space<vmem>>, vector<1x1x34x32xf32>
    %121 = vector.shape_cast %120 : vector<1x1x34x32xf32> to vector<34x32xf32>
    %cst_51 = arith.constant dense<0.000000e+00> : vector<34x256xf32>
    %122 = tpu.matmul %121, %119, %cst_51 {dimension_numbers = #tpu.dot_dimension_numbers<[1], [0], [0], [1], [0, 0, 1, 1], [], []>} : vector<34x32xf32>, vector<32x256xf32>, vector<34x256xf32> -> vector<34x256xf32>
    %123 = vector.extract_strided_slice %122 {offsets = [0, 0], sizes = [32, 256], strides = [1, 1]} : vector<34x256xf32> to vector<32x256xf32>
    %124 = arith.addf %85, %123 : vector<32x256xf32>
    %c0_52 = arith.constant 0 : index
    %c0_53 = arith.constant 0 : index
    %c0_54 = arith.constant 0 : index
    %c0_55 = arith.constant 0 : index
    %125 = vector.load %arg8[%c0_52, %c0_53, %c0_54, %c0_55] : memref<1x4x32x1xf32, #tpu.memory_space<vmem>>, vector<1x1x32x1xf32>
    %126 = vector.shape_cast %125 : vector<1x1x32x1xf32> to vector<32x1xf32>
    %127 = vector.broadcast %126 : vector<32x1xf32> to vector<32x256xf32>
    %128 = arith.addf %124, %127 : vector<32x256xf32>
    %129 = vector.broadcast %3 : vector<1x256xf32> to vector<32x256xf32>
    %130 = arith.mulf %128, %129 : vector<32x256xf32>
    %131 = vector.extract_strided_slice %122 {offsets = [32, 0], sizes = [2, 256], strides = [1, 1]} : vector<34x256xf32> to vector<2x256xf32>
    %c2_i32_56 = arith.constant 2 : i32
    %132 = tpu.dynamic_rotate %130 by %c2_i32_56 dim 1 : vector<32x256xf32>, i32 -> vector<32x256xf32>
    %133 = vector.broadcast %31 : vector<1x256xf32> to vector<32x256xf32>
    %134 = arith.mulf %132, %133 : vector<32x256xf32>
    %c0_57 = arith.constant 0 : index
    %c0_58 = arith.constant 0 : index
    %135 = vector.load %arg13[%c0_57, %c0_58] : memref<160x256xf32, #tpu.memory_space<vmem>>, vector<32x256xf32>
    tpu.vector_store %arg13[%c0_57, %c0_58], %134 {strides = array<i32>} : memref<160x256xf32, #tpu.memory_space<vmem>>, vector<32x256xf32>,
    %c1_i32_59 = arith.constant 1 : i32
    %136 = tpu.dynamic_rotate %130 by %c1_i32_59 dim 1 : vector<32x256xf32>, i32 -> vector<32x256xf32>
    %137 = vector.broadcast %42 : vector<1x256xf32> to vector<32x256xf32>
    %138 = arith.mulf %136, %137 : vector<32x256xf32>
    %c32_60 = arith.constant 32 : index
    %c0_61 = arith.constant 0 : index
    %139 = vector.load %arg13[%c32_60, %c0_61] : memref<160x256xf32, #tpu.memory_space<vmem>>, vector<32x256xf32>
    tpu.vector_store %arg13[%c32_60, %c0_61], %138 {strides = array<i32>} : memref<160x256xf32, #tpu.memory_space<vmem>>, vector<32x256xf32>,
    %c64_62 = arith.constant 64 : index
    %c0_63 = arith.constant 0 : index
    %140 = vector.load %arg13[%c64_62, %c0_63] : memref<160x256xf32, #tpu.memory_space<vmem>>, vector<32x256xf32>
    tpu.vector_store %arg13[%c64_62, %c0_63], %130 {strides = array<i32>} : memref<160x256xf32, #tpu.memory_space<vmem>>, vector<32x256xf32>,
    %c255_i32_64 = arith.constant 255 : i32
    %141 = tpu.dynamic_rotate %130 by %c255_i32_64 dim 1 : vector<32x256xf32>, i32 -> vector<32x256xf32>
    %142 = vector.broadcast %53 : vector<1x256xf32> to vector<32x256xf32>
    %143 = arith.mulf %141, %142 : vector<32x256xf32>
    %c96_65 = arith.constant 96 : index
    %c0_66 = arith.constant 0 : index
    %144 = vector.load %arg13[%c96_65, %c0_66] : memref<160x256xf32, #tpu.memory_space<vmem>>, vector<32x256xf32>
    tpu.vector_store %arg13[%c96_65, %c0_66], %143 {strides = array<i32>} : memref<160x256xf32, #tpu.memory_space<vmem>>, vector<32x256xf32>,
    %c254_i32_67 = arith.constant 254 : i32
    %145 = tpu.dynamic_rotate %130 by %c254_i32_67 dim 1 : vector<32x256xf32>, i32 -> vector<32x256xf32>
    %146 = vector.broadcast %64 : vector<1x256xf32> to vector<32x256xf32>
    %147 = arith.mulf %145, %146 : vector<32x256xf32>
    %c128_68 = arith.constant 128 : index
    %c0_69 = arith.constant 0 : index
    %148 = vector.load %arg13[%c128_68, %c0_69] : memref<160x256xf32, #tpu.memory_space<vmem>>, vector<32x256xf32>
    tpu.vector_store %arg13[%c128_68, %c0_69], %147 {strides = array<i32>} : memref<160x256xf32, #tpu.memory_space<vmem>>, vector<32x256xf32>,
    %c0_70 = arith.constant 0 : index
    %c1 = arith.constant 1 : index
    %c0_71 = arith.constant 0 : index
    %c0_72 = arith.constant 0 : index
    %149 = vector.load %arg5[%c0_70, %c1, %c0_71, %c0_72] : memref<1x4x64x160xf32, #tpu.memory_space<vmem>>, vector<1x1x64x160xf32>
    %150 = vector.shape_cast %149 : vector<1x1x64x160xf32> to vector<64x160xf32>
    %c0_73 = arith.constant 0 : index
    %c0_74 = arith.constant 0 : index
    %151 = vector.load %arg13[%c0_73, %c0_74] : memref<160x256xf32, #tpu.memory_space<vmem>>, vector<160x256xf32>
    %cst_75 = arith.constant dense<0.000000e+00> : vector<64x256xf32>
    %152 = tpu.matmul %150, %151, %cst_75 {dimension_numbers = #tpu.dot_dimension_numbers<[1], [0], [0], [1], [0, 0, 1, 1], [], []>} : vector<64x160xf32>, vector<160x256xf32>, vector<64x256xf32> -> vector<64x256xf32>
    %c0_76 = arith.constant 0 : index
    %c1_77 = arith.constant 1 : index
    %c0_78 = arith.constant 0 : index
    %c0_79 = arith.constant 0 : index
    %153 = vector.load %arg6[%c0_76, %c1_77, %c0_78, %c0_79] : memref<1x4x64x1xf32, #tpu.memory_space<vmem>>, vector<1x1x64x1xf32>
    %154 = vector.shape_cast %153 : vector<1x1x64x1xf32> to vector<64x1xf32>
    %155 = vector.broadcast %154 : vector<64x1xf32> to vector<64x256xf32>
    %156 = arith.addf %152, %155 : vector<64x256xf32>
    %157 = vector.extract_strided_slice %156 {offsets = [0, 0], sizes = [32, 256], strides = [1, 1]} : vector<64x256xf32> to vector<32x256xf32>
    %158 = math.tanh %157 : vector<32x256xf32>
    %159 = vector.extract_strided_slice %156 {offsets = [32, 0], sizes = [32, 256], strides = [1, 1]} : vector<64x256xf32> to vector<32x256xf32>
    %160 = arith.negf %159 : vector<32x256xf32>
    %161 = math.exp %160 : vector<32x256xf32>
    %cst_80 = arith.constant 1.000000e+00 : f32
    %162 = vector.broadcast %cst_80 : f32 to vector<32x256xf32>
    %163 = arith.addf %162, %161 : vector<32x256xf32>
    %164 = arith.divf %162, %163 : vector<32x256xf32>
    %165 = arith.mulf %158, %164 : vector<32x256xf32>
    %c0_81 = arith.constant 0 : index
    %c1_82 = arith.constant 1 : index
    %c0_83 = arith.constant 0 : index
    %c0_84 = arith.constant 0 : index
    %166 = vector.load %arg7[%c0_81, %c1_82, %c0_83, %c0_84] : memref<1x4x34x32xf32, #tpu.memory_space<vmem>>, vector<1x1x34x32xf32>
    %167 = vector.shape_cast %166 : vector<1x1x34x32xf32> to vector<34x32xf32>
    %cst_85 = arith.constant dense<0.000000e+00> : vector<34x256xf32>
    %168 = tpu.matmul %167, %165, %cst_85 {dimension_numbers = #tpu.dot_dimension_numbers<[1], [0], [0], [1], [0, 0, 1, 1], [], []>} : vector<34x32xf32>, vector<32x256xf32>, vector<34x256xf32> -> vector<34x256xf32>
    %169 = vector.extract_strided_slice %168 {offsets = [0, 0], sizes = [32, 256], strides = [1, 1]} : vector<34x256xf32> to vector<32x256xf32>
    %170 = arith.addf %130, %169 : vector<32x256xf32>
    %c0_86 = arith.constant 0 : index
    %c1_87 = arith.constant 1 : index
    %c0_88 = arith.constant 0 : index
    %c0_89 = arith.constant 0 : index
    %171 = vector.load %arg8[%c0_86, %c1_87, %c0_88, %c0_89] : memref<1x4x32x1xf32, #tpu.memory_space<vmem>>, vector<1x1x32x1xf32>
    %172 = vector.shape_cast %171 : vector<1x1x32x1xf32> to vector<32x1xf32>
    %173 = vector.broadcast %172 : vector<32x1xf32> to vector<32x256xf32>
    %174 = arith.addf %170, %173 : vector<32x256xf32>
    %175 = vector.broadcast %3 : vector<1x256xf32> to vector<32x256xf32>
    %176 = arith.mulf %174, %175 : vector<32x256xf32>
    %177 = vector.extract_strided_slice %168 {offsets = [32, 0], sizes = [2, 256], strides = [1, 1]} : vector<34x256xf32> to vector<2x256xf32>
    %178 = arith.addf %131, %177 : vector<2x256xf32>
    %c2_i32_90 = arith.constant 2 : i32
    %179 = tpu.dynamic_rotate %176 by %c2_i32_90 dim 1 : vector<32x256xf32>, i32 -> vector<32x256xf32>
    %180 = vector.broadcast %31 : vector<1x256xf32> to vector<32x256xf32>
    %181 = arith.mulf %179, %180 : vector<32x256xf32>
    %c0_91 = arith.constant 0 : index
    %c0_92 = arith.constant 0 : index
    %182 = vector.load %arg13[%c0_91, %c0_92] : memref<160x256xf32, #tpu.memory_space<vmem>>, vector<32x256xf32>
    tpu.vector_store %arg13[%c0_91, %c0_92], %181 {strides = array<i32>} : memref<160x256xf32, #tpu.memory_space<vmem>>, vector<32x256xf32>,
    %c1_i32_93 = arith.constant 1 : i32
    %183 = tpu.dynamic_rotate %176 by %c1_i32_93 dim 1 : vector<32x256xf32>, i32 -> vector<32x256xf32>
    %184 = vector.broadcast %42 : vector<1x256xf32> to vector<32x256xf32>
    %185 = arith.mulf %183, %184 : vector<32x256xf32>
    %c32_94 = arith.constant 32 : index
    %c0_95 = arith.constant 0 : index
    %186 = vector.load %arg13[%c32_94, %c0_95] : memref<160x256xf32, #tpu.memory_space<vmem>>, vector<32x256xf32>
    tpu.vector_store %arg13[%c32_94, %c0_95], %185 {strides = array<i32>} : memref<160x256xf32, #tpu.memory_space<vmem>>, vector<32x256xf32>,
    %c64_96 = arith.constant 64 : index
    %c0_97 = arith.constant 0 : index
    %187 = vector.load %arg13[%c64_96, %c0_97] : memref<160x256xf32, #tpu.memory_space<vmem>>, vector<32x256xf32>
    tpu.vector_store %arg13[%c64_96, %c0_97], %176 {strides = array<i32>} : memref<160x256xf32, #tpu.memory_space<vmem>>, vector<32x256xf32>,
    %c255_i32_98 = arith.constant 255 : i32
    %188 = tpu.dynamic_rotate %176 by %c255_i32_98 dim 1 : vector<32x256xf32>, i32 -> vector<32x256xf32>
    %189 = vector.broadcast %53 : vector<1x256xf32> to vector<32x256xf32>
    %190 = arith.mulf %188, %189 : vector<32x256xf32>
    %c96_99 = arith.constant 96 : index
    %c0_100 = arith.constant 0 : index
    %191 = vector.load %arg13[%c96_99, %c0_100] : memref<160x256xf32, #tpu.memory_space<vmem>>, vector<32x256xf32>
    tpu.vector_store %arg13[%c96_99, %c0_100], %190 {strides = array<i32>} : memref<160x256xf32, #tpu.memory_space<vmem>>, vector<32x256xf32>,
    %c254_i32_101 = arith.constant 254 : i32
    %192 = tpu.dynamic_rotate %176 by %c254_i32_101 dim 1 : vector<32x256xf32>, i32 -> vector<32x256xf32>
    %193 = vector.broadcast %64 : vector<1x256xf32> to vector<32x256xf32>
    %194 = arith.mulf %192, %193 : vector<32x256xf32>
    %c128_102 = arith.constant 128 : index
    %c0_103 = arith.constant 0 : index
    %195 = vector.load %arg13[%c128_102, %c0_103] : memref<160x256xf32, #tpu.memory_space<vmem>>, vector<32x256xf32>
    tpu.vector_store %arg13[%c128_102, %c0_103], %194 {strides = array<i32>} : memref<160x256xf32, #tpu.memory_space<vmem>>, vector<32x256xf32>,
    %c0_104 = arith.constant 0 : index
    %c2 = arith.constant 2 : index
    %c0_105 = arith.constant 0 : index
    %c0_106 = arith.constant 0 : index
    %196 = vector.load %arg5[%c0_104, %c2, %c0_105, %c0_106] : memref<1x4x64x160xf32, #tpu.memory_space<vmem>>, vector<1x1x64x160xf32>
    %197 = vector.shape_cast %196 : vector<1x1x64x160xf32> to vector<64x160xf32>
    %c0_107 = arith.constant 0 : index
    %c0_108 = arith.constant 0 : index
    %198 = vector.load %arg13[%c0_107, %c0_108] : memref<160x256xf32, #tpu.memory_space<vmem>>, vector<160x256xf32>
    %cst_109 = arith.constant dense<0.000000e+00> : vector<64x256xf32>
    %199 = tpu.matmul %197, %198, %cst_109 {dimension_numbers = #tpu.dot_dimension_numbers<[1], [0], [0], [1], [0, 0, 1, 1], [], []>} : vector<64x160xf32>, vector<160x256xf32>, vector<64x256xf32> -> vector<64x256xf32>
    %c0_110 = arith.constant 0 : index
    %c2_111 = arith.constant 2 : index
    %c0_112 = arith.constant 0 : index
    %c0_113 = arith.constant 0 : index
    %200 = vector.load %arg6[%c0_110, %c2_111, %c0_112, %c0_113] : memref<1x4x64x1xf32, #tpu.memory_space<vmem>>, vector<1x1x64x1xf32>
    %201 = vector.shape_cast %200 : vector<1x1x64x1xf32> to vector<64x1xf32>
    %202 = vector.broadcast %201 : vector<64x1xf32> to vector<64x256xf32>
    %203 = arith.addf %199, %202 : vector<64x256xf32>
    %204 = vector.extract_strided_slice %203 {offsets = [0, 0], sizes = [32, 256], strides = [1, 1]} : vector<64x256xf32> to vector<32x256xf32>
    %205 = math.tanh %204 : vector<32x256xf32>
    %206 = vector.extract_strided_slice %203 {offsets = [32, 0], sizes = [32, 256], strides = [1, 1]} : vector<64x256xf32> to vector<32x256xf32>
    %207 = arith.negf %206 : vector<32x256xf32>
    %208 = math.exp %207 : vector<32x256xf32>
    %cst_114 = arith.constant 1.000000e+00 : f32
    %209 = vector.broadcast %cst_114 : f32 to vector<32x256xf32>
    %210 = arith.addf %209, %208 : vector<32x256xf32>
    %211 = arith.divf %209, %210 : vector<32x256xf32>
    %212 = arith.mulf %205, %211 : vector<32x256xf32>
    %c0_115 = arith.constant 0 : index
    %c2_116 = arith.constant 2 : index
    %c0_117 = arith.constant 0 : index
    %c0_118 = arith.constant 0 : index
    %213 = vector.load %arg7[%c0_115, %c2_116, %c0_117, %c0_118] : memref<1x4x34x32xf32, #tpu.memory_space<vmem>>, vector<1x1x34x32xf32>
    %214 = vector.shape_cast %213 : vector<1x1x34x32xf32> to vector<34x32xf32>
    %cst_119 = arith.constant dense<0.000000e+00> : vector<34x256xf32>
    %215 = tpu.matmul %214, %212, %cst_119 {dimension_numbers = #tpu.dot_dimension_numbers<[1], [0], [0], [1], [0, 0, 1, 1], [], []>} : vector<34x32xf32>, vector<32x256xf32>, vector<34x256xf32> -> vector<34x256xf32>
    %216 = vector.extract_strided_slice %215 {offsets = [0, 0], sizes = [32, 256], strides = [1, 1]} : vector<34x256xf32> to vector<32x256xf32>
    %217 = arith.addf %176, %216 : vector<32x256xf32>
    %c0_120 = arith.constant 0 : index
    %c2_121 = arith.constant 2 : index
    %c0_122 = arith.constant 0 : index
    %c0_123 = arith.constant 0 : index
    %218 = vector.load %arg8[%c0_120, %c2_121, %c0_122, %c0_123] : memref<1x4x32x1xf32, #tpu.memory_space<vmem>>, vector<1x1x32x1xf32>
    %219 = vector.shape_cast %218 : vector<1x1x32x1xf32> to vector<32x1xf32>
    %220 = vector.broadcast %219 : vector<32x1xf32> to vector<32x256xf32>
    %221 = arith.addf %217, %220 : vector<32x256xf32>
    %222 = vector.broadcast %3 : vector<1x256xf32> to vector<32x256xf32>
    %223 = arith.mulf %221, %222 : vector<32x256xf32>
    %224 = vector.extract_strided_slice %215 {offsets = [32, 0], sizes = [2, 256], strides = [1, 1]} : vector<34x256xf32> to vector<2x256xf32>
    %225 = arith.addf %178, %224 : vector<2x256xf32>
    %c2_i32_124 = arith.constant 2 : i32
    %226 = tpu.dynamic_rotate %223 by %c2_i32_124 dim 1 : vector<32x256xf32>, i32 -> vector<32x256xf32>
    %227 = vector.broadcast %31 : vector<1x256xf32> to vector<32x256xf32>
    %228 = arith.mulf %226, %227 : vector<32x256xf32>
    %c0_125 = arith.constant 0 : index
    %c0_126 = arith.constant 0 : index
    %229 = vector.load %arg13[%c0_125, %c0_126] : memref<160x256xf32, #tpu.memory_space<vmem>>, vector<32x256xf32>
    tpu.vector_store %arg13[%c0_125, %c0_126], %228 {strides = array<i32>} : memref<160x256xf32, #tpu.memory_space<vmem>>, vector<32x256xf32>,
    %c1_i32_127 = arith.constant 1 : i32
    %230 = tpu.dynamic_rotate %223 by %c1_i32_127 dim 1 : vector<32x256xf32>, i32 -> vector<32x256xf32>
    %231 = vector.broadcast %42 : vector<1x256xf32> to vector<32x256xf32>
    %232 = arith.mulf %230, %231 : vector<32x256xf32>
    %c32_128 = arith.constant 32 : index
    %c0_129 = arith.constant 0 : index
    %233 = vector.load %arg13[%c32_128, %c0_129] : memref<160x256xf32, #tpu.memory_space<vmem>>, vector<32x256xf32>
    tpu.vector_store %arg13[%c32_128, %c0_129], %232 {strides = array<i32>} : memref<160x256xf32, #tpu.memory_space<vmem>>, vector<32x256xf32>,
    %c64_130 = arith.constant 64 : index
    %c0_131 = arith.constant 0 : index
    %234 = vector.load %arg13[%c64_130, %c0_131] : memref<160x256xf32, #tpu.memory_space<vmem>>, vector<32x256xf32>
    tpu.vector_store %arg13[%c64_130, %c0_131], %223 {strides = array<i32>} : memref<160x256xf32, #tpu.memory_space<vmem>>, vector<32x256xf32>,
    %c255_i32_132 = arith.constant 255 : i32
    %235 = tpu.dynamic_rotate %223 by %c255_i32_132 dim 1 : vector<32x256xf32>, i32 -> vector<32x256xf32>
    %236 = vector.broadcast %53 : vector<1x256xf32> to vector<32x256xf32>
    %237 = arith.mulf %235, %236 : vector<32x256xf32>
    %c96_133 = arith.constant 96 : index
    %c0_134 = arith.constant 0 : index
    %238 = vector.load %arg13[%c96_133, %c0_134] : memref<160x256xf32, #tpu.memory_space<vmem>>, vector<32x256xf32>
    tpu.vector_store %arg13[%c96_133, %c0_134], %237 {strides = array<i32>} : memref<160x256xf32, #tpu.memory_space<vmem>>, vector<32x256xf32>,
    %c254_i32_135 = arith.constant 254 : i32
    %239 = tpu.dynamic_rotate %223 by %c254_i32_135 dim 1 : vector<32x256xf32>, i32 -> vector<32x256xf32>
    %240 = vector.broadcast %64 : vector<1x256xf32> to vector<32x256xf32>
    %241 = arith.mulf %239, %240 : vector<32x256xf32>
    %c128_136 = arith.constant 128 : index
    %c0_137 = arith.constant 0 : index
    %242 = vector.load %arg13[%c128_136, %c0_137] : memref<160x256xf32, #tpu.memory_space<vmem>>, vector<32x256xf32>
    tpu.vector_store %arg13[%c128_136, %c0_137], %241 {strides = array<i32>} : memref<160x256xf32, #tpu.memory_space<vmem>>, vector<32x256xf32>,
    %c0_138 = arith.constant 0 : index
    %c3 = arith.constant 3 : index
    %c0_139 = arith.constant 0 : index
    %c0_140 = arith.constant 0 : index
    %243 = vector.load %arg5[%c0_138, %c3, %c0_139, %c0_140] : memref<1x4x64x160xf32, #tpu.memory_space<vmem>>, vector<1x1x64x160xf32>
    %244 = vector.shape_cast %243 : vector<1x1x64x160xf32> to vector<64x160xf32>
    %c0_141 = arith.constant 0 : index
    %c0_142 = arith.constant 0 : index
    %245 = vector.load %arg13[%c0_141, %c0_142] : memref<160x256xf32, #tpu.memory_space<vmem>>, vector<160x256xf32>
    %cst_143 = arith.constant dense<0.000000e+00> : vector<64x256xf32>
    %246 = tpu.matmul %244, %245, %cst_143 {dimension_numbers = #tpu.dot_dimension_numbers<[1], [0], [0], [1], [0, 0, 1, 1], [], []>} : vector<64x160xf32>, vector<160x256xf32>, vector<64x256xf32> -> vector<64x256xf32>
    %c0_144 = arith.constant 0 : index
    %c3_145 = arith.constant 3 : index
    %c0_146 = arith.constant 0 : index
    %c0_147 = arith.constant 0 : index
    %247 = vector.load %arg6[%c0_144, %c3_145, %c0_146, %c0_147] : memref<1x4x64x1xf32, #tpu.memory_space<vmem>>, vector<1x1x64x1xf32>
    %248 = vector.shape_cast %247 : vector<1x1x64x1xf32> to vector<64x1xf32>
    %249 = vector.broadcast %248 : vector<64x1xf32> to vector<64x256xf32>
    %250 = arith.addf %246, %249 : vector<64x256xf32>
    %251 = vector.extract_strided_slice %250 {offsets = [0, 0], sizes = [32, 256], strides = [1, 1]} : vector<64x256xf32> to vector<32x256xf32>
    %252 = math.tanh %251 : vector<32x256xf32>
    %253 = vector.extract_strided_slice %250 {offsets = [32, 0], sizes = [32, 256], strides = [1, 1]} : vector<64x256xf32> to vector<32x256xf32>
    %254 = arith.negf %253 : vector<32x256xf32>
    %255 = math.exp %254 : vector<32x256xf32>
    %cst_148 = arith.constant 1.000000e+00 : f32
    %256 = vector.broadcast %cst_148 : f32 to vector<32x256xf32>
    %257 = arith.addf %256, %255 : vector<32x256xf32>
    %258 = arith.divf %256, %257 : vector<32x256xf32>
    %259 = arith.mulf %252, %258 : vector<32x256xf32>
    %c0_149 = arith.constant 0 : index
    %c3_150 = arith.constant 3 : index
    %c0_151 = arith.constant 0 : index
    %c0_152 = arith.constant 0 : index
    %260 = vector.load %arg7[%c0_149, %c3_150, %c0_151, %c0_152] : memref<1x4x34x32xf32, #tpu.memory_space<vmem>>, vector<1x1x34x32xf32>
    %261 = vector.shape_cast %260 : vector<1x1x34x32xf32> to vector<34x32xf32>
    %cst_153 = arith.constant dense<0.000000e+00> : vector<34x256xf32>
    %262 = tpu.matmul %261, %259, %cst_153 {dimension_numbers = #tpu.dot_dimension_numbers<[1], [0], [0], [1], [0, 0, 1, 1], [], []>} : vector<34x32xf32>, vector<32x256xf32>, vector<34x256xf32> -> vector<34x256xf32>
    %263 = vector.extract_strided_slice %262 {offsets = [32, 0], sizes = [2, 256], strides = [1, 1]} : vector<34x256xf32> to vector<2x256xf32>
    %264 = arith.addf %225, %263 : vector<2x256xf32>
    %c0_154 = arith.constant 0 : index
    %c0_155 = arith.constant 0 : index
    %c0_156 = arith.constant 0 : index
    %265 = vector.load %arg9[%c0_154, %c0_155, %c0_156] : memref<1x2x1xf32, #tpu.memory_space<vmem>>, vector<1x2x1xf32>
    %266 = vector.shape_cast %265 : vector<1x2x1xf32> to vector<2x1xf32>
    %267 = vector.broadcast %266 : vector<2x1xf32> to vector<2x256xf32>
    %268 = arith.addf %264, %267 : vector<2x256xf32>
    %269 = vector.broadcast %3 : vector<1x256xf32> to vector<2x256xf32>
    %270 = arith.mulf %268, %269 : vector<2x256xf32>
    %271 = vector.broadcast %3 : vector<1x256xf32> to vector<2x256xf32>
    %272 = arith.mulf %66, %271 : vector<2x256xf32>
    %273 = arith.addf %270, %272 : vector<2x256xf32>
    %c3_i32 = arith.constant 3 : i32
    %274 = arith.cmpi slt, %arg0, %c3_i32 : i32
    %275 = arith.extui %274 : i1 to i32
    %c0_i32_157 = arith.constant 0 : i32
    %276 = arith.cmpi ne, %275, %c0_i32_157 : i32
    scf.if %276 {
      %c0_160 = arith.constant 0 : index
      %c0_161 = arith.constant 0 : index
      %280 = vector.load %arg11[%c0_160, %c0_161] : memref<2x256xf32, #tpu.memory_space<vmem>>, vector<2x256xf32>
      tpu.vector_store %arg11[%c0_160, %c0_161], %273 {strides = array<i32>} : memref<2x256xf32, #tpu.memory_space<vmem>>, vector<2x256xf32>,
      %c0_162 = arith.constant 0 : index
      %c0_163 = arith.constant 0 : index
      %281 = vector.load %arg12[%c0_162, %c0_163] : memref<2x256xf32, #tpu.memory_space<vmem>>, vector<2x256xf32>
      tpu.vector_store %arg12[%c0_162, %c0_163], %65 {strides = array<i32>} : memref<2x256xf32, #tpu.memory_space<vmem>>, vector<2x256xf32>,
    } else {
    }
    %c3_i32_158 = arith.constant 3 : i32
    %277 = arith.cmpi eq, %arg0, %c3_i32_158 : i32
    %278 = arith.extui %277 : i1 to i32
    %c0_i32_159 = arith.constant 0 : i32
    %279 = arith.cmpi ne, %278, %c0_i32_159 : i32
    scf.if %279 {
      %c0_160 = arith.constant 0 : index
      %c0_161 = arith.constant 0 : index
      %280 = vector.load %arg10[%c0_160, %c0_161] : memref<4x256xf32, #tpu.memory_space<vmem>>, vector<2x256xf32>
      tpu.vector_store %arg10[%c0_160, %c0_161], %273 {strides = array<i32>} : memref<4x256xf32, #tpu.memory_space<vmem>>, vector<2x256xf32>,
      %c2_162 = arith.constant 2 : index
      %c0_163 = arith.constant 0 : index
      %281 = vector.load %arg10[%c2_162, %c0_163] : memref<4x256xf32, #tpu.memory_space<vmem>>, vector<2x256xf32>
      tpu.vector_store %arg10[%c2_162, %c0_163], %65 {strides = array<i32>} : memref<4x256xf32, #tpu.memory_space<vmem>>, vector<2x256xf32>,
    } else {
    }
    return
  }
  func.func @transform_0(%arg0: i32) -> (i32, i32) {
    %c0_i32 = arith.constant 0 : i32
    %c0_i32_0 = arith.constant 0 : i32
    %c0_i32_1 = arith.constant 0 : i32
    return %c0_i32, %c0_i32_0 : i32, i32
  }
  func.func @transform_1(%arg0: i32) -> (i32, i32) {
    %c0_i32 = arith.constant 0 : i32
    %c0_i32_0 = arith.constant 0 : i32
    %c0_i32_1 = arith.constant 0 : i32
    return %c0_i32, %c0_i32_0 : i32, i32
  }
  func.func @transform_2(%arg0: i32) -> (i32, i32, i32) {
    %c0_i32 = arith.constant 0 : i32
    %c0_i32_0 = arith.constant 0 : i32
    %c0_i32_1 = arith.constant 0 : i32
    return %arg0, %c0_i32, %c0_i32_0 : i32, i32, i32
  }
  func.func @transform_3(%arg0: i32) -> (i32, i32, i32) {
    %c0_i32 = arith.constant 0 : i32
    %c0_i32_0 = arith.constant 0 : i32
    %c0_i32_1 = arith.constant 0 : i32
    return %arg0, %c0_i32, %c0_i32_0 : i32, i32, i32
  }
  func.func @transform_4(%arg0: i32) -> (i32, i32, i32, i32) {
    %c0_i32 = arith.constant 0 : i32
    %c0_i32_0 = arith.constant 0 : i32
    %c0_i32_1 = arith.constant 0 : i32
    %c0_i32_2 = arith.constant 0 : i32
    return %arg0, %c0_i32, %c0_i32_0, %c0_i32_1 : i32, i32, i32, i32
  }
  func.func @transform_5(%arg0: i32) -> (i32, i32, i32, i32) {
    %c0_i32 = arith.constant 0 : i32
    %c0_i32_0 = arith.constant 0 : i32
    %c0_i32_1 = arith.constant 0 : i32
    %c0_i32_2 = arith.constant 0 : i32
    return %arg0, %c0_i32, %c0_i32_0, %c0_i32_1 : i32, i32, i32, i32
  }
  func.func @transform_6(%arg0: i32) -> (i32, i32, i32, i32) {
    %c0_i32 = arith.constant 0 : i32
    %c0_i32_0 = arith.constant 0 : i32
    %c0_i32_1 = arith.constant 0 : i32
    %c0_i32_2 = arith.constant 0 : i32
    return %arg0, %c0_i32, %c0_i32_0, %c0_i32_1 : i32, i32, i32, i32
  }
  func.func @transform_7(%arg0: i32) -> (i32, i32, i32, i32) {
    %c0_i32 = arith.constant 0 : i32
    %c0_i32_0 = arith.constant 0 : i32
    %c0_i32_1 = arith.constant 0 : i32
    %c0_i32_2 = arith.constant 0 : i32
    return %arg0, %c0_i32, %c0_i32_0, %c0_i32_1 : i32, i32, i32, i32
  }
  func.func @transform_8(%arg0: i32) -> (i32, i32, i32) {
    %c0_i32 = arith.constant 0 : i32
    %c0_i32_0 = arith.constant 0 : i32
    %c0_i32_1 = arith.constant 0 : i32
    return %arg0, %c0_i32, %c0_i32_0 : i32, i32, i32
  }
  func.func @transform_9(%arg0: i32) -> (i32, i32) {
    %c0_i32 = arith.constant 0 : i32
    %c0_i32_0 = arith.constant 0 : i32
    %c0_i32_1 = arith.constant 0 : i32
    return %c0_i32, %c0_i32_0 : i32, i32
  }
}

</mosaic_0001>

<llo_original>
// kernel: vits_residual_coupling_block.1
$region0: #{vits_residual_coupling_block.1}
  #allocation0 [shape = 'u32[]', space=smem, size = 0x4, offset = 0x4, fixed_abs, tag = 'smem constant byte address 0x4 - core index']
  #allocation1 [shape = 'u32[144,128]{1,0:T(1,128)}', space=vmem, size = 0x12000, scoped, tag = 'internal scratch']
  #allocation2 [shape = 'f32[2,256]{1,0:T(2,128)}', space=vmem, size = 0x800, scoped, tag = 'scratch operand']
  #allocation3 [shape = 'f32[2,256]{1,0:T(2,128)}', space=vmem, size = 0x800, scoped, tag = 'scratch operand']
  #allocation4 [shape = 'f32[160,256]{1,0:T(8,128)}', space=vmem, size = 0x28000, scoped, tag = 'scratch operand']
  %s0 = inlined_call_operand.vmem [shape: f32[4,256], index: 0, kind: input, shape index: {}]
  %s1 = inlined_call_operand.vmem [shape: f32[1,256], index: 1, kind: input, shape index: {}]
  %s2 = inlined_call_operand.vmem [shape: f32[4,32,2], index: 2, kind: input, shape index: {}]
  %s3 = inlined_call_operand.vmem [shape: f32[4,32,1], index: 3, kind: input, shape index: {}]
  %s4 = inlined_call_operand.vmem [shape: f32[4,4,64,160], index: 4, kind: input, shape index: {}]
  %s5 = inlined_call_operand.vmem [shape: f32[4,4,64,1], index: 5, kind: input, shape index: {}]
  %s6 = inlined_call_operand.vmem [shape: f32[4,4,34,32], index: 6, kind: input, shape index: {}]
  %s7 = inlined_call_operand.vmem [shape: f32[4,4,32,1], index: 7, kind: input, shape index: {}]
  %s8 = inlined_call_operand.vmem [shape: f32[4,2,1], index: 8, kind: input, shape index: {}]
  %s9 = inlined_call_operand.hbm [shape: f32[4,256], index: 9, kind: output, shape index: {}]
  %s10 = sld [smem:[#allocation0]]
  $region81: #{vits_residual_coupling_block.1} parent=0
    _
  %s12 = ssub.s32 1, %s10
  %s13 = scalar_select 0, %s12, %s10
  $region1: #{vits_residual_coupling_block.1} parent=0
    #allocation5 [shape = 'u8[4096]{0}', space=vmem, size = 0x1000, scoped, tag = 'output window, operand 0, single buffered']
    #allocation6 [shape = 's32[2]{0}', space=sflag, size = 0x8, scoped, tag = 'scoped memory for vits_residual_coupling_block.1']
    %14 = vsyncpa [#allocation6], 0
    loop: start=0, step=1, limit=6
    $region2: #{vits_residual_coupling_block.1} parent=1 // loop_pre_header
      _
    $region3: #{vits_residual_coupling_block.1} parent=1 // loop_header
      %s16 = sphi 0, %s20
      %p17 = scmp.ge.s32.totalorder %s16, 6
      %s24 = sphi 0, %s24
      %s26 = sphi 0, %s24
      %s27 = sphi 0, %s26
      %s41 = sphi 0, %s27
      %s45 = sphi 0, %s45
      %s47 = sphi 0, %s45
      %s48 = sphi 0, %s47
      %s62 = sphi 0, %s48
      %s68 = sphi 0, %s70
      %s71 = sphi 0, %s68
      %s72 = sphi 0, %s71
      %s88 = sphi 0, %s72
      %s94 = sphi 0, %s96
      %s97 = sphi 0, %s94
      %s98 = sphi 0, %s97
      %s114 = sphi 0, %s98
      %s120 = sphi 0, %s122
      %s123 = sphi 0, %s120
      %s124 = sphi 0, %s123
      %s140 = sphi 0, %s124
      %s146 = sphi 0, %s148
      %s149 = sphi 0, %s146
      %s150 = sphi 0, %s149
      %s166 = sphi 0, %s150
      %s172 = sphi 0, %s174
      %s175 = sphi 0, %s172
      %s176 = sphi 0, %s175
      %s192 = sphi 0, %s176
      %s198 = sphi 0, %s200
      %s201 = sphi 0, %s198
      %s202 = sphi 0, %s201
      %s218 = sphi 0, %s202
      %s224 = sphi 0, %s226
      %s227 = sphi 0, %s224
      %s228 = sphi 0, %s227
      %s244 = sphi 0, %s228
      %s248 = sphi 0, %s248
      %s250 = sphi 0, %s248
      %s251 = sphi 0, %s250
      %s265 = sphi 0, %s251
    $region4: #{vits_residual_coupling_block.1} parent=1 // loop_header_branch
      %19 = sbr.rel (%p17) target = $region8
    $region5: #{vits_residual_coupling_block.1} parent=1 // loop_body
      %s21 = ssub.s32 %s16, 1
      %s22 = ssub.s32 %s16, 2
      %s23 = sadd.s32 %s16, 1
      %s25 = sadd.s32 %s24, 1
      %p28 = scmp.eq.s32.totalorder %s16, 3
      %p29 = scmp.ne.s32.totalorder %s24, %s26
      %p30 = scmp.eq.s32.totalorder %s16, 0
      %p31 = por %p29, %p30
      %p32 = scmp.ne.s32.totalorder %s24, %s26
      %p33 = scmp.eq.s32.totalorder %s21, 3
      %p34 = por %p32, %p33
      %p35 = scmp.ne.s32.totalorder %s26, %s27
      %p36 = scmp.eq.s32.totalorder %s21, 0
      %p37 = por %p35, %p36
      %p38 = scmp.ne.s32.totalorder %s26, %s27
      %p39 = scmp.eq.s32.totalorder %s22, 3
      %p40 = por %p38, %p39
      %p42 = scmp.ne.s32.totalorder %s27, %s41
      %p43 = scmp.eq.s32.totalorder %s22, 0
      %p44 = por %p42, %p43
      %s46 = sadd.s32 %s45, 1
      %p49 = scmp.eq.s32.totalorder %s16, 3
      %p50 = scmp.ne.s32.totalorder %s45, %s47
      %p51 = scmp.eq.s32.totalorder %s16, 0
      %p52 = por %p50, %p51
      %p53 = scmp.ne.s32.totalorder %s45, %s47
      %p54 = scmp.eq.s32.totalorder %s21, 3
      %p55 = por %p53, %p54
      %p56 = scmp.ne.s32.totalorder %s47, %s48
      %p57 = scmp.eq.s32.totalorder %s21, 0
      %p58 = por %p56, %p57
      %p59 = scmp.ne.s32.totalorder %s47, %s48
      %p60 = scmp.eq.s32.totalorder %s22, 3
      %p61 = por %p59, %p60
      %p63 = scmp.ne.s32.totalorder %s48, %s62
      %p64 = scmp.eq.s32.totalorder %s22, 0
      %p65 = por %p63, %p64
      %s66 = ssub.s32 %s16, %s23
      %p67 = scmp.eq.s32.totalorder %s66, 0
      %s69 = sadd.s32 %s68, 1
      %s70 = scalar_select %p67, %s68, %s69
      %p73 = pneg %p67
      %p74 = scmp.eq.s32.totalorder %s16, 3
      %p75 = por %p73, %p74
      %p76 = scmp.ne.s32.totalorder %s68, %s71
      %p77 = scmp.eq.s32.totalorder %s16, 0
      %p78 = por %p76, %p77
      %p79 = scmp.ne.s32.totalorder %s68, %s71
      %p80 = scmp.eq.s32.totalorder %s21, 3
      %p81 = por %p79, %p80
      %p82 = scmp.ne.s32.totalorder %s71, %s72
      %p83 = scmp.eq.s32.totalorder %s21, 0
      %p84 = por %p82, %p83
      %p85 = scmp.ne.s32.totalorder %s71, %s72
      %p86 = scmp.eq.s32.totalorder %s22, 3
      %p87 = por %p85, %p86
      %p89 = scmp.ne.s32.totalorder %s72, %s88
      %p90 = scmp.eq.s32.totalorder %s22, 0
      %p91 = por %p89, %p90
      %s92 = ssub.s32 %s16, %s23
      %p93 = scmp.eq.s32.totalorder %s92, 0
      %s95 = sadd.s32 %s94, 1
      %s96 = scalar_select %p93, %s94, %s95
      %p99 = pneg %p93
      %p100 = scmp.eq.s32.totalorder %s16, 3
      %p101 = por %p99, %p100
      %p102 = scmp.ne.s32.totalorder %s94, %s97
      %p103 = scmp.eq.s32.totalorder %s16, 0
      %p104 = por %p102, %p103
      %p105 = scmp.ne.s32.totalorder %s94, %s97
      %p106 = scmp.eq.s32.totalorder %s21, 3
      %p107 = por %p105, %p106
      %p108 = scmp.ne.s32.totalorder %s97, %s98
      %p109 = scmp.eq.s32.totalorder %s21, 0
      %p110 = por %p108, %p109
      %p111 = scmp.ne.s32.totalorder %s97, %s98
      %p112 = scmp.eq.s32.totalorder %s22, 3
      %p113 = por %p111, %p112
      %p115 = scmp.ne.s32.totalorder %s98, %s114
      %p116 = scmp.eq.s32.totalorder %s22, 0
      %p117 = por %p115, %p116
      %s118 = ssub.s32 %s16, %s23
      %p119 = scmp.eq.s32.totalorder %s118, 0
      %s121 = sadd.s32 %s120, 1
      %s122 = scalar_select %p119, %s120, %s121
      %p125 = pneg %p119
      %p126 = scmp.eq.s32.totalorder %s16, 3
      %p127 = por %p125, %p126
      %p128 = scmp.ne.s32.totalorder %s120, %s123
      %p129 = scmp.eq.s32.totalorder %s16, 0
      %p130 = por %p128, %p129
      %p131 = scmp.ne.s32.totalorder %s120, %s123
      %p132 = scmp.eq.s32.totalorder %s21, 3
      %p133 = por %p131, %p132
      %p134 = scmp.ne.s32.totalorder %s123, %s124
      %p135 = scmp.eq.s32.totalorder %s21, 0
      %p136 = por %p134, %p135
      %p137 = scmp.ne.s32.totalorder %s123, %s124
      %p138 = scmp.eq.s32.totalorder %s22, 3
      %p139 = por %p137, %p138
      %p141 = scmp.ne.s32.totalorder %s124, %s140
      %p142 = scmp.eq.s32.totalorder %s22, 0
      %p143 = por %p141, %p142
      %s144 = ssub.s32 %s16, %s23
      %p145 = scmp.eq.s32.totalorder %s144, 0
      %s147 = sadd.s32 %s146, 1
      %s148 = scalar_select %p145, %s146, %s147
      %p151 = pneg %p145
      %p152 = scmp.eq.s32.totalorder %s16, 3
      %p153 = por %p151, %p152
      %p154 = scmp.ne.s32.totalorder %s146, %s149
      %p155 = scmp.eq.s32.totalorder %s16, 0
      %p156 = por %p154, %p155
      %p157 = scmp.ne.s32.totalorder %s146, %s149
      %p158 = scmp.eq.s32.totalorder %s21, 3
      %p159 = por %p157, %p158
      %p160 = scmp.ne.s32.totalorder %s149, %s150
      %p161 = scmp.eq.s32.totalorder %s21, 0
      %p162 = por %p160, %p161
      %p163 = scmp.ne.s32.totalorder %s149, %s150
      %p164 = scmp.eq.s32.totalorder %s22, 3
      %p165 = por %p163, %p164
      %p167 = scmp.ne.s32.totalorder %s150, %s166
      %p168 = scmp.eq.s32.totalorder %s22, 0
      %p169 = por %p167, %p168
      %s170 = ssub.s32 %s16, %s23
      %p171 = scmp.eq.s32.totalorder %s170, 0
      %s173 = sadd.s32 %s172, 1
      %s174 = scalar_select %p171, %s172, %s173
      %p177 = pneg %p171
      %p178 = scmp.eq.s32.totalorder %s16, 3
      %p179 = por %p177, %p178
      %p180 = scmp.ne.s32.totalorder %s172, %s175
      %p181 = scmp.eq.s32.totalorder %s16, 0
      %p182 = por %p180, %p181
      %p183 = scmp.ne.s32.totalorder %s172, %s175
      %p184 = scmp.eq.s32.totalorder %s21, 3
      %p185 = por %p183, %p184
      %p186 = scmp.ne.s32.totalorder %s175, %s176
      %p187 = scmp.eq.s32.totalorder %s21, 0
      %p188 = por %p186, %p187
      %p189 = scmp.ne.s32.totalorder %s175, %s176
      %p190 = scmp.eq.s32.totalorder %s22, 3
      %p191 = por %p189, %p190
      %p193 = scmp.ne.s32.totalorder %s176, %s192
      %p194 = scmp.eq.s32.totalorder %s22, 0
      %p195 = por %p193, %p194
      %s196 = ssub.s32 %s16, %s23
      %p197 = scmp.eq.s32.totalorder %s196, 0
      %s199 = sadd.s32 %s198, 1
      %s200 = scalar_select %p197, %s198, %s199
      %p203 = pneg %p197
      %p204 = scmp.eq.s32.totalorder %s16, 3
      %p205 = por %p203, %p204
      %p206 = scmp.ne.s32.totalorder %s198, %s201
      %p207 = scmp.eq.s32.totalorder %s16, 0
      %p208 = por %p206, %p207
      %p209 = scmp.ne.s32.totalorder %s198, %s201
      %p210 = scmp.eq.s32.totalorder %s21, 3
      %p211 = por %p209, %p210
      %p212 = scmp.ne.s32.totalorder %s201, %s202
      %p213 = scmp.eq.s32.totalorder %s21, 0
      %p214 = por %p212, %p213
      %p215 = scmp.ne.s32.totalorder %s201, %s202
      %p216 = scmp.eq.s32.totalorder %s22, 3
      %p217 = por %p215, %p216
      %p219 = scmp.ne.s32.totalorder %s202, %s218
      %p220 = scmp.eq.s32.totalorder %s22, 0
      %p221 = por %p219, %p220
      %s222 = ssub.s32 %s16, %s23
      %p223 = scmp.eq.s32.totalorder %s222, 0
      %s225 = sadd.s32 %s224, 1
      %s226 = scalar_select %p223, %s224, %s225
      %p229 = pneg %p223
      %p230 = scmp.eq.s32.totalorder %s16, 3
      %p231 = por %p229, %p230
      %p232 = scmp.ne.s32.totalorder %s224, %s227
      %p233 = scmp.eq.s32.totalorder %s16, 0
      %p234 = por %p232, %p233
      %p235 = scmp.ne.s32.totalorder %s224, %s227
      %p236 = scmp.eq.s32.totalorder %s21, 3
      %p237 = por %p235, %p236
      %p238 = scmp.ne.s32.totalorder %s227, %s228
      %p239 = scmp.eq.s32.totalorder %s21, 0
      %p240 = por %p238, %p239
      %p241 = scmp.ne.s32.totalorder %s227, %s228
      %p242 = scmp.eq.s32.totalorder %s22, 3
      %p243 = por %p241, %p242
      %p245 = scmp.ne.s32.totalorder %s228, %s244
      %p246 = scmp.eq.s32.totalorder %s22, 0
      %p247 = por %p245, %p246
      %s249 = sadd.s32 %s248, 1
      %p252 = scmp.eq.s32.totalorder %s16, 3
      %p253 = scmp.ne.s32.totalorder %s248, %s250
      %p254 = scmp.eq.s32.totalorder %s16, 0
      %p255 = por %p253, %p254
      %p256 = scmp.ne.s32.totalorder %s248, %s250
      %p257 = scmp.eq.s32.totalorder %s21, 3
      %p258 = por %p256, %p257
      %p259 = scmp.ne.s32.totalorder %s250, %s251
      %p260 = scmp.eq.s32.totalorder %s21, 0
      %p261 = por %p259, %p260
      %p262 = scmp.ne.s32.totalorder %s250, %s251
      %p263 = scmp.eq.s32.totalorder %s22, 3
      %p264 = por %p262, %p263
      %p266 = scmp.ne.s32.totalorder %s251, %s265
      %p267 = scmp.eq.s32.totalorder %s22, 0
      %p268 = por %p266, %p267
      %p269 = scmp.le.s32.totalorder 1, %s16
      %p270 = scmp.lt.s32.totalorder %s16, 5
      %p271 = pnand %p269, %p270
      %p272 = pneg %p271
      // Predicated region
      $region9: #{vits_residual_coupling_block.1} parent=5 // pred_check
        _
      $region10: #{vits_residual_coupling_block.1} parent=5 // pred_check_branch
        %274 = sbr.rel (%p271) target = $region12
      $region11: #{vits_residual_coupling_block.1} parent=5 // pred_region
        %s275 = ssub.s32 %s16, 1
        // Predicated region
        $region13: #{vits_residual_coupling_block.1} parent=11 // pred_check
          %p276 = pneg %p37
        $region14: #{vits_residual_coupling_block.1} parent=11 // pred_check_branch
          %278 = sbr.rel (%p276) target = $region16
        $region15: #{vits_residual_coupling_block.1} parent=11 // pred_region
          _
        $region16: #{vits_residual_coupling_block.1} parent=11 // pred_fallthru
          _
        // Predicated region
        $region17: #{vits_residual_coupling_block.1} parent=11 // pred_check
          %p279 = pneg %p58
        $region18: #{vits_residual_coupling_block.1} parent=11 // pred_check_branch
          %281 = sbr.rel (%p279) target = $region20
        $region19: #{vits_residual_coupling_block.1} parent=11 // pred_region
          _
        $region20: #{vits_residual_coupling_block.1} parent=11 // pred_fallthru
          _
      $region12: #{vits_residual_coupling_block.1} parent=5 // pred_fallthru
        _
      %p282 = scmp.lt.s32.totalorder %s16, 4
      // Predicated region
      $region21: #{vits_residual_coupling_block.1} parent=5 // pred_check
        %p283 = pneg %p282
      $region22: #{vits_residual_coupling_block.1} parent=5 // pred_check_branch
        %285 = sbr.rel (%p283) target = $region24
      $region23: #{vits_residual_coupling_block.1} parent=5 // pred_region
        // Predicated region
        $region25: #{vits_residual_coupling_block.1} parent=23 // pred_check
          %p286 = pneg %p78
        $region26: #{vits_residual_coupling_block.1} parent=23 // pred_check_branch
          %288 = sbr.rel (%p286) target = $region28
        $region27: #{vits_residual_coupling_block.1} parent=23 // pred_region
          %p289 = scmp.lt.s32.totalorder %s16, 3
          %s290 = scalar_select %p289, %s16, 3
          %s291 = smul.addr %s290, 4
          %s292 = smul.addr %s291, 8
          %s293 = scalar_lea.vmem %s2, %s292
        $region28: #{vits_residual_coupling_block.1} parent=23 // pred_fallthru
          _
        // Predicated region
        $region29: #{vits_residual_coupling_block.1} parent=23 // pred_check
          %p294 = pneg %p104
        $region30: #{vits_residual_coupling_block.1} parent=23 // pred_check_branch
          %296 = sbr.rel (%p294) target = $region32
        $region31: #{vits_residual_coupling_block.1} parent=23 // pred_region
          %p297 = scmp.lt.s32.totalorder %s16, 3
          %s298 = scalar_select %p297, %s16, 3
          %s299 = smul.addr %s298, 4
          %s300 = smul.addr %s299, 8
          %s301 = scalar_lea.vmem %s3, %s300
        $region32: #{vits_residual_coupling_block.1} parent=23 // pred_fallthru
          _
        // Predicated region
        $region33: #{vits_residual_coupling_block.1} parent=23 // pred_check
          %p302 = pneg %p130
        $region34: #{vits_residual_coupling_block.1} parent=23 // pred_check_branch
          %304 = sbr.rel (%p302) target = $region36
        $region35: #{vits_residual_coupling_block.1} parent=23 // pred_region
          %p305 = scmp.lt.s32.totalorder %s16, 3
          %s306 = scalar_select %p305, %s16, 3
          %s307 = smul.addr %s306, 64
          %s308 = smul.addr %s307, 8
          %s309 = scalar_lea.vmem %s4, %s308
        $region36: #{vits_residual_coupling_block.1} parent=23 // pred_fallthru
          _
        // Predicated region
        $region37: #{vits_residual_coupling_block.1} parent=23 // pred_check
          %p310 = pneg %p156
        $region38: #{vits_residual_coupling_block.1} parent=23 // pred_check_branch
          %312 = sbr.rel (%p310) target = $region40
        $region39: #{vits_residual_coupling_block.1} parent=23 // pred_region
          %p313 = scmp.lt.s32.totalorder %s16, 3
          %s314 = scalar_select %p313, %s16, 3
          %s315 = smul.addr %s314, 32
          %s316 = smul.addr %s315, 8
          %s317 = scalar_lea.vmem %s5, %s316
        $region40: #{vits_residual_coupling_block.1} parent=23 // pred_fallthru
          _
        // Predicated region
        $region41: #{vits_residual_coupling_block.1} parent=23 // pred_check
          %p318 = pneg %p182
        $region42: #{vits_residual_coupling_block.1} parent=23 // pred_check_branch
          %320 = sbr.rel (%p318) target = $region44
        $region43: #{vits_residual_coupling_block.1} parent=23 // pred_region
          %p321 = scmp.lt.s32.totalorder %s16, 3
          %s322 = scalar_select %p321, %s16, 3
          %s323 = smul.addr %s322, 20
          %s324 = smul.addr %s323, 8
          %s325 = scalar_lea.vmem %s6, %s324
        $region44: #{vits_residual_coupling_block.1} parent=23 // pred_fallthru
          _
        // Predicated region
        $region45: #{vits_residual_coupling_block.1} parent=23 // pred_check
          %p326 = pneg %p208
        $region46: #{vits_residual_coupling_block.1} parent=23 // pred_check_branch
          %328 = sbr.rel (%p326) target = $region48
        $region47: #{vits_residual_coupling_block.1} parent=23 // pred_region
          %p329 = scmp.lt.s32.totalorder %s16, 3
          %s330 = scalar_select %p329, %s16, 3
          %s331 = smul.addr %s330, 16
          %s332 = smul.addr %s331, 8
          %s333 = scalar_lea.vmem %s7, %s332
        $region48: #{vits_residual_coupling_block.1} parent=23 // pred_fallthru
          _
        // Predicated region
        $region49: #{vits_residual_coupling_block.1} parent=23 // pred_check
          %p334 = pneg %p234
        $region50: #{vits_residual_coupling_block.1} parent=23 // pred_check_branch
          %336 = sbr.rel (%p334) target = $region52
        $region51: #{vits_residual_coupling_block.1} parent=23 // pred_region
          %p337 = scmp.lt.s32.totalorder %s16, 3
          %s338 = scalar_select %p337, %s16, 3
          %s339 = smul.addr %s338, 2
          %s340 = scalar_lea.vmem %s8, %s339
        $region52: #{vits_residual_coupling_block.1} parent=23 // pred_fallthru
          _
      $region24: #{vits_residual_coupling_block.1} parent=5 // pred_fallthru
        _
      %p341 = scmp.le.s32.totalorder 1, %s16
      %p342 = scmp.lt.s32.totalorder %s16, 5
      %p343 = pnand %p341, %p342
      %p344 = pneg %p343
      // Predicated region
      $region53: #{vits_residual_coupling_block.1} parent=5 // pred_check
        _
      $region54: #{vits_residual_coupling_block.1} parent=5 // pred_check_branch
        %346 = sbr.rel (%p343) target = $region56
      $region55: #{vits_residual_coupling_block.1} parent=5 // pred_region
        %s347 = ssub.s32 %s16, 1
        %p348 = pneg %p37
        %p349 = pneg %p34
        %p350 = pneg %p58
        %p351 = pneg %p55
        %p352 = scmp.lt.s32.totalorder %s21, 3
        %s353 = scalar_select %p352, %s21, 3
        %s354 = smul.addr %s353, 4
        %s355 = smul.addr %s354, 8
        %s356 = scalar_lea.vmem %s2, %s355
        %p357 = pneg %p84
        %p358 = pneg %p81
        %p359 = scmp.lt.s32.totalorder %s21, 3
        %s360 = scalar_select %p359, %s21, 3
        %s361 = smul.addr %s360, 4
        %s362 = smul.addr %s361, 8
        %s363 = scalar_lea.vmem %s3, %s362
        %p364 = pneg %p110
        %p365 = pneg %p107
        %p366 = scmp.lt.s32.totalorder %s21, 3
        %s367 = scalar_select %p366, %s21, 3
        %s368 = smul.addr %s367, 64
        %s369 = smul.addr %s368, 8
        %s370 = scalar_lea.vmem %s4, %s369
        %p371 = pneg %p136
        %p372 = pneg %p133
        %p373 = scmp.lt.s32.totalorder %s21, 3
        %s374 = scalar_select %p373, %s21, 3
        %s375 = smul.addr %s374, 32
        %s376 = smul.addr %s375, 8
        %s377 = scalar_lea.vmem %s5, %s376
        %p378 = pneg %p162
        %p379 = pneg %p159
        %p380 = scmp.lt.s32.totalorder %s21, 3
        %s381 = scalar_select %p380, %s21, 3
        %s382 = smul.addr %s381, 20
        %s383 = smul.addr %s382, 8
        %s384 = scalar_lea.vmem %s6, %s383
        %p385 = pneg %p188
        %p386 = pneg %p185
        %p387 = scmp.lt.s32.totalorder %s21, 3
        %s388 = scalar_select %p387, %s21, 3
        %s389 = smul.addr %s388, 16
        %s390 = smul.addr %s389, 8
        %s391 = scalar_lea.vmem %s7, %s390
        %p392 = pneg %p214
        %p393 = pneg %p211
        %p394 = scmp.lt.s32.totalorder %s21, 3
        %s395 = scalar_select %p394, %s21, 3
        %s396 = smul.addr %s395, 2
        %s397 = scalar_lea.vmem %s8, %s396
        %p398 = pneg %p240
        %p399 = pneg %p237
        %p400 = pneg %p261
        %p401 = pneg %p258
        %p402 = scmp.lt.s32.totalorder %s21, 3
        %s403 = scalar_select %p402, %s21, 3
        %s404 = smul.addr %s403, 4
        %s405 = smul.addr %s404, 8
        %s406 = scalar_lea.vmem %s2, %s405
        %p407 = scmp.lt.s32.totalorder %s21, 3
        %s408 = scalar_select %p407, %s21, 3
        %s409 = smul.addr %s408, 4
        %s410 = smul.addr %s409, 8
        %s411 = scalar_lea.vmem %s3, %s410
        %p412 = scmp.lt.s32.totalorder %s21, 3
        %s413 = scalar_select %p412, %s21, 3
        %s414 = smul.addr %s413, 64
        %s415 = smul.addr %s414, 8
        %s416 = scalar_lea.vmem %s4, %s415
        %p417 = scmp.lt.s32.totalorder %s21, 3
        %s418 = scalar_select %p417, %s21, 3
        %s419 = smul.addr %s418, 32
        %s420 = smul.addr %s419, 8
        %s421 = scalar_lea.vmem %s5, %s420
        %p422 = scmp.lt.s32.totalorder %s21, 3
        %s423 = scalar_select %p422, %s21, 3
        %s424 = smul.addr %s423, 20
        %s425 = smul.addr %s424, 8
        %s426 = scalar_lea.vmem %s6, %s425
        %p427 = scmp.lt.s32.totalorder %s21, 3
        %s428 = scalar_select %p427, %s21, 3
        %s429 = smul.addr %s428, 16
        %s430 = smul.addr %s429, 8
        %s431 = scalar_lea.vmem %s7, %s430
        %p432 = scmp.lt.s32.totalorder %s21, 3
        %s433 = scalar_select %p432, %s21, 3
        %s434 = smul.addr %s433, 2
        %s435 = scalar_lea.vmem %s8, %s434
        %p436 = scmp.eq.s32.totalorder %s21, 0
        // Predicated region
        $region57: #{vits_residual_coupling_block.1} parent=55 // pred_check
          %p437 = pneg %p436
        $region58: #{vits_residual_coupling_block.1} parent=55 // pred_check_branch
          %439 = sbr.rel (%p437) target = $region60
        $region59: #{vits_residual_coupling_block.1} parent=55 // pred_region
          %v440 = vld [vmem:[%s0] sm:$0x33]
          %v443 = vunpack.c.l.s4 1983009808
          %v444 = vunpack.c.0.s8 %v443
          %v445 = vlaneseq
          %v446 = vshrl.u32 %v445, 7
          %v447 = vsub.s32 %v444, %v446
          %v448 = vrot.slane %v440, %v447
          %450 = vst [vmem:[#allocation2] sm:$0xf] %v448
          %v451 = vld [vmem:[%s0] sm:$0xcc]
          %v454 = vunpack.c.l.s4 1983009808
          %v455 = vunpack.c.0.s8 %v454
          %v456 = vlaneseq
          %v457 = vshrl.u32 %v456, 7
          %v458 = vsub.s32 %v455, %v457
          %v459 = vrot.slane %v451, %v458
          %v460 = vcombine.high %v459, %v459
          %462 = vst [vmem:[#allocation3] sm:$0xf] %v460
        $region60: #{vits_residual_coupling_block.1} parent=55 // pred_fallthru
          _
        %v463 = vld [vmem:[%s1] sm:$0x3]
        %v464 = vlaneseq
        %v465 = vand.u32 %v464, 127
        %v466 = vadd.s32 %v465, 128
        %vm467 = vcmp.lt.s32.totalorder %v465, 0
        %v468 = vsub.s32 0, %v465
        %v469 = vsel %vm467, %v468, %v465
        %v470 = vshrl.u32 %v469, 7
        %v471 = vand.u32 %v469, 127
        %v472 = vsub.s32 0, %v471
        %v473 = vsel %vm467, %v472, %v471
        %vm474 = vcmp.lt.s32.totalorder %v466, 0
        %v475 = vsub.s32 0, %v466
        %v476 = vsel %vm474, %v475, %v466
        %v477 = vshrl.u32 %v476, 7
        %v478 = vand.u32 %v476, 127
        %v479 = vsub.s32 0, %v478
        %v480 = vsel %vm474, %v479, %v478
        %vm481 = vcmp.ne.s32.totalorder %v473, 0
        %vm482 = vcmp.ne.s32.totalorder %v480, 0
        %vm483 = vcmp.lt.s32.totalorder %v473, 0
        %vm484 = vcmp.lt.s32.totalorder %v480, 0
        %vm485 = vmand %vm483, %vm481
        %vm486 = vmand %vm484, %vm482
        %v487 = vadd.s32 %v473, 128
        %v488 = vadd.s32 %v480, 128
        %v489 = vsel %vm485, %v487, %v473
        %v490 = vsel %vm486, %v488, %v480
        %v491 = vadd.s32 %v489, 4294967294
        %v492 = vadd.s32 %v490, 4294967294
        %vm493 = vcmp.ge.s32.totalorder %v491, 0
        %vm494 = vcmp.ge.s32.totalorder %v492, 0
        %vm495 = vcmp.le.s32.totalorder %v491, 127
        %vm496 = vcmp.le.s32.totalorder %v492, 127
        %vm497 = vmand %vm493, %vm495
        %vm498 = vmand %vm494, %vm496
        %v499 = vsel %vm497, 1, 0
        %v500 = vsel %vm498, 1, 0
        %v501 = vcvt.s32.f32 %v499
        %v502 = vcvt.s32.f32 %v500
        %v503 = vadd.s32 %v489, 4294967295
        %v504 = vadd.s32 %v490, 4294967295
        %vm505 = vcmp.ge.s32.totalorder %v503, 0
        %vm506 = vcmp.ge.s32.totalorder %v504, 0
        %vm507 = vcmp.le.s32.totalorder %v503, 127
        %vm508 = vcmp.le.s32.totalorder %v504, 127
        %vm509 = vmand %vm505, %vm507
        %vm510 = vmand %vm506, %vm508
        %v511 = vsel %vm509, 1, 0
        %v512 = vsel %vm510, 1, 0
        %v513 = vcvt.s32.f32 %v511
        %v514 = vcvt.s32.f32 %v512
        %v515 = vadd.s32 %v489, 1
        %v516 = vadd.s32 %v490, 1
        %vm517 = vcmp.ge.s32.totalorder %v515, 0
        %vm518 = vcmp.ge.s32.totalorder %v516, 0
        %vm519 = vcmp.le.s32.totalorder %v515, 127
        %vm520 = vcmp.le.s32.totalorder %v516, 127
        %vm521 = vmand %vm517, %vm519
        %vm522 = vmand %vm518, %vm520
        %v523 = vsel %vm521, 1, 0
        %v524 = vsel %vm522, 1, 0
        %v525 = vcvt.s32.f32 %v523
        %v526 = vcvt.s32.f32 %v524
        %v527 = vadd.s32 %v489, 2
        %v528 = vadd.s32 %v490, 2
        %vm529 = vcmp.ge.s32.totalorder %v527, 0
        %vm530 = vcmp.ge.s32.totalorder %v528, 0
        %vm531 = vcmp.le.s32.totalorder %v527, 127
        %vm532 = vcmp.le.s32.totalorder %v528, 127
        %vm533 = vmand %vm529, %vm531
        %vm534 = vmand %vm530, %vm532
        %v535 = vsel %vm533, 1, 0
        %v536 = vsel %vm534, 1, 0
        %v537 = vcvt.s32.f32 %v535
        %v538 = vcvt.s32.f32 %v536
        %v539 = vld [vmem:[#allocation2] sm:$0xf]
        %v540 = vld [vmem:[#allocation3] sm:$0xf]
        %v541 = vld [vmem:[%s406] sm:$0xff]
        %v542 = vld [vmem:[%s406 + $0x8] sm:$0xff]
        %v543 = vld [vmem:[%s406 + $0x10] sm:$0xff]
        %v544 = vld [vmem:[%s406 + $0x18] sm:$0xff]
        %546 = vset.pattern.permute.xlu0 0
        %547 = vperm.xlu0 %546, %v541
        %v548 = vpop.permute.xlu0 %547
        %551 = vset.pattern.permute.xlu0 0
        %552 = vperm.xlu0 %551, %v542
        %v553 = vpop.permute.xlu0 %552
        %556 = vset.pattern.permute.xlu0 0
        %557 = vperm.xlu0 %556, %v543
        %v558 = vpop.permute.xlu0 %557
        %561 = vset.pattern.permute.xlu0 0
        %562 = vperm.xlu0 %561, %v544
        %v563 = vpop.permute.xlu0 %562
        %v566 = vlaneseq
        %v567 = vshrl.u32 %v566, 7
        %v568 = vsub.s32 0, %v567
        %v569 = vrot.slane %v539, %v568
        %v570 = vlaneseq
        %v571 = vshrl.u32 %v570, 7
        %v572 = vsub.s32 2, %v571
        %v573 = vrot.slane %v539, %v572
        %v576 = vlaneseq
        %v577 = vshrl.u32 %v576, 7
        %v578 = vsub.s32 0, %v577
        %v579 = vrot.slane %v569, %v578
        %v580 = vlaneseq
        %v581 = vshrl.u32 %v580, 7
        %v582 = vsub.s32 0, %v581
        %v583 = vrot.slane %v573, %v582
        %v584 = vmul.f32 %v548, %v579
        %v585 = vmul.f32 %v548, %v583
        %v586 = vmul.f32 %v553, %v579
        %v587 = vmul.f32 %v553, %v583
        %v588 = vmul.f32 %v558, %v579
        %v589 = vmul.f32 %v558, %v583
        %v590 = vmul.f32 %v563, %v579
        %v591 = vmul.f32 %v563, %v583
        %592 = vset.pattern.permute.xlu0 1
        %593 = vperm.xlu0 %592, %v541
        %v594 = vpop.permute.xlu0 %593
        %596 = vset.pattern.permute.xlu0 1
        %597 = vperm.xlu0 %596, %v542
        %v598 = vpop.permute.xlu0 %597
        %600 = vset.pattern.permute.xlu0 1
        %601 = vperm.xlu0 %600, %v543
        %v602 = vpop.permute.xlu0 %601
        %604 = vset.pattern.permute.xlu0 1
        %605 = vperm.xlu0 %604, %v544
        %v606 = vpop.permute.xlu0 %605
        %v608 = vlaneseq
        %v609 = vshrl.u32 %v608, 7
        %v610 = vsub.s32 1, %v609
        %v611 = vrot.slane %v539, %v610
        %v612 = vlaneseq
        %v613 = vshrl.u32 %v612, 7
        %v614 = vsub.s32 3, %v613
        %v615 = vrot.slane %v539, %v614
        %v618 = vlaneseq
        %v619 = vshrl.u32 %v618, 7
        %v620 = vsub.s32 1, %v619
        %v621 = vrot.slane %v611, %v620
        %v622 = vlaneseq
        %v623 = vshrl.u32 %v622, 7
        %v624 = vsub.s32 1, %v623
        %v625 = vrot.slane %v615, %v624
        %v626 = vmul.f32 %v594, %v621
        %v627 = vmul.f32 %v594, %v625
        %v628 = vmul.f32 %v598, %v621
        %v629 = vmul.f32 %v598, %v625
        %v630 = vmul.f32 %v602, %v621
        %v631 = vmul.f32 %v602, %v625
        %v632 = vmul.f32 %v606, %v621
        %v633 = vmul.f32 %v606, %v625
        %v634 = vadd.f32 %v584, %v626
        %v635 = vadd.f32 %v585, %v627
        %v636 = vadd.f32 %v586, %v628
        %v637 = vadd.f32 %v587, %v629
        %v638 = vadd.f32 %v588, %v630
        %v639 = vadd.f32 %v589, %v631
        %v640 = vadd.f32 %v590, %v632
        %v641 = vadd.f32 %v591, %v633
        %v642 = vld [vmem:[%s411] sm:$0xff]
        %v643 = vld [vmem:[%s411 + $0x8] sm:$0xff]
        %v644 = vld [vmem:[%s411 + $0x10] sm:$0xff]
        %v645 = vld [vmem:[%s411 + $0x18] sm:$0xff]
        %647 = vset.pattern.permute.xlu0 0
        %648 = vperm.xlu0 %647, %v642
        %v649 = vpop.permute.xlu0 %648
        %652 = vset.pattern.permute.xlu0 0
        %653 = vperm.xlu0 %652, %v643
        %v654 = vpop.permute.xlu0 %653
        %657 = vset.pattern.permute.xlu0 0
        %658 = vperm.xlu0 %657, %v644
        %v659 = vpop.permute.xlu0 %658
        %662 = vset.pattern.permute.xlu0 0
        %663 = vperm.xlu0 %662, %v645
        %v664 = vpop.permute.xlu0 %663
        %v666 = vadd.f32 %v634, %v649
        %v667 = vadd.f32 %v635, %v649
        %v668 = vadd.f32 %v636, %v654
        %v669 = vadd.f32 %v637, %v654
        %v670 = vadd.f32 %v638, %v659
        %v671 = vadd.f32 %v639, %v659
        %v672 = vadd.f32 %v640, %v664
        %v673 = vadd.f32 %v641, %v664
        %v675 = vlaneseq
        %v676 = vshrl.u32 %v675, 7
        %v677 = vsub.s32 0, %v676
        %v678 = vrot.slane %v463, %v677
        %v679 = vlaneseq
        %v680 = vshrl.u32 %v679, 7
        %v681 = vsub.s32 1, %v680
        %v682 = vrot.slane %v463, %v681
        %v685 = vmul.f32 %v666, %v678
        %v686 = vmul.f32 %v667, %v682
        %v687 = vmul.f32 %v668, %v678
        %v688 = vmul.f32 %v669, %v682
        %v689 = vmul.f32 %v670, %v678
        %v690 = vmul.f32 %v671, %v682
        %v691 = vmul.f32 %v672, %v678
        %v692 = vmul.f32 %v673, %v682
        %693 = vrot.lane.b32.xlu0 %v685, 2
        %v694 = vpop.permute.xlu0 %693
        %695 = vrot.lane.b32.xlu0 %v687, 2
        %v696 = vpop.permute.xlu0 %695
        %697 = vrot.lane.b32.xlu0 %v689, 2
        %v698 = vpop.permute.xlu0 %697
        %699 = vrot.lane.b32.xlu0 %v691, 2
        %v700 = vpop.permute.xlu0 %699
        %701 = vrot.lane.b32.xlu0 %v686, 2
        %v702 = vpop.permute.xlu0 %701
        %703 = vrot.lane.b32.xlu0 %v688, 2
        %v704 = vpop.permute.xlu0 %703
        %705 = vrot.lane.b32.xlu0 %v690, 2
        %v706 = vpop.permute.xlu0 %705
        %707 = vrot.lane.b32.xlu0 %v692, 2
        %v708 = vpop.permute.xlu0 %707
        %vm709 = vcmp.lt.s32.totalorder %v465, 2
        %v710 = vsel %vm709, %v694, %v702
        %v711 = vsel %vm709, %v696, %v704
        %v712 = vsel %vm709, %v698, %v706
        %v713 = vsel %vm709, %v700, %v708
        %v714 = vsel %vm709, %v702, %v694
        %v715 = vsel %vm709, %v704, %v696
        %v716 = vsel %vm709, %v706, %v698
        %v717 = vsel %vm709, %v708, %v700
        %v718 = vmul.f32 %v714, %v501
        %v719 = vmul.f32 %v710, %v502
        %v720 = vmul.f32 %v715, %v501
        %v721 = vmul.f32 %v711, %v502
        %v722 = vmul.f32 %v716, %v501
        %v723 = vmul.f32 %v712, %v502
        %v724 = vmul.f32 %v717, %v501
        %v725 = vmul.f32 %v713, %v502
        %726 = vst [vmem:[#allocation4] sm:$0xff] %v718
        %727 = vst [vmem:[#allocation4 + $0x8] sm:$0xff] %v719
        %728 = vst [vmem:[#allocation4 + $0x10] sm:$0xff] %v720
        %729 = vst [vmem:[#allocation4 + $0x18] sm:$0xff] %v721
        %730 = vst [vmem:[#allocation4 + $0x20] sm:$0xff] %v722
        %731 = vst [vmem:[#allocation4 + $0x28] sm:$0xff] %v723
        %732 = vst [vmem:[#allocation4 + $0x30] sm:$0xff] %v724
        %733 = vst [vmem:[#allocation4 + $0x38] sm:$0xff] %v725
        %734 = vrot.lane.b32.xlu0 %v685, 1
        %v735 = vpop.permute.xlu0 %734
        %736 = vrot.lane.b32.xlu0 %v687, 1
        %v737 = vpop.permute.xlu0 %736
        %738 = vrot.lane.b32.xlu0 %v689, 1
        %v739 = vpop.permute.xlu0 %738
        %740 = vrot.lane.b32.xlu0 %v691, 1
        %v741 = vpop.permute.xlu0 %740
        %742 = vrot.lane.b32.xlu0 %v686, 1
        %v743 = vpop.permute.xlu0 %742
        %744 = vrot.lane.b32.xlu0 %v688, 1
        %v745 = vpop.permute.xlu0 %744
        %746 = vrot.lane.b32.xlu0 %v690, 1
        %v747 = vpop.permute.xlu0 %746
        %748 = vrot.lane.b32.xlu0 %v692, 1
        %v749 = vpop.permute.xlu0 %748
        %vm750 = vcmp.lt.s32.totalorder %v465, 1
        %v751 = vsel %vm750, %v735, %v743
        %v752 = vsel %vm750, %v737, %v745
        %v753 = vsel %vm750, %v739, %v747
        %v754 = vsel %vm750, %v741, %v749
        %v755 = vsel %vm750, %v743, %v735
        %v756 = vsel %vm750, %v745, %v737
        %v757 = vsel %vm750, %v747, %v739
        %v758 = vsel %vm750, %v749, %v741
        %v759 = vmul.f32 %v755, %v513
        %v760 = vmul.f32 %v751, %v514
        %v761 = vmul.f32 %v756, %v513
        %v762 = vmul.f32 %v752, %v514
        %v763 = vmul.f32 %v757, %v513
        %v764 = vmul.f32 %v753, %v514
        %v765 = vmul.f32 %v758, %v513
        %v766 = vmul.f32 %v754, %v514
        %767 = vst [vmem:[#allocation4 + $0x40] sm:$0xff] %v759
        %768 = vst [vmem:[#allocation4 + $0x48] sm:$0xff] %v760
        %769 = vst [vmem:[#allocation4 + $0x50] sm:$0xff] %v761
        %770 = vst [vmem:[#allocation4 + $0x58] sm:$0xff] %v762
        %771 = vst [vmem:[#allocation4 + $0x60] sm:$0xff] %v763
        %772 = vst [vmem:[#allocation4 + $0x68] sm:$0xff] %v764
        %773 = vst [vmem:[#allocation4 + $0x70] sm:$0xff] %v765
        %774 = vst [vmem:[#allocation4 + $0x78] sm:$0xff] %v766
        %775 = vst [vmem:[#allocation4 + $0x80] sm:$0xff] %v685
        %776 = vst [vmem:[#allocation4 + $0x88] sm:$0xff] %v686
        %777 = vst [vmem:[#allocation4 + $0x90] sm:$0xff] %v687
        %778 = vst [vmem:[#allocation4 + $0x98] sm:$0xff] %v688
        %779 = vst [vmem:[#allocation4 + $0xa0] sm:$0xff] %v689
        %780 = vst [vmem:[#allocation4 + $0xa8] sm:$0xff] %v690
        %781 = vst [vmem:[#allocation4 + $0xb0] sm:$0xff] %v691
        %782 = vst [vmem:[#allocation4 + $0xb8] sm:$0xff] %v692
        %783 = vrot.lane.b32.xlu0 %v685, 127
        %v784 = vpop.permute.xlu0 %783
        %785 = vrot.lane.b32.xlu0 %v687, 127
        %v786 = vpop.permute.xlu0 %785
        %787 = vrot.lane.b32.xlu0 %v689, 127
        %v788 = vpop.permute.xlu0 %787
        %789 = vrot.lane.b32.xlu0 %v691, 127
        %v790 = vpop.permute.xlu0 %789
        %791 = vrot.lane.b32.xlu0 %v686, 127
        %v792 = vpop.permute.xlu0 %791
        %793 = vrot.lane.b32.xlu0 %v688, 127
        %v794 = vpop.permute.xlu0 %793
        %795 = vrot.lane.b32.xlu0 %v690, 127
        %v796 = vpop.permute.xlu0 %795
        %797 = vrot.lane.b32.xlu0 %v692, 127
        %v798 = vpop.permute.xlu0 %797
        %vm799 = vcmp.lt.s32.totalorder %v465, 127
        %v800 = vsel %vm799, %v784, %v792
        %v801 = vsel %vm799, %v786, %v794
        %v802 = vsel %vm799, %v788, %v796
        %v803 = vsel %vm799, %v790, %v798
        %v804 = vsel %vm799, %v792, %v784
        %v805 = vsel %vm799, %v794, %v786
        %v806 = vsel %vm799, %v796, %v788
        %v807 = vsel %vm799, %v798, %v790
        %v808 = vmul.f32 %v800, %v525
        %v809 = vmul.f32 %v804, %v526
        %v810 = vmul.f32 %v801, %v525
        %v811 = vmul.f32 %v805, %v526
        %v812 = vmul.f32 %v802, %v525
        %v813 = vmul.f32 %v806, %v526
        %v814 = vmul.f32 %v803, %v525
        %v815 = vmul.f32 %v807, %v526
        %816 = vst [vmem:[#allocation4 + $0xc0] sm:$0xff] %v808
        %817 = vst [vmem:[#allocation4 + $0xc8] sm:$0xff] %v809
        %818 = vst [vmem:[#allocation4 + $0xd0] sm:$0xff] %v810
        %819 = vst [vmem:[#allocation4 + $0xd8] sm:$0xff] %v811
        %820 = vst [vmem:[#allocation4 + $0xe0] sm:$0xff] %v812
        %821 = vst [vmem:[#allocation4 + $0xe8] sm:$0xff] %v813
        %822 = vst [vmem:[#allocation4 + $0xf0] sm:$0xff] %v814
        %823 = vst [vmem:[#allocation4 + $0xf8] sm:$0xff] %v815
        %824 = vrot.lane.b32.xlu0 %v685, 126
        %v825 = vpop.permute.xlu0 %824
        %826 = vrot.lane.b32.xlu0 %v687, 126
        %v827 = vpop.permute.xlu0 %826
        %828 = vrot.lane.b32.xlu0 %v689, 126
        %v829 = vpop.permute.xlu0 %828
        %830 = vrot.lane.b32.xlu0 %v691, 126
        %v831 = vpop.permute.xlu0 %830
        %832 = vrot.lane.b32.xlu0 %v686, 126
        %v833 = vpop.permute.xlu0 %832
        %834 = vrot.lane.b32.xlu0 %v688, 126
        %v835 = vpop.permute.xlu0 %834
        %836 = vrot.lane.b32.xlu0 %v690, 126
        %v837 = vpop.permute.xlu0 %836
        %838 = vrot.lane.b32.xlu0 %v692, 126
        %v839 = vpop.permute.xlu0 %838
        %vm840 = vcmp.lt.s32.totalorder %v465, 126
        %v841 = vsel %vm840, %v825, %v833
        %v842 = vsel %vm840, %v827, %v835
        %v843 = vsel %vm840, %v829, %v837
        %v844 = vsel %vm840, %v831, %v839
        %v845 = vsel %vm840, %v833, %v825
        %v846 = vsel %vm840, %v835, %v827
        %v847 = vsel %vm840, %v837, %v829
        %v848 = vsel %vm840, %v839, %v831
        %v849 = vmul.f32 %v841, %v537
        %v850 = vmul.f32 %v845, %v538
        %v851 = vmul.f32 %v842, %v537
        %v852 = vmul.f32 %v846, %v538
        %v853 = vmul.f32 %v843, %v537
        %v854 = vmul.f32 %v847, %v538
        %v855 = vmul.f32 %v844, %v537
        %v856 = vmul.f32 %v848, %v538
        %857 = vst [vmem:[#allocation4 + $0x100] sm:$0xff] %v849
        %858 = vst [vmem:[#allocation4 + $0x108] sm:$0xff] %v850
        %859 = vst [vmem:[#allocation4 + $0x110] sm:$0xff] %v851
        %860 = vst [vmem:[#allocation4 + $0x118] sm:$0xff] %v852
        %861 = vst [vmem:[#allocation4 + $0x120] sm:$0xff] %v853
        %862 = vst [vmem:[#allocation4 + $0x128] sm:$0xff] %v854
        %863 = vst [vmem:[#allocation4 + $0x130] sm:$0xff] %v855
        %864 = vst [vmem:[#allocation4 + $0x138] sm:$0xff] %v856
        %v865 = vld [vmem:[%s416] sm:$0xff]
        %v866 = vld [vmem:[%s416 + $0x8] sm:$0xff]
        %v867 = vld [vmem:[%s416 + $0x10] sm:$0xff]
        %v868 = vld [vmem:[%s416 + $0x18] sm:$0xff]
        %v869 = vld [vmem:[%s416 + $0x20] sm:$0xff]
        %v870 = vld [vmem:[%s416 + $0x28] sm:$0xff]
        %v871 = vld [vmem:[%s416 + $0x30] sm:$0xff]
        %v872 = vld [vmem:[%s416 + $0x38] sm:$0xff]
        %v873 = vld [vmem:[%s416 + $0x40] sm:$0xff]
        %v874 = vld [vmem:[%s416 + $0x48] sm:$0xff]
        %v875 = vld [vmem:[%s416 + $0x50] sm:$0xff]
        %v876 = vld [vmem:[%s416 + $0x58] sm:$0xff]
        %v877 = vld [vmem:[%s416 + $0x60] sm:$0xff]
        %v878 = vld [vmem:[%s416 + $0x68] sm:$0xff]
        %v879 = vld [vmem:[%s416 + $0x70] sm:$0xff]
        %v880 = vld [vmem:[%s416 + $0x78] sm:$0xff]
        %v881 = vld [vmem:[#allocation4] sm:$0xff]
        %v882 = vld [vmem:[#allocation4 + $0x8] sm:$0xff]
        %v883 = vld [vmem:[#allocation4 + $0x10] sm:$0xff]
        %v884 = vld [vmem:[#allocation4 + $0x18] sm:$0xff]
        %v885 = vld [vmem:[#allocation4 + $0x20] sm:$0xff]
        %v886 = vld [vmem:[#allocation4 + $0x28] sm:$0xff]
        %v887 = vld [vmem:[#allocation4 + $0x30] sm:$0xff]
        %v888 = vld [vmem:[#allocation4 + $0x38] sm:$0xff]
        %v889 = vld [vmem:[#allocation4 + $0x40] sm:$0xff]
        %v890 = vld [vmem:[#allocation4 + $0x48] sm:$0xff]
        %v891 = vld [vmem:[#allocation4 + $0x50] sm:$0xff]
        %v892 = vld [vmem:[#allocation4 + $0x58] sm:$0xff]
        %v893 = vld [vmem:[#allocation4 + $0x60] sm:$0xff]
        %v894 = vld [vmem:[#allocation4 + $0x68] sm:$0xff]
        %v895 = vld [vmem:[#allocation4 + $0x70] sm:$0xff]
        %v896 = vld [vmem:[#allocation4 + $0x78] sm:$0xff]
        %v897 = vld [vmem:[#allocation4 + $0x80] sm:$0xff]
        %v898 = vld [vmem:[#allocation4 + $0x88] sm:$0xff]
        %v899 = vld [vmem:[#allocation4 + $0x90] sm:$0xff]
        %v900 = vld [vmem:[#allocation4 + $0x98] sm:$0xff]
        %v901 = vld [vmem:[#allocation4 + $0xa0] sm:$0xff]
        %v902 = vld [vmem:[#allocation4 + $0xa8] sm:$0xff]
        %v903 = vld [vmem:[#allocation4 + $0xb0] sm:$0xff]
        %v904 = vld [vmem:[#allocation4 + $0xb8] sm:$0xff]
        %v905 = vld [vmem:[#allocation4 + $0xc0] sm:$0xff]
        %v906 = vld [vmem:[#allocation4 + $0xc8] sm:$0xff]
        %v907 = vld [vmem:[#allocation4 + $0xd0] sm:$0xff]
        %v908 = vld [vmem:[#allocation4 + $0xd8] sm:$0xff]
        %v909 = vld [vmem:[#allocation4 + $0xe0] sm:$0xff]
        %v910 = vld [vmem:[#allocation4 + $0xe8] sm:$0xff]
        %v911 = vld [vmem:[#allocation4 + $0xf0] sm:$0xff]
        %v912 = vld [vmem:[#allocation4 + $0xf8] sm:$0xff]
        %v913 = vld [vmem:[#allocation4 + $0x100] sm:$0xff]
        %v914 = vld [vmem:[#allocation4 + $0x108] sm:$0xff]
        %v915 = vld [vmem:[#allocation4 + $0x110] sm:$0xff]
        %v916 = vld [vmem:[#allocation4 + $0x118] sm:$0xff]
        %v917 = vld [vmem:[#allocation4 + $0x120] sm:$0xff]
        %v918 = vld [vmem:[#allocation4 + $0x128] sm:$0xff]
        %v919 = vld [vmem:[#allocation4 + $0x130] sm:$0xff]
        %v920 = vld [vmem:[#allocation4 + $0x138] sm:$0xff]
        %v921 = vld [vmem:[%s421] sm:$0xff]
        %v922 = vld [vmem:[%s421 + $0x8] sm:$0xff]
        %v923 = vld [vmem:[%s421 + $0x10] sm:$0xff]
        %v924 = vld [vmem:[%s421 + $0x18] sm:$0xff]
        %v925 = vld [vmem:[%s421 + $0x20] sm:$0xff]
        %v926 = vld [vmem:[%s421 + $0x28] sm:$0xff]
        %v927 = vld [vmem:[%s421 + $0x30] sm:$0xff]
        %v928 = vld [vmem:[%s421 + $0x38] sm:$0xff]
        %930 = vset.pattern.permute.xlu0 0
        %931 = vperm.xlu0 %930, %v921
        %v932 = vpop.permute.xlu0 %931
        %935 = vset.pattern.permute.xlu0 0
        %936 = vperm.xlu0 %935, %v922
        %v937 = vpop.permute.xlu0 %936
        %940 = vset.pattern.permute.xlu0 0
        %941 = vperm.xlu0 %940, %v923
        %v942 = vpop.permute.xlu0 %941
        %945 = vset.pattern.permute.xlu0 0
        %946 = vperm.xlu0 %945, %v924
        %v947 = vpop.permute.xlu0 %946
        %950 = vset.pattern.permute.xlu0 0
        %951 = vperm.xlu0 %950, %v925
        %v952 = vpop.permute.xlu0 %951
        %955 = vset.pattern.permute.xlu0 0
        %956 = vperm.xlu0 %955, %v926
        %v957 = vpop.permute.xlu0 %956
        %960 = vset.pattern.permute.xlu0 0
        %961 = vperm.xlu0 %960, %v927
        %v962 = vpop.permute.xlu0 %961
        %965 = vset.pattern.permute.xlu0 0
        %966 = vperm.xlu0 %965, %v928
        %v967 = vpop.permute.xlu0 %966
        %vm969 = vcmask 261120
        %v971 = vsel %vm969, %v866, 0
        %v974 = vsel %vm969, %v868, 0
        %v977 = vsel %vm969, %v870, 0
        %v980 = vsel %vm969, %v872, 0
        %v983 = vsel %vm969, %v874, 0
        %v986 = vsel %vm969, %v876, 0
        %v989 = vsel %vm969, %v878, 0
        %v992 = vsel %vm969, %v880, 0
        %994 = vmatprep.subr.mxu0 %v882
        %995 = vmatpush1.msra.mxu0 %v881
        %996 = vmatprep.subr.mxu0 %v884
        %997 = vmatpush1.msra.mxu0 %v883
        %998 = vmatprep.subr.mxu0 %v886
        %999 = vmatpush1.msra.mxu0 %v885
        %1000 = vmatprep.subr.mxu0 %v888
        %1001 = vmatpush1.msra.mxu0 %v887
        %1002 = vmatprep.subr.mxu0 %v890
        %1003 = vmatpush1.msra.mxu0 %v889
        %1004 = vmatprep.subr.mxu0 %v892
        %1005 = vmatpush1.msra.mxu0 %v891
        %1006 = vmatprep.subr.mxu0 %v894
        %1007 = vmatpush1.msra.mxu0 %v893
        %1008 = vmatprep.subr.mxu0 %v896
        %1009 = vmatpush1.msra.mxu0 %v895
        %1010 = vmatprep.subr.mxu0 %v898
        %1011 = vmatpush1.msra.mxu0 %v897
        %1012 = vmatprep.subr.mxu0 %v900
        %1013 = vmatpush1.msra.mxu0 %v899
        %1014 = vmatprep.subr.mxu0 %v902
        %1015 = vmatpush1.msra.mxu0 %v901
        %1016 = vmatprep.subr.mxu0 %v904
        %1017 = vmatpush1.msra.mxu0 %v903
        %1018 = vmatprep.subr.mxu0 %v906
        %1019 = vmatpush1.msra.mxu0 %v905
        %1020 = vmatprep.subr.mxu0 %v908
        %1021 = vmatpush1.msra.mxu0 %v907
        %1022 = vmatprep.subr.mxu0 %v910
        %1023 = vmatpush1.msra.mxu0 %v909
        %1024 = vmatprep.subr.mxu0 %v912
        %1025 = vmatpush1.msra.mxu0 %v911
        %1026 = vmatprep.subr.mxu0 %v914
        %1027 = vmatpush1.msra.mxu0 %v913
        %1028 = vmatprep.subr.mxu0 %v916
        %1029 = vmatpush1.msra.mxu0 %v915
        %1030 = vmatprep.subr.mxu0 %v918
        %1031 = vmatpush1.msra.mxu0 %v917
        %1032 = vmatprep.subr.mxu0 %v920
        %1033 = vmatpush1.msra.mxu0 %v919
        %1034 = vmatprep.subr.mxu0 0.0
        %1035 = vmatpush1.msra.mxu0 0.0
        %1036 = vmatprep.subr.mxu0 0.0
        %1037 = vmatpush1.msra.mxu0 0.0
        %1038 = vmatprep.subr.mxu0 0.0
        %1039 = vmatpush1.msra.mxu0 0.0
        %1040 = vmatprep.subr.mxu0 0.0
        %1041 = vmatpush1.msra.mxu0 0.0
        %1042 = vmatprep.subr.mxu0 0.0
        %1043 = vmatpush1.msra.mxu0 0.0
        %1044 = vmatprep.subr.mxu0 0.0
        %1045 = vmatpush1.msra.mxu0 0.0
        %1046 = vmatprep.subr.mxu0 0.0
        %1047 = vmatpush1.msra.mxu0 0.0
        %1048 = vmatprep.subr.mxu0 0.0
        %1049 = vmatpush1.msra.mxu0 0.0
        %1050 = vmatprep.subr.mxu0 0.0
        %1051 = vmatpush1.msra.mxu0 0.0
        %1052 = vmatprep.subr.mxu0 0.0
        %1053 = vmatpush1.msra.mxu0 0.0
        %1054 = vmatprep.subr.mxu0 0.0
        %1055 = vmatpush1.msra.mxu0 0.0
        %1056 = vmatprep.subr.mxu0 0.0
        %1057 = vmatpush1.msra.mxu0 0.0
        %1058 = vmatprep.mubr.f32.mxu0 %v971
        %1059 = vmatmul.mubr.f32.gmra.mrb[0].mxu0 %v865
        %v1060 = vpop.f32.mrb[0].mxu0
        %v1061 = vadd.f32 %v932, %v1060
        %v1062 = vpop.f32.mrb[0].mxu0
        %v1063 = vadd.f32 %v932, %v1062
        %1064 = vmatprep.mubr.f32.mxu0 %v974
        %1065 = vmatmul.mubr.f32.gmra.mrb[0].mxu0 %v867
        %v1066 = vpop.f32.mrb[0].mxu0
        %v1067 = vadd.f32 %v937, %v1066
        %v1068 = vpop.f32.mrb[0].mxu0
        %v1069 = vadd.f32 %v937, %v1068
        %1070 = vmatprep.mubr.f32.mxu0 %v977
        %1071 = vmatmul.mubr.f32.gmra.mrb[0].mxu0 %v869
        %v1072 = vpop.f32.mrb[0].mxu0
        %v1073 = vadd.f32 %v942, %v1072
        %v1074 = vpop.f32.mrb[0].mxu0
        %v1075 = vadd.f32 %v942, %v1074
        %1076 = vmatprep.mubr.f32.mxu0 %v980
        %1077 = vmatmul.mubr.f32.gmra.mrb[0].mxu0 %v871
        %v1078 = vpop.f32.mrb[0].mxu0
        %v1079 = vadd.f32 %v947, %v1078
        %v1080 = vpop.f32.mrb[0].mxu0
        %v1081 = vadd.f32 %v947, %v1080
        %1082 = vmatprep.mubr.f32.mxu0 %v983
        %1083 = vmatmul.mubr.f32.gmra.mrb[0].mxu0 %v873
        %v1084 = vpop.f32.mrb[0].mxu0
        %v1085 = vadd.f32 %v952, %v1084
        %v1086 = vpop.f32.mrb[0].mxu0
        %v1087 = vadd.f32 %v952, %v1086
        %1088 = vmatprep.mubr.f32.mxu0 %v986
        %1089 = vmatmul.mubr.f32.gmra.mrb[0].mxu0 %v875
        %v1090 = vpop.f32.mrb[0].mxu0
        %v1091 = vadd.f32 %v957, %v1090
        %v1092 = vpop.f32.mrb[0].mxu0
        %v1093 = vadd.f32 %v957, %v1092
        %1094 = vmatprep.mubr.f32.mxu0 %v989
        %1095 = vmatmul.mubr.f32.gmra.mrb[0].mxu0 %v877
        %v1096 = vpop.f32.mrb[0].mxu0
        %v1097 = vadd.f32 %v962, %v1096
        %v1098 = vpop.f32.mrb[0].mxu0
        %v1099 = vadd.f32 %v962, %v1098
        %1100 = vmatprep.mubr.f32.mxu0 %v992
        %1101 = vmatmul.mubr.f32.gmra.mrb[0].mxu0 %v879
        %v1102 = vpop.f32.mrb[0].mxu0
        %v1103 = vadd.f32 %v967, %v1102
        %v1104 = vpop.f32.mrb[0].mxu0
        %v1105 = vadd.f32 %v967, %v1104
        %1106 = vdwg.mxu0
        %v1107 = vtanh.pop %v1061
        %v1108 = vtanh.pop %v1063
        %v1109 = vtanh.pop %v1067
        %v1110 = vtanh.pop %v1069
        %v1111 = vtanh.pop %v1073
        %v1112 = vtanh.pop %v1075
        %v1113 = vtanh.pop %v1079
        %v1114 = vtanh.pop %v1081
        %v1115 = vxor.u32 %v1085, 2147483648
        %v1116 = vxor.u32 %v1087, 2147483648
        %v1117 = vxor.u32 %v1091, 2147483648
        %v1118 = vxor.u32 %v1093, 2147483648
        %v1119 = vxor.u32 %v1097, 2147483648
        %v1120 = vxor.u32 %v1099, 2147483648
        %v1121 = vxor.u32 %v1103, 2147483648
        %v1122 = vxor.u32 %v1105, 2147483648
        %v1123 = vmul.f32 %v1115, 1.442695
        %v1124 = vpow.pop %v1123
        %v1125 = vmul.f32 %v1116, 1.442695
        %v1126 = vpow.pop %v1125
        %v1127 = vmul.f32 %v1117, 1.442695
        %v1128 = vpow.pop %v1127
        %v1129 = vmul.f32 %v1118, 1.442695
        %v1130 = vpow.pop %v1129
        %v1131 = vmul.f32 %v1119, 1.442695
        %v1132 = vpow.pop %v1131
        %v1133 = vmul.f32 %v1120, 1.442695
        %v1134 = vpow.pop %v1133
        %v1135 = vmul.f32 %v1121, 1.442695
        %v1136 = vpow.pop %v1135
        %v1137 = vmul.f32 %v1122, 1.442695
        %v1138 = vpow.pop %v1137
        %v1139 = vadd.f32 %v1124, 1.0
        %v1140 = vadd.f32 %v1126, 1.0
        %v1141 = vadd.f32 %v1128, 1.0
        %v1142 = vadd.f32 %v1130, 1.0
        %v1143 = vadd.f32 %v1132, 1.0
        %v1144 = vadd.f32 %v1134, 1.0
        %v1145 = vadd.f32 %v1136, 1.0
        %v1146 = vadd.f32 %v1138, 1.0
        %v1147 = vrcp.pop %v1139
        %v1148 = vmul.f32 1.0, %v1147
        %v1149 = vrcp.pop %v1140
        %v1150 = vmul.f32 1.0, %v1149
        %v1151 = vrcp.pop %v1141
        %v1152 = vmul.f32 1.0, %v1151
        %v1153 = vrcp.pop %v1142
        %v1154 = vmul.f32 1.0, %v1153
        %v1155 = vrcp.pop %v1143
        %v1156 = vmul.f32 1.0, %v1155
        %v1157 = vrcp.pop %v1144
        %v1158 = vmul.f32 1.0, %v1157
        %v1159 = vrcp.pop %v1145
        %v1160 = vmul.f32 1.0, %v1159
        %v1161 = vrcp.pop %v1146
        %v1162 = vmul.f32 1.0, %v1161
        %v1163 = vmul.f32 %v1107, %v1148
        %v1164 = vmul.f32 %v1108, %v1150
        %v1165 = vmul.f32 %v1109, %v1152
        %v1166 = vmul.f32 %v1110, %v1154
        %v1167 = vmul.f32 %v1111, %v1156
        %v1168 = vmul.f32 %v1112, %v1158
        %v1169 = vmul.f32 %v1113, %v1160
        %v1170 = vmul.f32 %v1114, %v1162
        %v1171 = vld [vmem:[%s426] sm:$0xff]
        %v1172 = vld [vmem:[%s426 + $0x8] sm:$0xff]
        %v1173 = vld [vmem:[%s426 + $0x10] sm:$0xff]
        %v1174 = vld [vmem:[%s426 + $0x18] sm:$0xff]
        %v1175 = vld [vmem:[%s426 + $0x20] sm:$0x3]
        %v1177 = vsel %vm969, %v1171, 0
        %v1180 = vsel %vm969, %v1172, 0
        %v1183 = vsel %vm969, %v1173, 0
        %v1186 = vsel %vm969, %v1174, 0
        %v1189 = vsel %vm969, %v1175, 0
        %1191 = vmatprep.subr.mxu0 %v1164
        %1192 = vmatpush1.msra.mxu0 %v1163
        %1193 = vmatprep.subr.mxu0 %v1166
        %1194 = vmatpush1.msra.mxu0 %v1165
        %1195 = vmatprep.subr.mxu0 %v1168
        %1196 = vmatpush1.msra.mxu0 %v1167
        %1197 = vmatprep.subr.mxu0 %v1170
        %1198 = vmatpush1.msra.mxu0 %v1169
        %1199 = vmatprep.subr.mxu0 0.0
        %1200 = vmatpush1.msra.mxu0 0.0
        %1201 = vmatprep.subr.mxu0 0.0
        %1202 = vmatpush1.msra.mxu0 0.0
        %1203 = vmatprep.subr.mxu0 0.0
        %1204 = vmatpush1.msra.mxu0 0.0
        %1205 = vmatprep.subr.mxu0 0.0
        %1206 = vmatpush1.msra.mxu0 0.0
        %1207 = vmatprep.subr.mxu0 0.0
        %1208 = vmatpush1.msra.mxu0 0.0
        %1209 = vmatprep.subr.mxu0 0.0
        %1210 = vmatpush1.msra.mxu0 0.0
        %1211 = vmatprep.subr.mxu0 0.0
        %1212 = vmatpush1.msra.mxu0 0.0
        %1213 = vmatprep.subr.mxu0 0.0
        %1214 = vmatpush1.msra.mxu0 0.0
        %1215 = vmatprep.subr.mxu0 0.0
        %1216 = vmatpush1.msra.mxu0 0.0
        %1217 = vmatprep.subr.mxu0 0.0
        %1218 = vmatpush1.msra.mxu0 0.0
        %1219 = vmatprep.subr.mxu0 0.0
        %1220 = vmatpush1.msra.mxu0 0.0
        %1221 = vmatprep.subr.mxu0 0.0
        %1222 = vmatpush1.msra.mxu0 0.0
        %1223 = vmatprep.subr.mxu0 0.0
        %1224 = vmatpush1.msra.mxu0 0.0
        %1225 = vmatprep.subr.mxu0 0.0
        %1226 = vmatpush1.msra.mxu0 0.0
        %1227 = vmatprep.subr.mxu0 0.0
        %1228 = vmatpush1.msra.mxu0 0.0
        %1229 = vmatprep.subr.mxu0 0.0
        %1230 = vmatpush1.msra.mxu0 0.0
        %1231 = vmatprep.subr.mxu0 0.0
        %1232 = vmatpush1.msra.mxu0 0.0
        %1233 = vmatprep.subr.mxu0 0.0
        %1234 = vmatpush1.msra.mxu0 0.0
        %1235 = vmatprep.subr.mxu0 0.0
        %1236 = vmatpush1.msra.mxu0 0.0
        %1237 = vmatprep.subr.mxu0 0.0
        %1238 = vmatpush1.msra.mxu0 0.0
        %1239 = vmatprep.subr.mxu0 0.0
        %1240 = vmatpush1.msra.mxu0 0.0
        %1241 = vmatprep.subr.mxu0 0.0
        %1242 = vmatpush1.msra.mxu0 0.0
        %1243 = vmatprep.subr.mxu0 0.0
        %1244 = vmatpush1.msra.mxu0 0.0
        %1245 = vmatprep.subr.mxu0 0.0
        %1246 = vmatpush1.msra.mxu0 0.0
        %1247 = vmatprep.subr.mxu0 0.0
        %1248 = vmatpush1.msra.mxu0 0.0
        %1249 = vmatprep.subr.mxu0 0.0
        %1250 = vmatpush1.msra.mxu0 0.0
        %1251 = vmatprep.subr.mxu0 0.0
        %1252 = vmatpush1.msra.mxu0 0.0
        %1253 = vmatprep.subr.mxu0 0.0
        %1254 = vmatpush1.msra.mxu0 0.0
        %1255 = vmatprep.mubr.f32.mxu0 0.0
        %1256 = vmatmul.mubr.f32.gmra.mrb[0].mxu0 %v1177
        %v1257 = vpop.f32.mrb[0].mxu0
        %v1258 = vadd.f32 0.0, %v1257
        %v1259 = vpop.f32.mrb[0].mxu0
        %v1260 = vadd.f32 0.0, %v1259
        %1261 = vmatprep.mubr.f32.mxu0 0.0
        %1262 = vmatmul.mubr.f32.gmra.mrb[0].mxu0 %v1180
        %v1263 = vpop.f32.mrb[0].mxu0
        %v1264 = vadd.f32 0.0, %v1263
        %v1265 = vpop.f32.mrb[0].mxu0
        %v1266 = vadd.f32 0.0, %v1265
        %1267 = vmatprep.mubr.f32.mxu0 0.0
        %1268 = vmatmul.mubr.f32.gmra.mrb[0].mxu0 %v1183
        %v1269 = vpop.f32.mrb[0].mxu0
        %v1270 = vadd.f32 0.0, %v1269
        %v1271 = vpop.f32.mrb[0].mxu0
        %v1272 = vadd.f32 0.0, %v1271
        %1273 = vmatprep.mubr.f32.mxu0 0.0
        %1274 = vmatmul.mubr.f32.gmra.mrb[0].mxu0 %v1186
        %v1275 = vpop.f32.mrb[0].mxu0
        %v1276 = vadd.f32 0.0, %v1275
        %v1277 = vpop.f32.mrb[0].mxu0
        %v1278 = vadd.f32 0.0, %v1277
        %1279 = vmatprep.mubr.f32.mxu0 0.0
        %1280 = vmatmul.mubr.f32.gmra.mrb[0].mxu0 %v1189
        %v1281 = vpop.f32.mrb[0].mxu0
        %v1282 = vadd.f32 0.0, %v1281
        %v1283 = vpop.f32.mrb[0].mxu0
        %v1284 = vadd.f32 0.0, %v1283
        %1285 = vdwg.mxu0
        %v1286 = vadd.f32 %v685, %v1258
        %v1287 = vadd.f32 %v686, %v1260
        %v1288 = vadd.f32 %v687, %v1264
        %v1289 = vadd.f32 %v688, %v1266
        %v1290 = vadd.f32 %v689, %v1270
        %v1291 = vadd.f32 %v690, %v1272
        %v1292 = vadd.f32 %v691, %v1276
        %v1293 = vadd.f32 %v692, %v1278
        %v1294 = vld [vmem:[%s431] sm:$0xff]
        %v1295 = vld [vmem:[%s431 + $0x8] sm:$0xff]
        %v1296 = vld [vmem:[%s431 + $0x10] sm:$0xff]
        %v1297 = vld [vmem:[%s431 + $0x18] sm:$0xff]
        %1299 = vset.pattern.permute.xlu0 0
        %1300 = vperm.xlu0 %1299, %v1294
        %v1301 = vpop.permute.xlu0 %1300
        %1304 = vset.pattern.permute.xlu0 0
        %1305 = vperm.xlu0 %1304, %v1295
        %v1306 = vpop.permute.xlu0 %1305
        %1309 = vset.pattern.permute.xlu0 0
        %1310 = vperm.xlu0 %1309, %v1296
        %v1311 = vpop.permute.xlu0 %1310
        %1314 = vset.pattern.permute.xlu0 0
        %1315 = vperm.xlu0 %1314, %v1297
        %v1316 = vpop.permute.xlu0 %1315
        %v1318 = vadd.f32 %v1286, %v1301
        %v1319 = vadd.f32 %v1287, %v1301
        %v1320 = vadd.f32 %v1288, %v1306
        %v1321 = vadd.f32 %v1289, %v1306
        %v1322 = vadd.f32 %v1290, %v1311
        %v1323 = vadd.f32 %v1291, %v1311
        %v1324 = vadd.f32 %v1292, %v1316
        %v1325 = vadd.f32 %v1293, %v1316
        %v1326 = vmul.f32 %v1318, %v678
        %v1327 = vmul.f32 %v1319, %v682
        %v1328 = vmul.f32 %v1320, %v678
        %v1329 = vmul.f32 %v1321, %v682
        %v1330 = vmul.f32 %v1322, %v678
        %v1331 = vmul.f32 %v1323, %v682
        %v1332 = vmul.f32 %v1324, %v678
        %v1333 = vmul.f32 %v1325, %v682
        %1334 = vrot.lane.b32.xlu0 %v1326, 2
        %v1335 = vpop.permute.xlu0 %1334
        %1336 = vrot.lane.b32.xlu0 %v1328, 2
        %v1337 = vpop.permute.xlu0 %1336
        %1338 = vrot.lane.b32.xlu0 %v1330, 2
        %v1339 = vpop.permute.xlu0 %1338
        %1340 = vrot.lane.b32.xlu0 %v1332, 2
        %v1341 = vpop.permute.xlu0 %1340
        %1342 = vrot.lane.b32.xlu0 %v1327, 2
        %v1343 = vpop.permute.xlu0 %1342
        %1344 = vrot.lane.b32.xlu0 %v1329, 2
        %v1345 = vpop.permute.xlu0 %1344
        %1346 = vrot.lane.b32.xlu0 %v1331, 2
        %v1347 = vpop.permute.xlu0 %1346
        %1348 = vrot.lane.b32.xlu0 %v1333, 2
        %v1349 = vpop.permute.xlu0 %1348
        %v1350 = vsel %vm709, %v1335, %v1343
        %v1351 = vsel %vm709, %v1337, %v1345
        %v1352 = vsel %vm709, %v1339, %v1347
        %v1353 = vsel %vm709, %v1341, %v1349
        %v1354 = vsel %vm709, %v1343, %v1335
        %v1355 = vsel %vm709, %v1345, %v1337
        %v1356 = vsel %vm709, %v1347, %v1339
        %v1357 = vsel %vm709, %v1349, %v1341
        %v1358 = vmul.f32 %v1354, %v501
        %v1359 = vmul.f32 %v1350, %v502
        %v1360 = vmul.f32 %v1355, %v501
        %v1361 = vmul.f32 %v1351, %v502
        %v1362 = vmul.f32 %v1356, %v501
        %v1363 = vmul.f32 %v1352, %v502
        %v1364 = vmul.f32 %v1357, %v501
        %v1365 = vmul.f32 %v1353, %v502
        %1366 = vst [vmem:[#allocation4] sm:$0xff] %v1358
        %1367 = vst [vmem:[#allocation4 + $0x8] sm:$0xff] %v1359
        %1368 = vst [vmem:[#allocation4 + $0x10] sm:$0xff] %v1360
        %1369 = vst [vmem:[#allocation4 + $0x18] sm:$0xff] %v1361
        %1370 = vst [vmem:[#allocation4 + $0x20] sm:$0xff] %v1362
        %1371 = vst [vmem:[#allocation4 + $0x28] sm:$0xff] %v1363
        %1372 = vst [vmem:[#allocation4 + $0x30] sm:$0xff] %v1364
        %1373 = vst [vmem:[#allocation4 + $0x38] sm:$0xff] %v1365
        %1374 = vrot.lane.b32.xlu0 %v1326, 1
        %v1375 = vpop.permute.xlu0 %1374
        %1376 = vrot.lane.b32.xlu0 %v1328, 1
        %v1377 = vpop.permute.xlu0 %1376
        %1378 = vrot.lane.b32.xlu0 %v1330, 1
        %v1379 = vpop.permute.xlu0 %1378
        %1380 = vrot.lane.b32.xlu0 %v1332, 1
        %v1381 = vpop.permute.xlu0 %1380
        %1382 = vrot.lane.b32.xlu0 %v1327, 1
        %v1383 = vpop.permute.xlu0 %1382
        %1384 = vrot.lane.b32.xlu0 %v1329, 1
        %v1385 = vpop.permute.xlu0 %1384
        %1386 = vrot.lane.b32.xlu0 %v1331, 1
        %v1387 = vpop.permute.xlu0 %1386
        %1388 = vrot.lane.b32.xlu0 %v1333, 1
        %v1389 = vpop.permute.xlu0 %1388
        %v1390 = vsel %vm750, %v1375, %v1383
        %v1391 = vsel %vm750, %v1377, %v1385
        %v1392 = vsel %vm750, %v1379, %v1387
        %v1393 = vsel %vm750, %v1381, %v1389
        %v1394 = vsel %vm750, %v1383, %v1375
        %v1395 = vsel %vm750, %v1385, %v1377
        %v1396 = vsel %vm750, %v1387, %v1379
        %v1397 = vsel %vm750, %v1389, %v1381
        %v1398 = vmul.f32 %v1394, %v513
        %v1399 = vmul.f32 %v1390, %v514
        %v1400 = vmul.f32 %v1395, %v513
        %v1401 = vmul.f32 %v1391, %v514
        %v1402 = vmul.f32 %v1396, %v513
        %v1403 = vmul.f32 %v1392, %v514
        %v1404 = vmul.f32 %v1397, %v513
        %v1405 = vmul.f32 %v1393, %v514
        %1406 = vst [vmem:[#allocation4 + $0x40] sm:$0xff] %v1398
        %1407 = vst [vmem:[#allocation4 + $0x48] sm:$0xff] %v1399
        %1408 = vst [vmem:[#allocation4 + $0x50] sm:$0xff] %v1400
        %1409 = vst [vmem:[#allocation4 + $0x58] sm:$0xff] %v1401
        %1410 = vst [vmem:[#allocation4 + $0x60] sm:$0xff] %v1402
        %1411 = vst [vmem:[#allocation4 + $0x68] sm:$0xff] %v1403
        %1412 = vst [vmem:[#allocation4 + $0x70] sm:$0xff] %v1404
        %1413 = vst [vmem:[#allocation4 + $0x78] sm:$0xff] %v1405
        %1414 = vst [vmem:[#allocation4 + $0x80] sm:$0xff] %v1326
        %1415 = vst [vmem:[#allocation4 + $0x88] sm:$0xff] %v1327
        %1416 = vst [vmem:[#allocation4 + $0x90] sm:$0xff] %v1328
        %1417 = vst [vmem:[#allocation4 + $0x98] sm:$0xff] %v1329
        %1418 = vst [vmem:[#allocation4 + $0xa0] sm:$0xff] %v1330
        %1419 = vst [vmem:[#allocation4 + $0xa8] sm:$0xff] %v1331
        %1420 = vst [vmem:[#allocation4 + $0xb0] sm:$0xff] %v1332
        %1421 = vst [vmem:[#allocation4 + $0xb8] sm:$0xff] %v1333
        %1422 = vrot.lane.b32.xlu0 %v1326, 127
        %v1423 = vpop.permute.xlu0 %1422
        %1424 = vrot.lane.b32.xlu0 %v1328, 127
        %v1425 = vpop.permute.xlu0 %1424
        %1426 = vrot.lane.b32.xlu0 %v1330, 127
        %v1427 = vpop.permute.xlu0 %1426
        %1428 = vrot.lane.b32.xlu0 %v1332, 127
        %v1429 = vpop.permute.xlu0 %1428
        %1430 = vrot.lane.b32.xlu0 %v1327, 127
        %v1431 = vpop.permute.xlu0 %1430
        %1432 = vrot.lane.b32.xlu0 %v1329, 127
        %v1433 = vpop.permute.xlu0 %1432
        %1434 = vrot.lane.b32.xlu0 %v1331, 127
        %v1435 = vpop.permute.xlu0 %1434
        %1436 = vrot.lane.b32.xlu0 %v1333, 127
        %v1437 = vpop.permute.xlu0 %1436
        %v1438 = vsel %vm799, %v1423, %v1431
        %v1439 = vsel %vm799, %v1425, %v1433
        %v1440 = vsel %vm799, %v1427, %v1435
        %v1441 = vsel %vm799, %v1429, %v1437
        %v1442 = vsel %vm799, %v1431, %v1423
        %v1443 = vsel %vm799, %v1433, %v1425
        %v1444 = vsel %vm799, %v1435, %v1427
        %v1445 = vsel %vm799, %v1437, %v1429
        %v1446 = vmul.f32 %v1438, %v525
        %v1447 = vmul.f32 %v1442, %v526
        %v1448 = vmul.f32 %v1439, %v525
        %v1449 = vmul.f32 %v1443, %v526
        %v1450 = vmul.f32 %v1440, %v525
        %v1451 = vmul.f32 %v1444, %v526
        %v1452 = vmul.f32 %v1441, %v525
        %v1453 = vmul.f32 %v1445, %v526
        %1454 = vst [vmem:[#allocation4 + $0xc0] sm:$0xff] %v1446
        %1455 = vst [vmem:[#allocation4 + $0xc8] sm:$0xff] %v1447
        %1456 = vst [vmem:[#allocation4 + $0xd0] sm:$0xff] %v1448
        %1457 = vst [vmem:[#allocation4 + $0xd8] sm:$0xff] %v1449
        %1458 = vst [vmem:[#allocation4 + $0xe0] sm:$0xff] %v1450
        %1459 = vst [vmem:[#allocation4 + $0xe8] sm:$0xff] %v1451
        %1460 = vst [vmem:[#allocation4 + $0xf0] sm:$0xff] %v1452
        %1461 = vst [vmem:[#allocation4 + $0xf8] sm:$0xff] %v1453
        %1462 = vrot.lane.b32.xlu0 %v1326, 126
        %v1463 = vpop.permute.xlu0 %1462
        %1464 = vrot.lane.b32.xlu0 %v1328, 126
        %v1465 = vpop.permute.xlu0 %1464
        %1466 = vrot.lane.b32.xlu0 %v1330, 126
        %v1467 = vpop.permute.xlu0 %1466
        %1468 = vrot.lane.b32.xlu0 %v1332, 126
        %v1469 = vpop.permute.xlu0 %1468
        %1470 = vrot.lane.b32.xlu0 %v1327, 126
        %v1471 = vpop.permute.xlu0 %1470
        %1472 = vrot.lane.b32.xlu0 %v1329, 126
        %v1473 = vpop.permute.xlu0 %1472
        %1474 = vrot.lane.b32.xlu0 %v1331, 126
        %v1475 = vpop.permute.xlu0 %1474
        %1476 = vrot.lane.b32.xlu0 %v1333, 126
        %v1477 = vpop.permute.xlu0 %1476
        %v1478 = vsel %vm840, %v1463, %v1471
        %v1479 = vsel %vm840, %v1465, %v1473
        %v1480 = vsel %vm840, %v1467, %v1475
        %v1481 = vsel %vm840, %v1469, %v1477
        %v1482 = vsel %vm840, %v1471, %v1463
        %v1483 = vsel %vm840, %v1473, %v1465
        %v1484 = vsel %vm840, %v1475, %v1467
        %v1485 = vsel %vm840, %v1477, %v1469
        %v1486 = vmul.f32 %v1478, %v537
        %v1487 = vmul.f32 %v1482, %v538
        %v1488 = vmul.f32 %v1479, %v537
        %v1489 = vmul.f32 %v1483, %v538
        %v1490 = vmul.f32 %v1480, %v537
        %v1491 = vmul.f32 %v1484, %v538
        %v1492 = vmul.f32 %v1481, %v537
        %v1493 = vmul.f32 %v1485, %v538
        %1494 = vst [vmem:[#allocation4 + $0x100] sm:$0xff] %v1486
        %1495 = vst [vmem:[#allocation4 + $0x108] sm:$0xff] %v1487
        %1496 = vst [vmem:[#allocation4 + $0x110] sm:$0xff] %v1488
        %1497 = vst [vmem:[#allocation4 + $0x118] sm:$0xff] %v1489
        %1498 = vst [vmem:[#allocation4 + $0x120] sm:$0xff] %v1490
        %1499 = vst [vmem:[#allocation4 + $0x128] sm:$0xff] %v1491
        %1500 = vst [vmem:[#allocation4 + $0x130] sm:$0xff] %v1492
        %1501 = vst [vmem:[#allocation4 + $0x138] sm:$0xff] %v1493
        %s1502 = scalar_lea.vmem %s416, 128
        %v1503 = vld [vmem:[%s1502] sm:$0xff]
        %v1504 = vld [vmem:[%s1502 + $0x8] sm:$0xff]
        %v1505 = vld [vmem:[%s1502 + $0x10] sm:$0xff]
        %v1506 = vld [vmem:[%s1502 + $0x18] sm:$0xff]
        %v1507 = vld [vmem:[%s1502 + $0x20] sm:$0xff]
        %v1508 = vld [vmem:[%s1502 + $0x28] sm:$0xff]
        %v1509 = vld [vmem:[%s1502 + $0x30] sm:$0xff]
        %v1510 = vld [vmem:[%s1502 + $0x38] sm:$0xff]
        %v1511 = vld [vmem:[%s1502 + $0x40] sm:$0xff]
        %v1512 = vld [vmem:[%s1502 + $0x48] sm:$0xff]
        %v1513 = vld [vmem:[%s1502 + $0x50] sm:$0xff]
        %v1514 = vld [vmem:[%s1502 + $0x58] sm:$0xff]
        %v1515 = vld [vmem:[%s1502 + $0x60] sm:$0xff]
        %v1516 = vld [vmem:[%s1502 + $0x68] sm:$0xff]
        %v1517 = vld [vmem:[%s1502 + $0x70] sm:$0xff]
        %v1518 = vld [vmem:[%s1502 + $0x78] sm:$0xff]
        %v1519 = vld [vmem:[#allocation4] sm:$0xff]
        %v1520 = vld [vmem:[#allocation4 + $0x8] sm:$0xff]
        %v1521 = vld [vmem:[#allocation4 + $0x10] sm:$0xff]
        %v1522 = vld [vmem:[#allocation4 + $0x18] sm:$0xff]
        %v1523 = vld [vmem:[#allocation4 + $0x20] sm:$0xff]
        %v1524 = vld [vmem:[#allocation4 + $0x28] sm:$0xff]
        %v1525 = vld [vmem:[#allocation4 + $0x30] sm:$0xff]
        %v1526 = vld [vmem:[#allocation4 + $0x38] sm:$0xff]
        %v1527 = vld [vmem:[#allocation4 + $0x40] sm:$0xff]
        %v1528 = vld [vmem:[#allocation4 + $0x48] sm:$0xff]
        %v1529 = vld [vmem:[#allocation4 + $0x50] sm:$0xff]
        %v1530 = vld [vmem:[#allocation4 + $0x58] sm:$0xff]
        %v1531 = vld [vmem:[#allocation4 + $0x60] sm:$0xff]
        %v1532 = vld [vmem:[#allocation4 + $0x68] sm:$0xff]
        %v1533 = vld [vmem:[#allocation4 + $0x70] sm:$0xff]
        %v1534 = vld [vmem:[#allocation4 + $0x78] sm:$0xff]
        %v1535 = vld [vmem:[#allocation4 + $0x80] sm:$0xff]
        %v1536 = vld [vmem:[#allocation4 + $0x88] sm:$0xff]
        %v1537 = vld [vmem:[#allocation4 + $0x90] sm:$0xff]
        %v1538 = vld [vmem:[#allocation4 + $0x98] sm:$0xff]
        %v1539 = vld [vmem:[#allocation4 + $0xa0] sm:$0xff]
        %v1540 = vld [vmem:[#allocation4 + $0xa8] sm:$0xff]
        %v1541 = vld [vmem:[#allocation4 + $0xb0] sm:$0xff]
        %v1542 = vld [vmem:[#allocation4 + $0xb8] sm:$0xff]
        %v1543 = vld [vmem:[#allocation4 + $0xc0] sm:$0xff]
        %v1544 = vld [vmem:[#allocation4 + $0xc8] sm:$0xff]
        %v1545 = vld [vmem:[#allocation4 + $0xd0] sm:$0xff]
        %v1546 = vld [vmem:[#allocation4 + $0xd8] sm:$0xff]
        %v1547 = vld [vmem:[#allocation4 + $0xe0] sm:$0xff]
        %v1548 = vld [vmem:[#allocation4 + $0xe8] sm:$0xff]
        %v1549 = vld [vmem:[#allocation4 + $0xf0] sm:$0xff]
        %v1550 = vld [vmem:[#allocation4 + $0xf8] sm:$0xff]
        %v1551 = vld [vmem:[#allocation4 + $0x100] sm:$0xff]
        %v1552 = vld [vmem:[#allocation4 + $0x108] sm:$0xff]
        %v1553 = vld [vmem:[#allocation4 + $0x110] sm:$0xff]
        %v1554 = vld [vmem:[#allocation4 + $0x118] sm:$0xff]
        %v1555 = vld [vmem:[#allocation4 + $0x120] sm:$0xff]
        %v1556 = vld [vmem:[#allocation4 + $0x128] sm:$0xff]
        %v1557 = vld [vmem:[#allocation4 + $0x130] sm:$0xff]
        %v1558 = vld [vmem:[#allocation4 + $0x138] sm:$0xff]
        %s1559 = scalar_lea.vmem %s421, 64
        %v1560 = vld [vmem:[%s1559] sm:$0xff]
        %v1561 = vld [vmem:[%s1559 + $0x8] sm:$0xff]
        %v1562 = vld [vmem:[%s1559 + $0x10] sm:$0xff]
        %v1563 = vld [vmem:[%s1559 + $0x18] sm:$0xff]
        %v1564 = vld [vmem:[%s1559 + $0x20] sm:$0xff]
        %v1565 = vld [vmem:[%s1559 + $0x28] sm:$0xff]
        %v1566 = vld [vmem:[%s1559 + $0x30] sm:$0xff]
        %v1567 = vld [vmem:[%s1559 + $0x38] sm:$0xff]
        %1569 = vset.pattern.permute.xlu0 0
        %1570 = vperm.xlu0 %1569, %v1560
        %v1571 = vpop.permute.xlu0 %1570
        %1574 = vset.pattern.permute.xlu0 0
        %1575 = vperm.xlu0 %1574, %v1561
        %v1576 = vpop.permute.xlu0 %1575
        %1579 = vset.pattern.permute.xlu0 0
        %1580 = vperm.xlu0 %1579, %v1562
        %v1581 = vpop.permute.xlu0 %1580
        %1584 = vset.pattern.permute.xlu0 0
        %1585 = vperm.xlu0 %1584, %v1563
        %v1586 = vpop.permute.xlu0 %1585
        %1589 = vset.pattern.permute.xlu0 0
        %1590 = vperm.xlu0 %1589, %v1564
        %v1591 = vpop.permute.xlu0 %1590
        %1594 = vset.pattern.permute.xlu0 0
        %1595 = vperm.xlu0 %1594, %v1565
        %v1596 = vpop.permute.xlu0 %1595
        %1599 = vset.pattern.permute.xlu0 0
        %1600 = vperm.xlu0 %1599, %v1566
        %v1601 = vpop.permute.xlu0 %1600
        %1604 = vset.pattern.permute.xlu0 0
        %1605 = vperm.xlu0 %1604, %v1567
        %v1606 = vpop.permute.xlu0 %1605
        %v1609 = vsel %vm969, %v1504, 0
        %v1612 = vsel %vm969, %v1506, 0
        %v1615 = vsel %vm969, %v1508, 0
        %v1618 = vsel %vm969, %v1510, 0
        %v1621 = vsel %vm969, %v1512, 0
        %v1624 = vsel %vm969, %v1514, 0
        %v1627 = vsel %vm969, %v1516, 0
        %v1630 = vsel %vm969, %v1518, 0
        %1632 = vmatprep.subr.mxu0 %v1520
        %1633 = vmatpush1.msra.mxu0 %v1519
        %1634 = vmatprep.subr.mxu0 %v1522
        %1635 = vmatpush1.msra.mxu0 %v1521
        %1636 = vmatprep.subr.mxu0 %v1524
        %1637 = vmatpush1.msra.mxu0 %v1523
        %1638 = vmatprep.subr.mxu0 %v1526
        %1639 = vmatpush1.msra.mxu0 %v1525
        %1640 = vmatprep.subr.mxu0 %v1528
        %1641 = vmatpush1.msra.mxu0 %v1527
        %1642 = vmatprep.subr.mxu0 %v1530
        %1643 = vmatpush1.msra.mxu0 %v1529
        %1644 = vmatprep.subr.mxu0 %v1532
        %1645 = vmatpush1.msra.mxu0 %v1531
        %1646 = vmatprep.subr.mxu0 %v1534
        %1647 = vmatpush1.msra.mxu0 %v1533
        %1648 = vmatprep.subr.mxu0 %v1536
        %1649 = vmatpush1.msra.mxu0 %v1535
        %1650 = vmatprep.subr.mxu0 %v1538
        %1651 = vmatpush1.msra.mxu0 %v1537
        %1652 = vmatprep.subr.mxu0 %v1540
        %1653 = vmatpush1.msra.mxu0 %v1539
        %1654 = vmatprep.subr.mxu0 %v1542
        %1655 = vmatpush1.msra.mxu0 %v1541
        %1656 = vmatprep.subr.mxu0 %v1544
        %1657 = vmatpush1.msra.mxu0 %v1543
        %1658 = vmatprep.subr.mxu0 %v1546
        %1659 = vmatpush1.msra.mxu0 %v1545
        %1660 = vmatprep.subr.mxu0 %v1548
        %1661 = vmatpush1.msra.mxu0 %v1547
        %1662 = vmatprep.subr.mxu0 %v1550
        %1663 = vmatpush1.msra.mxu0 %v1549
        %1664 = vmatprep.subr.mxu0 %v1552
        %1665 = vmatpush1.msra.mxu0 %v1551
        %1666 = vmatprep.subr.mxu0 %v1554
        %1667 = vmatpush1.msra.mxu0 %v1553
        %1668 = vmatprep.subr.mxu0 %v1556
        %1669 = vmatpush1.msra.mxu0 %v1555
        %1670 = vmatprep.subr.mxu0 %v1558
        %1671 = vmatpush1.msra.mxu0 %v1557
        %1672 = vmatprep.subr.mxu0 0.0
        %1673 = vmatpush1.msra.mxu0 0.0
        %1674 = vmatprep.subr.mxu0 0.0
        %1675 = vmatpush1.msra.mxu0 0.0
        %1676 = vmatprep.subr.mxu0 0.0
        %1677 = vmatpush1.msra.mxu0 0.0
        %1678 = vmatprep.subr.mxu0 0.0
        %1679 = vmatpush1.msra.mxu0 0.0
        %1680 = vmatprep.subr.mxu0 0.0
        %1681 = vmatpush1.msra.mxu0 0.0
        %1682 = vmatprep.subr.mxu0 0.0
        %1683 = vmatpush1.msra.mxu0 0.0
        %1684 = vmatprep.subr.mxu0 0.0
        %1685 = vmatpush1.msra.mxu0 0.0
        %1686 = vmatprep.subr.mxu0 0.0
        %1687 = vmatpush1.msra.mxu0 0.0
        %1688 = vmatprep.subr.mxu0 0.0
        %1689 = vmatpush1.msra.mxu0 0.0
        %1690 = vmatprep.subr.mxu0 0.0
        %1691 = vmatpush1.msra.mxu0 0.0
        %1692 = vmatprep.subr.mxu0 0.0
        %1693 = vmatpush1.msra.mxu0 0.0
        %1694 = vmatprep.subr.mxu0 0.0
        %1695 = vmatpush1.msra.mxu0 0.0
        %1696 = vmatprep.mubr.f32.mxu0 %v1609
        %1697 = vmatmul.mubr.f32.gmra.mrb[0].mxu0 %v1503
        %v1698 = vpop.f32.mrb[0].mxu0
        %v1699 = vadd.f32 %v1571, %v1698
        %v1700 = vpop.f32.mrb[0].mxu0
        %v1701 = vadd.f32 %v1571, %v1700
        %1702 = vmatprep.mubr.f32.mxu0 %v1612
        %1703 = vmatmul.mubr.f32.gmra.mrb[0].mxu0 %v1505
        %v1704 = vpop.f32.mrb[0].mxu0
        %v1705 = vadd.f32 %v1576, %v1704
        %v1706 = vpop.f32.mrb[0].mxu0
        %v1707 = vadd.f32 %v1576, %v1706
        %1708 = vmatprep.mubr.f32.mxu0 %v1615
        %1709 = vmatmul.mubr.f32.gmra.mrb[0].mxu0 %v1507
        %v1710 = vpop.f32.mrb[0].mxu0
        %v1711 = vadd.f32 %v1581, %v1710
        %v1712 = vpop.f32.mrb[0].mxu0
        %v1713 = vadd.f32 %v1581, %v1712
        %1714 = vmatprep.mubr.f32.mxu0 %v1618
        %1715 = vmatmul.mubr.f32.gmra.mrb[0].mxu0 %v1509
        %v1716 = vpop.f32.mrb[0].mxu0
        %v1717 = vadd.f32 %v1586, %v1716
        %v1718 = vpop.f32.mrb[0].mxu0
        %v1719 = vadd.f32 %v1586, %v1718
        %1720 = vmatprep.mubr.f32.mxu0 %v1621
        %1721 = vmatmul.mubr.f32.gmra.mrb[0].mxu0 %v1511
        %v1722 = vpop.f32.mrb[0].mxu0
        %v1723 = vadd.f32 %v1591, %v1722
        %v1724 = vpop.f32.mrb[0].mxu0
        %v1725 = vadd.f32 %v1591, %v1724
        %1726 = vmatprep.mubr.f32.mxu0 %v1624
        %1727 = vmatmul.mubr.f32.gmra.mrb[0].mxu0 %v1513
        %v1728 = vpop.f32.mrb[0].mxu0
        %v1729 = vadd.f32 %v1596, %v1728
        %v1730 = vpop.f32.mrb[0].mxu0
        %v1731 = vadd.f32 %v1596, %v1730
        %1732 = vmatprep.mubr.f32.mxu0 %v1627
        %1733 = vmatmul.mubr.f32.gmra.mrb[0].mxu0 %v1515
        %v1734 = vpop.f32.mrb[0].mxu0
        %v1735 = vadd.f32 %v1601, %v1734
        %v1736 = vpop.f32.mrb[0].mxu0
        %v1737 = vadd.f32 %v1601, %v1736
        %1738 = vmatprep.mubr.f32.mxu0 %v1630
        %1739 = vmatmul.mubr.f32.gmra.mrb[0].mxu0 %v1517
        %v1740 = vpop.f32.mrb[0].mxu0
        %v1741 = vadd.f32 %v1606, %v1740
        %v1742 = vpop.f32.mrb[0].mxu0
        %v1743 = vadd.f32 %v1606, %v1742
        %1744 = vdwg.mxu0
        %v1745 = vtanh.pop %v1699
        %v1746 = vtanh.pop %v1701
        %v1747 = vtanh.pop %v1705
        %v1748 = vtanh.pop %v1707
        %v1749 = vtanh.pop %v1711
        %v1750 = vtanh.pop %v1713
        %v1751 = vtanh.pop %v1717
        %v1752 = vtanh.pop %v1719
        %v1753 = vxor.u32 %v1723, 2147483648
        %v1754 = vxor.u32 %v1725, 2147483648
        %v1755 = vxor.u32 %v1729, 2147483648
        %v1756 = vxor.u32 %v1731, 2147483648
        %v1757 = vxor.u32 %v1735, 2147483648
        %v1758 = vxor.u32 %v1737, 2147483648
        %v1759 = vxor.u32 %v1741, 2147483648
        %v1760 = vxor.u32 %v1743, 2147483648
        %v1761 = vmul.f32 %v1753, 1.442695
        %v1762 = vpow.pop %v1761
        %v1763 = vmul.f32 %v1754, 1.442695
        %v1764 = vpow.pop %v1763
        %v1765 = vmul.f32 %v1755, 1.442695
        %v1766 = vpow.pop %v1765
        %v1767 = vmul.f32 %v1756, 1.442695
        %v1768 = vpow.pop %v1767
        %v1769 = vmul.f32 %v1757, 1.442695
        %v1770 = vpow.pop %v1769
        %v1771 = vmul.f32 %v1758, 1.442695
        %v1772 = vpow.pop %v1771
        %v1773 = vmul.f32 %v1759, 1.442695
        %v1774 = vpow.pop %v1773
        %v1775 = vmul.f32 %v1760, 1.442695
        %v1776 = vpow.pop %v1775
        %v1777 = vadd.f32 %v1762, 1.0
        %v1778 = vadd.f32 %v1764, 1.0
        %v1779 = vadd.f32 %v1766, 1.0
        %v1780 = vadd.f32 %v1768, 1.0
        %v1781 = vadd.f32 %v1770, 1.0
        %v1782 = vadd.f32 %v1772, 1.0
        %v1783 = vadd.f32 %v1774, 1.0
        %v1784 = vadd.f32 %v1776, 1.0
        %v1785 = vrcp.pop %v1777
        %v1786 = vmul.f32 1.0, %v1785
        %v1787 = vrcp.pop %v1778
        %v1788 = vmul.f32 1.0, %v1787
        %v1789 = vrcp.pop %v1779
        %v1790 = vmul.f32 1.0, %v1789
        %v1791 = vrcp.pop %v1780
        %v1792 = vmul.f32 1.0, %v1791
        %v1793 = vrcp.pop %v1781
        %v1794 = vmul.f32 1.0, %v1793
        %v1795 = vrcp.pop %v1782
        %v1796 = vmul.f32 1.0, %v1795
        %v1797 = vrcp.pop %v1783
        %v1798 = vmul.f32 1.0, %v1797
        %v1799 = vrcp.pop %v1784
        %v1800 = vmul.f32 1.0, %v1799
        %v1801 = vmul.f32 %v1745, %v1786
        %v1802 = vmul.f32 %v1746, %v1788
        %v1803 = vmul.f32 %v1747, %v1790
        %v1804 = vmul.f32 %v1748, %v1792
        %v1805 = vmul.f32 %v1749, %v1794
        %v1806 = vmul.f32 %v1750, %v1796
        %v1807 = vmul.f32 %v1751, %v1798
        %v1808 = vmul.f32 %v1752, %v1800
        %s1809 = scalar_lea.vmem %s426, 40
        %v1810 = vld [vmem:[%s1809] sm:$0xff]
        %v1811 = vld [vmem:[%s1809 + $0x8] sm:$0xff]
        %v1812 = vld [vmem:[%s1809 + $0x10] sm:$0xff]
        %v1813 = vld [vmem:[%s1809 + $0x18] sm:$0xff]
        %v1814 = vld [vmem:[%s1809 + $0x20] sm:$0x3]
        %v1816 = vsel %vm969, %v1810, 0
        %v1819 = vsel %vm969, %v1811, 0
        %v1822 = vsel %vm969, %v1812, 0
        %v1825 = vsel %vm969, %v1813, 0
        %v1828 = vsel %vm969, %v1814, 0
        %1830 = vmatprep.subr.mxu0 %v1802
        %1831 = vmatpush1.msra.mxu0 %v1801
        %1832 = vmatprep.subr.mxu0 %v1804
        %1833 = vmatpush1.msra.mxu0 %v1803
        %1834 = vmatprep.subr.mxu0 %v1806
        %1835 = vmatpush1.msra.mxu0 %v1805
        %1836 = vmatprep.subr.mxu0 %v1808
        %1837 = vmatpush1.msra.mxu0 %v1807
        %1838 = vmatprep.subr.mxu0 0.0
        %1839 = vmatpush1.msra.mxu0 0.0
        %1840 = vmatprep.subr.mxu0 0.0
        %1841 = vmatpush1.msra.mxu0 0.0
        %1842 = vmatprep.subr.mxu0 0.0
        %1843 = vmatpush1.msra.mxu0 0.0
        %1844 = vmatprep.subr.mxu0 0.0
        %1845 = vmatpush1.msra.mxu0 0.0
        %1846 = vmatprep.subr.mxu0 0.0
        %1847 = vmatpush1.msra.mxu0 0.0
        %1848 = vmatprep.subr.mxu0 0.0
        %1849 = vmatpush1.msra.mxu0 0.0
        %1850 = vmatprep.subr.mxu0 0.0
        %1851 = vmatpush1.msra.mxu0 0.0
        %1852 = vmatprep.subr.mxu0 0.0
        %1853 = vmatpush1.msra.mxu0 0.0
        %1854 = vmatprep.subr.mxu0 0.0
        %1855 = vmatpush1.msra.mxu0 0.0
        %1856 = vmatprep.subr.mxu0 0.0
        %1857 = vmatpush1.msra.mxu0 0.0
        %1858 = vmatprep.subr.mxu0 0.0
        %1859 = vmatpush1.msra.mxu0 0.0
        %1860 = vmatprep.subr.mxu0 0.0
        %1861 = vmatpush1.msra.mxu0 0.0
        %1862 = vmatprep.subr.mxu0 0.0
        %1863 = vmatpush1.msra.mxu0 0.0
        %1864 = vmatprep.subr.mxu0 0.0
        %1865 = vmatpush1.msra.mxu0 0.0
        %1866 = vmatprep.subr.mxu0 0.0
        %1867 = vmatpush1.msra.mxu0 0.0
        %1868 = vmatprep.subr.mxu0 0.0
        %1869 = vmatpush1.msra.mxu0 0.0
        %1870 = vmatprep.subr.mxu0 0.0
        %1871 = vmatpush1.msra.mxu0 0.0
        %1872 = vmatprep.subr.mxu0 0.0
        %1873 = vmatpush1.msra.mxu0 0.0
        %1874 = vmatprep.subr.mxu0 0.0
        %1875 = vmatpush1.msra.mxu0 0.0
        %1876 = vmatprep.subr.mxu0 0.0
        %1877 = vmatpush1.msra.mxu0 0.0
        %1878 = vmatprep.subr.mxu0 0.0
        %1879 = vmatpush1.msra.mxu0 0.0
        %1880 = vmatprep.subr.mxu0 0.0
        %1881 = vmatpush1.msra.mxu0 0.0
        %1882 = vmatprep.subr.mxu0 0.0
        %1883 = vmatpush1.msra.mxu0 0.0
        %1884 = vmatprep.subr.mxu0 0.0
        %1885 = vmatpush1.msra.mxu0 0.0
        %1886 = vmatprep.subr.mxu0 0.0
        %1887 = vmatpush1.msra.mxu0 0.0
        %1888 = vmatprep.subr.mxu0 0.0
        %1889 = vmatpush1.msra.mxu0 0.0
        %1890 = vmatprep.subr.mxu0 0.0
        %1891 = vmatpush1.msra.mxu0 0.0
        %1892 = vmatprep.subr.mxu0 0.0
        %1893 = vmatpush1.msra.mxu0 0.0
        %1894 = vmatprep.mubr.f32.mxu0 0.0
        %1895 = vmatmul.mubr.f32.gmra.mrb[0].mxu0 %v1816
        %v1896 = vpop.f32.mrb[0].mxu0
        %v1897 = vadd.f32 0.0, %v1896
        %v1898 = vpop.f32.mrb[0].mxu0
        %v1899 = vadd.f32 0.0, %v1898
        %1900 = vmatprep.mubr.f32.mxu0 0.0
        %1901 = vmatmul.mubr.f32.gmra.mrb[0].mxu0 %v1819
        %v1902 = vpop.f32.mrb[0].mxu0
        %v1903 = vadd.f32 0.0, %v1902
        %v1904 = vpop.f32.mrb[0].mxu0
        %v1905 = vadd.f32 0.0, %v1904
        %1906 = vmatprep.mubr.f32.mxu0 0.0
        %1907 = vmatmul.mubr.f32.gmra.mrb[0].mxu0 %v1822
        %v1908 = vpop.f32.mrb[0].mxu0
        %v1909 = vadd.f32 0.0, %v1908
        %v1910 = vpop.f32.mrb[0].mxu0
        %v1911 = vadd.f32 0.0, %v1910
        %1912 = vmatprep.mubr.f32.mxu0 0.0
        %1913 = vmatmul.mubr.f32.gmra.mrb[0].mxu0 %v1825
        %v1914 = vpop.f32.mrb[0].mxu0
        %v1915 = vadd.f32 0.0, %v1914
        %v1916 = vpop.f32.mrb[0].mxu0
        %v1917 = vadd.f32 0.0, %v1916
        %1918 = vmatprep.mubr.f32.mxu0 0.0
        %1919 = vmatmul.mubr.f32.gmra.mrb[0].mxu0 %v1828
        %v1920 = vpop.f32.mrb[0].mxu0
        %v1921 = vadd.f32 0.0, %v1920
        %v1922 = vpop.f32.mrb[0].mxu0
        %v1923 = vadd.f32 0.0, %v1922
        %1924 = vdwg.mxu0
        %v1925 = vadd.f32 %v1326, %v1897
        %v1926 = vadd.f32 %v1327, %v1899
        %v1927 = vadd.f32 %v1328, %v1903
        %v1928 = vadd.f32 %v1329, %v1905
        %v1929 = vadd.f32 %v1330, %v1909
        %v1930 = vadd.f32 %v1331, %v1911
        %v1931 = vadd.f32 %v1332, %v1915
        %v1932 = vadd.f32 %v1333, %v1917
        %s1933 = scalar_lea.vmem %s431, 32
        %v1934 = vld [vmem:[%s1933] sm:$0xff]
        %v1935 = vld [vmem:[%s1933 + $0x8] sm:$0xff]
        %v1936 = vld [vmem:[%s1933 + $0x10] sm:$0xff]
        %v1937 = vld [vmem:[%s1933 + $0x18] sm:$0xff]
        %1939 = vset.pattern.permute.xlu0 0
        %1940 = vperm.xlu0 %1939, %v1934
        %v1941 = vpop.permute.xlu0 %1940
        %1944 = vset.pattern.permute.xlu0 0
        %1945 = vperm.xlu0 %1944, %v1935
        %v1946 = vpop.permute.xlu0 %1945
        %1949 = vset.pattern.permute.xlu0 0
        %1950 = vperm.xlu0 %1949, %v1936
        %v1951 = vpop.permute.xlu0 %1950
        %1954 = vset.pattern.permute.xlu0 0
        %1955 = vperm.xlu0 %1954, %v1937
        %v1956 = vpop.permute.xlu0 %1955
        %v1958 = vadd.f32 %v1925, %v1941
        %v1959 = vadd.f32 %v1926, %v1941
        %v1960 = vadd.f32 %v1927, %v1946
        %v1961 = vadd.f32 %v1928, %v1946
        %v1962 = vadd.f32 %v1929, %v1951
        %v1963 = vadd.f32 %v1930, %v1951
        %v1964 = vadd.f32 %v1931, %v1956
        %v1965 = vadd.f32 %v1932, %v1956
        %v1966 = vmul.f32 %v1958, %v678
        %v1967 = vmul.f32 %v1959, %v682
        %v1968 = vmul.f32 %v1960, %v678
        %v1969 = vmul.f32 %v1961, %v682
        %v1970 = vmul.f32 %v1962, %v678
        %v1971 = vmul.f32 %v1963, %v682
        %v1972 = vmul.f32 %v1964, %v678
        %v1973 = vmul.f32 %v1965, %v682
        %v1974 = vadd.f32 %v1282, %v1921
        %v1975 = vadd.f32 %v1284, %v1923
        %1976 = vrot.lane.b32.xlu0 %v1966, 2
        %v1977 = vpop.permute.xlu0 %1976
        %1978 = vrot.lane.b32.xlu0 %v1968, 2
        %v1979 = vpop.permute.xlu0 %1978
        %1980 = vrot.lane.b32.xlu0 %v1970, 2
        %v1981 = vpop.permute.xlu0 %1980
        %1982 = vrot.lane.b32.xlu0 %v1972, 2
        %v1983 = vpop.permute.xlu0 %1982
        %1984 = vrot.lane.b32.xlu0 %v1967, 2
        %v1985 = vpop.permute.xlu0 %1984
        %1986 = vrot.lane.b32.xlu0 %v1969, 2
        %v1987 = vpop.permute.xlu0 %1986
        %1988 = vrot.lane.b32.xlu0 %v1971, 2
        %v1989 = vpop.permute.xlu0 %1988
        %1990 = vrot.lane.b32.xlu0 %v1973, 2
        %v1991 = vpop.permute.xlu0 %1990
        %v1992 = vsel %vm709, %v1977, %v1985
        %v1993 = vsel %vm709, %v1979, %v1987
        %v1994 = vsel %vm709, %v1981, %v1989
        %v1995 = vsel %vm709, %v1983, %v1991
        %v1996 = vsel %vm709, %v1985, %v1977
        %v1997 = vsel %vm709, %v1987, %v1979
        %v1998 = vsel %vm709, %v1989, %v1981
        %v1999 = vsel %vm709, %v1991, %v1983
        %v2000 = vmul.f32 %v1996, %v501
        %v2001 = vmul.f32 %v1992, %v502
        %v2002 = vmul.f32 %v1997, %v501
        %v2003 = vmul.f32 %v1993, %v502
        %v2004 = vmul.f32 %v1998, %v501
        %v2005 = vmul.f32 %v1994, %v502
        %v2006 = vmul.f32 %v1999, %v501
        %v2007 = vmul.f32 %v1995, %v502
        %2008 = vst [vmem:[#allocation4] sm:$0xff] %v2000
        %2009 = vst [vmem:[#allocation4 + $0x8] sm:$0xff] %v2001
        %2010 = vst [vmem:[#allocation4 + $0x10] sm:$0xff] %v2002
        %2011 = vst [vmem:[#allocation4 + $0x18] sm:$0xff] %v2003
        %2012 = vst [vmem:[#allocation4 + $0x20] sm:$0xff] %v2004
        %2013 = vst [vmem:[#allocation4 + $0x28] sm:$0xff] %v2005
        %2014 = vst [vmem:[#allocation4 + $0x30] sm:$0xff] %v2006
        %2015 = vst [vmem:[#allocation4 + $0x38] sm:$0xff] %v2007
        %2016 = vrot.lane.b32.xlu0 %v1966, 1
        %v2017 = vpop.permute.xlu0 %2016
        %2018 = vrot.lane.b32.xlu0 %v1968, 1
        %v2019 = vpop.permute.xlu0 %2018
        %2020 = vrot.lane.b32.xlu0 %v1970, 1
        %v2021 = vpop.permute.xlu0 %2020
        %2022 = vrot.lane.b32.xlu0 %v1972, 1
        %v2023 = vpop.permute.xlu0 %2022
        %2024 = vrot.lane.b32.xlu0 %v1967, 1
        %v2025 = vpop.permute.xlu0 %2024
        %2026 = vrot.lane.b32.xlu0 %v1969, 1
        %v2027 = vpop.permute.xlu0 %2026
        %2028 = vrot.lane.b32.xlu0 %v1971, 1
        %v2029 = vpop.permute.xlu0 %2028
        %2030 = vrot.lane.b32.xlu0 %v1973, 1
        %v2031 = vpop.permute.xlu0 %2030
        %v2032 = vsel %vm750, %v2017, %v2025
        %v2033 = vsel %vm750, %v2019, %v2027
        %v2034 = vsel %vm750, %v2021, %v2029
        %v2035 = vsel %vm750, %v2023, %v2031
        %v2036 = vsel %vm750, %v2025, %v2017
        %v2037 = vsel %vm750, %v2027, %v2019
        %v2038 = vsel %vm750, %v2029, %v2021
        %v2039 = vsel %vm750, %v2031, %v2023
        %v2040 = vmul.f32 %v2036, %v513
        %v2041 = vmul.f32 %v2032, %v514
        %v2042 = vmul.f32 %v2037, %v513
        %v2043 = vmul.f32 %v2033, %v514
        %v2044 = vmul.f32 %v2038, %v513
        %v2045 = vmul.f32 %v2034, %v514
        %v2046 = vmul.f32 %v2039, %v513
        %v2047 = vmul.f32 %v2035, %v514
        %2048 = vst [vmem:[#allocation4 + $0x40] sm:$0xff] %v2040
        %2049 = vst [vmem:[#allocation4 + $0x48] sm:$0xff] %v2041
        %2050 = vst [vmem:[#allocation4 + $0x50] sm:$0xff] %v2042
        %2051 = vst [vmem:[#allocation4 + $0x58] sm:$0xff] %v2043
        %2052 = vst [vmem:[#allocation4 + $0x60] sm:$0xff] %v2044
        %2053 = vst [vmem:[#allocation4 + $0x68] sm:$0xff] %v2045
        %2054 = vst [vmem:[#allocation4 + $0x70] sm:$0xff] %v2046
        %2055 = vst [vmem:[#allocation4 + $0x78] sm:$0xff] %v2047
        %2056 = vst [vmem:[#allocation4 + $0x80] sm:$0xff] %v1966
        %2057 = vst [vmem:[#allocation4 + $0x88] sm:$0xff] %v1967
        %2058 = vst [vmem:[#allocation4 + $0x90] sm:$0xff] %v1968
        %2059 = vst [vmem:[#allocation4 + $0x98] sm:$0xff] %v1969
        %2060 = vst [vmem:[#allocation4 + $0xa0] sm:$0xff] %v1970
        %2061 = vst [vmem:[#allocation4 + $0xa8] sm:$0xff] %v1971
        %2062 = vst [vmem:[#allocation4 + $0xb0] sm:$0xff] %v1972
        %2063 = vst [vmem:[#allocation4 + $0xb8] sm:$0xff] %v1973
        %2064 = vrot.lane.b32.xlu0 %v1966, 127
        %v2065 = vpop.permute.xlu0 %2064
        %2066 = vrot.lane.b32.xlu0 %v1968, 127
        %v2067 = vpop.permute.xlu0 %2066
        %2068 = vrot.lane.b32.xlu0 %v1970, 127
        %v2069 = vpop.permute.xlu0 %2068
        %2070 = vrot.lane.b32.xlu0 %v1972, 127
        %v2071 = vpop.permute.xlu0 %2070
        %2072 = vrot.lane.b32.xlu0 %v1967, 127
        %v2073 = vpop.permute.xlu0 %2072
        %2074 = vrot.lane.b32.xlu0 %v1969, 127
        %v2075 = vpop.permute.xlu0 %2074
        %2076 = vrot.lane.b32.xlu0 %v1971, 127
        %v2077 = vpop.permute.xlu0 %2076
        %2078 = vrot.lane.b32.xlu0 %v1973, 127
        %v2079 = vpop.permute.xlu0 %2078
        %v2080 = vsel %vm799, %v2065, %v2073
        %v2081 = vsel %vm799, %v2067, %v2075
        %v2082 = vsel %vm799, %v2069, %v2077
        %v2083 = vsel %vm799, %v2071, %v2079
        %v2084 = vsel %vm799, %v2073, %v2065
        %v2085 = vsel %vm799, %v2075, %v2067
        %v2086 = vsel %vm799, %v2077, %v2069
        %v2087 = vsel %vm799, %v2079, %v2071
        %v2088 = vmul.f32 %v2080, %v525
        %v2089 = vmul.f32 %v2084, %v526
        %v2090 = vmul.f32 %v2081, %v525
        %v2091 = vmul.f32 %v2085, %v526
        %v2092 = vmul.f32 %v2082, %v525
        %v2093 = vmul.f32 %v2086, %v526
        %v2094 = vmul.f32 %v2083, %v525
        %v2095 = vmul.f32 %v2087, %v526
        %2096 = vst [vmem:[#allocation4 + $0xc0] sm:$0xff] %v2088
        %2097 = vst [vmem:[#allocation4 + $0xc8] sm:$0xff] %v2089
        %2098 = vst [vmem:[#allocation4 + $0xd0] sm:$0xff] %v2090
        %2099 = vst [vmem:[#allocation4 + $0xd8] sm:$0xff] %v2091
        %2100 = vst [vmem:[#allocation4 + $0xe0] sm:$0xff] %v2092
        %2101 = vst [vmem:[#allocation4 + $0xe8] sm:$0xff] %v2093
        %2102 = vst [vmem:[#allocation4 + $0xf0] sm:$0xff] %v2094
        %2103 = vst [vmem:[#allocation4 + $0xf8] sm:$0xff] %v2095
        %2104 = vrot.lane.b32.xlu0 %v1966, 126
        %v2105 = vpop.permute.xlu0 %2104
        %2106 = vrot.lane.b32.xlu0 %v1968, 126
        %v2107 = vpop.permute.xlu0 %2106
        %2108 = vrot.lane.b32.xlu0 %v1970, 126
        %v2109 = vpop.permute.xlu0 %2108
        %2110 = vrot.lane.b32.xlu0 %v1972, 126
        %v2111 = vpop.permute.xlu0 %2110
        %2112 = vrot.lane.b32.xlu0 %v1967, 126
        %v2113 = vpop.permute.xlu0 %2112
        %2114 = vrot.lane.b32.xlu0 %v1969, 126
        %v2115 = vpop.permute.xlu0 %2114
        %2116 = vrot.lane.b32.xlu0 %v1971, 126
        %v2117 = vpop.permute.xlu0 %2116
        %2118 = vrot.lane.b32.xlu0 %v1973, 126
        %v2119 = vpop.permute.xlu0 %2118
        %v2120 = vsel %vm840, %v2105, %v2113
        %v2121 = vsel %vm840, %v2107, %v2115
        %v2122 = vsel %vm840, %v2109, %v2117
        %v2123 = vsel %vm840, %v2111, %v2119
        %v2124 = vsel %vm840, %v2113, %v2105
        %v2125 = vsel %vm840, %v2115, %v2107
        %v2126 = vsel %vm840, %v2117, %v2109
        %v2127 = vsel %vm840, %v2119, %v2111
        %v2128 = vmul.f32 %v2120, %v537
        %v2129 = vmul.f32 %v2124, %v538
        %v2130 = vmul.f32 %v2121, %v537
        %v2131 = vmul.f32 %v2125, %v538
        %v2132 = vmul.f32 %v2122, %v537
        %v2133 = vmul.f32 %v2126, %v538
        %v2134 = vmul.f32 %v2123, %v537
        %v2135 = vmul.f32 %v2127, %v538
        %2136 = vst [vmem:[#allocation4 + $0x100] sm:$0xff] %v2128
        %2137 = vst [vmem:[#allocation4 + $0x108] sm:$0xff] %v2129
        %2138 = vst [vmem:[#allocation4 + $0x110] sm:$0xff] %v2130
        %2139 = vst [vmem:[#allocation4 + $0x118] sm:$0xff] %v2131
        %2140 = vst [vmem:[#allocation4 + $0x120] sm:$0xff] %v2132
        %2141 = vst [vmem:[#allocation4 + $0x128] sm:$0xff] %v2133
        %2142 = vst [vmem:[#allocation4 + $0x130] sm:$0xff] %v2134
        %2143 = vst [vmem:[#allocation4 + $0x138] sm:$0xff] %v2135
        %s2144 = scalar_lea.vmem %s416, 256
        %v2145 = vld [vmem:[%s2144] sm:$0xff]
        %v2146 = vld [vmem:[%s2144 + $0x8] sm:$0xff]
        %v2147 = vld [vmem:[%s2144 + $0x10] sm:$0xff]
        %v2148 = vld [vmem:[%s2144 + $0x18] sm:$0xff]
        %v2149 = vld [vmem:[%s2144 + $0x20] sm:$0xff]
        %v2150 = vld [vmem:[%s2144 + $0x28] sm:$0xff]
        %v2151 = vld [vmem:[%s2144 + $0x30] sm:$0xff]
        %v2152 = vld [vmem:[%s2144 + $0x38] sm:$0xff]
        %v2153 = vld [vmem:[%s2144 + $0x40] sm:$0xff]
        %v2154 = vld [vmem:[%s2144 + $0x48] sm:$0xff]
        %v2155 = vld [vmem:[%s2144 + $0x50] sm:$0xff]
        %v2156 = vld [vmem:[%s2144 + $0x58] sm:$0xff]
        %v2157 = vld [vmem:[%s2144 + $0x60] sm:$0xff]
        %v2158 = vld [vmem:[%s2144 + $0x68] sm:$0xff]
        %v2159 = vld [vmem:[%s2144 + $0x70] sm:$0xff]
        %v2160 = vld [vmem:[%s2144 + $0x78] sm:$0xff]
        %v2161 = vld [vmem:[#allocation4] sm:$0xff]
        %v2162 = vld [vmem:[#allocation4 + $0x8] sm:$0xff]
        %v2163 = vld [vmem:[#allocation4 + $0x10] sm:$0xff]
        %v2164 = vld [vmem:[#allocation4 + $0x18] sm:$0xff]
        %v2165 = vld [vmem:[#allocation4 + $0x20] sm:$0xff]
        %v2166 = vld [vmem:[#allocation4 + $0x28] sm:$0xff]
        %v2167 = vld [vmem:[#allocation4 + $0x30] sm:$0xff]
        %v2168 = vld [vmem:[#allocation4 + $0x38] sm:$0xff]
        %v2169 = vld [vmem:[#allocation4 + $0x40] sm:$0xff]
        %v2170 = vld [vmem:[#allocation4 + $0x48] sm:$0xff]
        %v2171 = vld [vmem:[#allocation4 + $0x50] sm:$0xff]
        %v2172 = vld [vmem:[#allocation4 + $0x58] sm:$0xff]
        %v2173 = vld [vmem:[#allocation4 + $0x60] sm:$0xff]
        %v2174 = vld [vmem:[#allocation4 + $0x68] sm:$0xff]
        %v2175 = vld [vmem:[#allocation4 + $0x70] sm:$0xff]
        %v2176 = vld [vmem:[#allocation4 + $0x78] sm:$0xff]
        %v2177 = vld [vmem:[#allocation4 + $0x80] sm:$0xff]
        %v2178 = vld [vmem:[#allocation4 + $0x88] sm:$0xff]
        %v2179 = vld [vmem:[#allocation4 + $0x90] sm:$0xff]
        %v2180 = vld [vmem:[#allocation4 + $0x98] sm:$0xff]
        %v2181 = vld [vmem:[#allocation4 + $0xa0] sm:$0xff]
        %v2182 = vld [vmem:[#allocation4 + $0xa8] sm:$0xff]
        %v2183 = vld [vmem:[#allocation4 + $0xb0] sm:$0xff]
        %v2184 = vld [vmem:[#allocation4 + $0xb8] sm:$0xff]
        %v2185 = vld [vmem:[#allocation4 + $0xc0] sm:$0xff]
        %v2186 = vld [vmem:[#allocation4 + $0xc8] sm:$0xff]
        %v2187 = vld [vmem:[#allocation4 + $0xd0] sm:$0xff]
        %v2188 = vld [vmem:[#allocation4 + $0xd8] sm:$0xff]
        %v2189 = vld [vmem:[#allocation4 + $0xe0] sm:$0xff]
        %v2190 = vld [vmem:[#allocation4 + $0xe8] sm:$0xff]
        %v2191 = vld [vmem:[#allocation4 + $0xf0] sm:$0xff]
        %v2192 = vld [vmem:[#allocation4 + $0xf8] sm:$0xff]
        %v2193 = vld [vmem:[#allocation4 + $0x100] sm:$0xff]
        %v2194 = vld [vmem:[#allocation4 + $0x108] sm:$0xff]
        %v2195 = vld [vmem:[#allocation4 + $0x110] sm:$0xff]
        %v2196 = vld [vmem:[#allocation4 + $0x118] sm:$0xff]
        %v2197 = vld [vmem:[#allocation4 + $0x120] sm:$0xff]
        %v2198 = vld [vmem:[#allocation4 + $0x128] sm:$0xff]
        %v2199 = vld [vmem:[#allocation4 + $0x130] sm:$0xff]
        %v2200 = vld [vmem:[#allocation4 + $0x138] sm:$0xff]
        %s2201 = scalar_lea.vmem %s421, 128
        %v2202 = vld [vmem:[%s2201] sm:$0xff]
        %v2203 = vld [vmem:[%s2201 + $0x8] sm:$0xff]
        %v2204 = vld [vmem:[%s2201 + $0x10] sm:$0xff]
        %v2205 = vld [vmem:[%s2201 + $0x18] sm:$0xff]
        %v2206 = vld [vmem:[%s2201 + $0x20] sm:$0xff]
        %v2207 = vld [vmem:[%s2201 + $0x28] sm:$0xff]
        %v2208 = vld [vmem:[%s2201 + $0x30] sm:$0xff]
        %v2209 = vld [vmem:[%s2201 + $0x38] sm:$0xff]
        %2211 = vset.pattern.permute.xlu0 0
        %2212 = vperm.xlu0 %2211, %v2202
        %v2213 = vpop.permute.xlu0 %2212
        %2216 = vset.pattern.permute.xlu0 0
        %2217 = vperm.xlu0 %2216, %v2203
        %v2218 = vpop.permute.xlu0 %2217
        %2221 = vset.pattern.permute.xlu0 0
        %2222 = vperm.xlu0 %2221, %v2204
        %v2223 = vpop.permute.xlu0 %2222
        %2226 = vset.pattern.permute.xlu0 0
        %2227 = vperm.xlu0 %2226, %v2205
        %v2228 = vpop.permute.xlu0 %2227
        %2231 = vset.pattern.permute.xlu0 0
        %2232 = vperm.xlu0 %2231, %v2206
        %v2233 = vpop.permute.xlu0 %2232
        %2236 = vset.pattern.permute.xlu0 0
        %2237 = vperm.xlu0 %2236, %v2207
        %v2238 = vpop.permute.xlu0 %2237
        %2241 = vset.pattern.permute.xlu0 0
        %2242 = vperm.xlu0 %2241, %v2208
        %v2243 = vpop.permute.xlu0 %2242
        %2246 = vset.pattern.permute.xlu0 0
        %2247 = vperm.xlu0 %2246, %v2209
        %v2248 = vpop.permute.xlu0 %2247
        %v2251 = vsel %vm969, %v2146, 0
        %v2254 = vsel %vm969, %v2148, 0
        %v2257 = vsel %vm969, %v2150, 0
        %v2260 = vsel %vm969, %v2152, 0
        %v2263 = vsel %vm969, %v2154, 0
        %v2266 = vsel %vm969, %v2156, 0
        %v2269 = vsel %vm969, %v2158, 0
        %v2272 = vsel %vm969, %v2160, 0
        %2274 = vmatprep.subr.mxu0 %v2162
        %2275 = vmatpush1.msra.mxu0 %v2161
        %2276 = vmatprep.subr.mxu0 %v2164
        %2277 = vmatpush1.msra.mxu0 %v2163
        %2278 = vmatprep.subr.mxu0 %v2166
        %2279 = vmatpush1.msra.mxu0 %v2165
        %2280 = vmatprep.subr.mxu0 %v2168
        %2281 = vmatpush1.msra.mxu0 %v2167
        %2282 = vmatprep.subr.mxu0 %v2170
        %2283 = vmatpush1.msra.mxu0 %v2169
        %2284 = vmatprep.subr.mxu0 %v2172
        %2285 = vmatpush1.msra.mxu0 %v2171
        %2286 = vmatprep.subr.mxu0 %v2174
        %2287 = vmatpush1.msra.mxu0 %v2173
        %2288 = vmatprep.subr.mxu0 %v2176
        %2289 = vmatpush1.msra.mxu0 %v2175
        %2290 = vmatprep.subr.mxu0 %v2178
        %2291 = vmatpush1.msra.mxu0 %v2177
        %2292 = vmatprep.subr.mxu0 %v2180
        %2293 = vmatpush1.msra.mxu0 %v2179
        %2294 = vmatprep.subr.mxu0 %v2182
        %2295 = vmatpush1.msra.mxu0 %v2181
        %2296 = vmatprep.subr.mxu0 %v2184
        %2297 = vmatpush1.msra.mxu0 %v2183
        %2298 = vmatprep.subr.mxu0 %v2186
        %2299 = vmatpush1.msra.mxu0 %v2185
        %2300 = vmatprep.subr.mxu0 %v2188
        %2301 = vmatpush1.msra.mxu0 %v2187
        %2302 = vmatprep.subr.mxu0 %v2190
        %2303 = vmatpush1.msra.mxu0 %v2189
        %2304 = vmatprep.subr.mxu0 %v2192
        %2305 = vmatpush1.msra.mxu0 %v2191
        %2306 = vmatprep.subr.mxu0 %v2194
        %2307 = vmatpush1.msra.mxu0 %v2193
        %2308 = vmatprep.subr.mxu0 %v2196
        %2309 = vmatpush1.msra.mxu0 %v2195
        %2310 = vmatprep.subr.mxu0 %v2198
        %2311 = vmatpush1.msra.mxu0 %v2197
        %2312 = vmatprep.subr.mxu0 %v2200
        %2313 = vmatpush1.msra.mxu0 %v2199
        %2314 = vmatprep.subr.mxu0 0.0
        %2315 = vmatpush1.msra.mxu0 0.0
        %2316 = vmatprep.subr.mxu0 0.0
        %2317 = vmatpush1.msra.mxu0 0.0
        %2318 = vmatprep.subr.mxu0 0.0
        %2319 = vmatpush1.msra.mxu0 0.0
        %2320 = vmatprep.subr.mxu0 0.0
        %2321 = vmatpush1.msra.mxu0 0.0
        %2322 = vmatprep.subr.mxu0 0.0
        %2323 = vmatpush1.msra.mxu0 0.0
        %2324 = vmatprep.subr.mxu0 0.0
        %2325 = vmatpush1.msra.mxu0 0.0
        %2326 = vmatprep.subr.mxu0 0.0
        %2327 = vmatpush1.msra.mxu0 0.0
        %2328 = vmatprep.subr.mxu0 0.0
        %2329 = vmatpush1.msra.mxu0 0.0
        %2330 = vmatprep.subr.mxu0 0.0
        %2331 = vmatpush1.msra.mxu0 0.0
        %2332 = vmatprep.subr.mxu0 0.0
        %2333 = vmatpush1.msra.mxu0 0.0
        %2334 = vmatprep.subr.mxu0 0.0
        %2335 = vmatpush1.msra.mxu0 0.0
        %2336 = vmatprep.subr.mxu0 0.0
        %2337 = vmatpush1.msra.mxu0 0.0
        %2338 = vmatprep.mubr.f32.mxu0 %v2251
        %2339 = vmatmul.mubr.f32.gmra.mrb[0].mxu0 %v2145
        %v2340 = vpop.f32.mrb[0].mxu0
        %v2341 = vadd.f32 %v2213, %v2340
        %v2342 = vpop.f32.mrb[0].mxu0
        %v2343 = vadd.f32 %v2213, %v2342
        %2344 = vmatprep.mubr.f32.mxu0 %v2254
        %2345 = vmatmul.mubr.f32.gmra.mrb[0].mxu0 %v2147
        %v2346 = vpop.f32.mrb[0].mxu0
        %v2347 = vadd.f32 %v2218, %v2346
        %v2348 = vpop.f32.mrb[0].mxu0
        %v2349 = vadd.f32 %v2218, %v2348
        %2350 = vmatprep.mubr.f32.mxu0 %v2257
        %2351 = vmatmul.mubr.f32.gmra.mrb[0].mxu0 %v2149
        %v2352 = vpop.f32.mrb[0].mxu0
        %v2353 = vadd.f32 %v2223, %v2352
        %v2354 = vpop.f32.mrb[0].mxu0
        %v2355 = vadd.f32 %v2223, %v2354
        %2356 = vmatprep.mubr.f32.mxu0 %v2260
        %2357 = vmatmul.mubr.f32.gmra.mrb[0].mxu0 %v2151
        %v2358 = vpop.f32.mrb[0].mxu0
        %v2359 = vadd.f32 %v2228, %v2358
        %v2360 = vpop.f32.mrb[0].mxu0
        %v2361 = vadd.f32 %v2228, %v2360
        %2362 = vmatprep.mubr.f32.mxu0 %v2263
        %2363 = vmatmul.mubr.f32.gmra.mrb[0].mxu0 %v2153
        %v2364 = vpop.f32.mrb[0].mxu0
        %v2365 = vadd.f32 %v2233, %v2364
        %v2366 = vpop.f32.mrb[0].mxu0
        %v2367 = vadd.f32 %v2233, %v2366
        %2368 = vmatprep.mubr.f32.mxu0 %v2266
        %2369 = vmatmul.mubr.f32.gmra.mrb[0].mxu0 %v2155
        %v2370 = vpop.f32.mrb[0].mxu0
        %v2371 = vadd.f32 %v2238, %v2370
        %v2372 = vpop.f32.mrb[0].mxu0
        %v2373 = vadd.f32 %v2238, %v2372
        %2374 = vmatprep.mubr.f32.mxu0 %v2269
        %2375 = vmatmul.mubr.f32.gmra.mrb[0].mxu0 %v2157
        %v2376 = vpop.f32.mrb[0].mxu0
        %v2377 = vadd.f32 %v2243, %v2376
        %v2378 = vpop.f32.mrb[0].mxu0
        %v2379 = vadd.f32 %v2243, %v2378
        %2380 = vmatprep.mubr.f32.mxu0 %v2272
        %2381 = vmatmul.mubr.f32.gmra.mrb[0].mxu0 %v2159
        %v2382 = vpop.f32.mrb[0].mxu0
        %v2383 = vadd.f32 %v2248, %v2382
        %v2384 = vpop.f32.mrb[0].mxu0
        %v2385 = vadd.f32 %v2248, %v2384
        %2386 = vdwg.mxu0
        %v2387 = vtanh.pop %v2341
        %v2388 = vtanh.pop %v2343
        %v2389 = vtanh.pop %v2347
        %v2390 = vtanh.pop %v2349
        %v2391 = vtanh.pop %v2353
        %v2392 = vtanh.pop %v2355
        %v2393 = vtanh.pop %v2359
        %v2394 = vtanh.pop %v2361
        %v2395 = vxor.u32 %v2365, 2147483648
        %v2396 = vxor.u32 %v2367, 2147483648
        %v2397 = vxor.u32 %v2371, 2147483648
        %v2398 = vxor.u32 %v2373, 2147483648
        %v2399 = vxor.u32 %v2377, 2147483648
        %v2400 = vxor.u32 %v2379, 2147483648
        %v2401 = vxor.u32 %v2383, 2147483648
        %v2402 = vxor.u32 %v2385, 2147483648
        %v2403 = vmul.f32 %v2395, 1.442695
        %v2404 = vpow.pop %v2403
        %v2405 = vmul.f32 %v2396, 1.442695
        %v2406 = vpow.pop %v2405
        %v2407 = vmul.f32 %v2397, 1.442695
        %v2408 = vpow.pop %v2407
        %v2409 = vmul.f32 %v2398, 1.442695
        %v2410 = vpow.pop %v2409
        %v2411 = vmul.f32 %v2399, 1.442695
        %v2412 = vpow.pop %v2411
        %v2413 = vmul.f32 %v2400, 1.442695
        %v2414 = vpow.pop %v2413
        %v2415 = vmul.f32 %v2401, 1.442695
        %v2416 = vpow.pop %v2415
        %v2417 = vmul.f32 %v2402, 1.442695
        %v2418 = vpow.pop %v2417
        %v2419 = vadd.f32 %v2404, 1.0
        %v2420 = vadd.f32 %v2406, 1.0
        %v2421 = vadd.f32 %v2408, 1.0
        %v2422 = vadd.f32 %v2410, 1.0
        %v2423 = vadd.f32 %v2412, 1.0
        %v2424 = vadd.f32 %v2414, 1.0
        %v2425 = vadd.f32 %v2416, 1.0
        %v2426 = vadd.f32 %v2418, 1.0
        %v2427 = vrcp.pop %v2419
        %v2428 = vmul.f32 1.0, %v2427
        %v2429 = vrcp.pop %v2420
        %v2430 = vmul.f32 1.0, %v2429
        %v2431 = vrcp.pop %v2421
        %v2432 = vmul.f32 1.0, %v2431
        %v2433 = vrcp.pop %v2422
        %v2434 = vmul.f32 1.0, %v2433
        %v2435 = vrcp.pop %v2423
        %v2436 = vmul.f32 1.0, %v2435
        %v2437 = vrcp.pop %v2424
        %v2438 = vmul.f32 1.0, %v2437
        %v2439 = vrcp.pop %v2425
        %v2440 = vmul.f32 1.0, %v2439
        %v2441 = vrcp.pop %v2426
        %v2442 = vmul.f32 1.0, %v2441
        %v2443 = vmul.f32 %v2387, %v2428
        %v2444 = vmul.f32 %v2388, %v2430
        %v2445 = vmul.f32 %v2389, %v2432
        %v2446 = vmul.f32 %v2390, %v2434
        %v2447 = vmul.f32 %v2391, %v2436
        %v2448 = vmul.f32 %v2392, %v2438
        %v2449 = vmul.f32 %v2393, %v2440
        %v2450 = vmul.f32 %v2394, %v2442
        %s2451 = scalar_lea.vmem %s426, 80
        %v2452 = vld [vmem:[%s2451] sm:$0xff]
        %v2453 = vld [vmem:[%s2451 + $0x8] sm:$0xff]
        %v2454 = vld [vmem:[%s2451 + $0x10] sm:$0xff]
        %v2455 = vld [vmem:[%s2451 + $0x18] sm:$0xff]
        %v2456 = vld [vmem:[%s2451 + $0x20] sm:$0x3]
        %v2458 = vsel %vm969, %v2452, 0
        %v2461 = vsel %vm969, %v2453, 0
        %v2464 = vsel %vm969, %v2454, 0
        %v2467 = vsel %vm969, %v2455, 0
        %v2470 = vsel %vm969, %v2456, 0
        %2472 = vmatprep.subr.mxu0 %v2444
        %2473 = vmatpush1.msra.mxu0 %v2443
        %2474 = vmatprep.subr.mxu0 %v2446
        %2475 = vmatpush1.msra.mxu0 %v2445
        %2476 = vmatprep.subr.mxu0 %v2448
        %2477 = vmatpush1.msra.mxu0 %v2447
        %2478 = vmatprep.subr.mxu0 %v2450
        %2479 = vmatpush1.msra.mxu0 %v2449
        %2480 = vmatprep.subr.mxu0 0.0
        %2481 = vmatpush1.msra.mxu0 0.0
        %2482 = vmatprep.subr.mxu0 0.0
        %2483 = vmatpush1.msra.mxu0 0.0
        %2484 = vmatprep.subr.mxu0 0.0
        %2485 = vmatpush1.msra.mxu0 0.0
        %2486 = vmatprep.subr.mxu0 0.0
        %2487 = vmatpush1.msra.mxu0 0.0
        %2488 = vmatprep.subr.mxu0 0.0
        %2489 = vmatpush1.msra.mxu0 0.0
        %2490 = vmatprep.subr.mxu0 0.0
        %2491 = vmatpush1.msra.mxu0 0.0
        %2492 = vmatprep.subr.mxu0 0.0
        %2493 = vmatpush1.msra.mxu0 0.0
        %2494 = vmatprep.subr.mxu0 0.0
        %2495 = vmatpush1.msra.mxu0 0.0
        %2496 = vmatprep.subr.mxu0 0.0
        %2497 = vmatpush1.msra.mxu0 0.0
        %2498 = vmatprep.subr.mxu0 0.0
        %2499 = vmatpush1.msra.mxu0 0.0
        %2500 = vmatprep.subr.mxu0 0.0
        %2501 = vmatpush1.msra.mxu0 0.0
        %2502 = vmatprep.subr.mxu0 0.0
        %2503 = vmatpush1.msra.mxu0 0.0
        %2504 = vmatprep.subr.mxu0 0.0
        %2505 = vmatpush1.msra.mxu0 0.0
        %2506 = vmatprep.subr.mxu0 0.0
        %2507 = vmatpush1.msra.mxu0 0.0
        %2508 = vmatprep.subr.mxu0 0.0
        %2509 = vmatpush1.msra.mxu0 0.0
        %2510 = vmatprep.subr.mxu0 0.0
        %2511 = vmatpush1.msra.mxu0 0.0
        %2512 = vmatprep.subr.mxu0 0.0
        %2513 = vmatpush1.msra.mxu0 0.0
        %2514 = vmatprep.subr.mxu0 0.0
        %2515 = vmatpush1.msra.mxu0 0.0
        %2516 = vmatprep.subr.mxu0 0.0
        %2517 = vmatpush1.msra.mxu0 0.0
        %2518 = vmatprep.subr.mxu0 0.0
        %2519 = vmatpush1.msra.mxu0 0.0
        %2520 = vmatprep.subr.mxu0 0.0
        %2521 = vmatpush1.msra.mxu0 0.0
        %2522 = vmatprep.subr.mxu0 0.0
        %2523 = vmatpush1.msra.mxu0 0.0
        %2524 = vmatprep.subr.mxu0 0.0
        %2525 = vmatpush1.msra.mxu0 0.0
        %2526 = vmatprep.subr.mxu0 0.0
        %2527 = vmatpush1.msra.mxu0 0.0
        %2528 = vmatprep.subr.mxu0 0.0
        %2529 = vmatpush1.msra.mxu0 0.0
        %2530 = vmatprep.subr.mxu0 0.0
        %2531 = vmatpush1.msra.mxu0 0.0
        %2532 = vmatprep.subr.mxu0 0.0
        %2533 = vmatpush1.msra.mxu0 0.0
        %2534 = vmatprep.subr.mxu0 0.0
        %2535 = vmatpush1.msra.mxu0 0.0
        %2536 = vmatprep.mubr.f32.mxu0 0.0
        %2537 = vmatmul.mubr.f32.gmra.mrb[0].mxu0 %v2458
        %v2538 = vpop.f32.mrb[0].mxu0
        %v2539 = vadd.f32 0.0, %v2538
        %v2540 = vpop.f32.mrb[0].mxu0
        %v2541 = vadd.f32 0.0, %v2540
        %2542 = vmatprep.mubr.f32.mxu0 0.0
        %2543 = vmatmul.mubr.f32.gmra.mrb[0].mxu0 %v2461
        %v2544 = vpop.f32.mrb[0].mxu0
        %v2545 = vadd.f32 0.0, %v2544
        %v2546 = vpop.f32.mrb[0].mxu0
        %v2547 = vadd.f32 0.0, %v2546
        %2548 = vmatprep.mubr.f32.mxu0 0.0
        %2549 = vmatmul.mubr.f32.gmra.mrb[0].mxu0 %v2464
        %v2550 = vpop.f32.mrb[0].mxu0
        %v2551 = vadd.f32 0.0, %v2550
        %v2552 = vpop.f32.mrb[0].mxu0
        %v2553 = vadd.f32 0.0, %v2552
        %2554 = vmatprep.mubr.f32.mxu0 0.0
        %2555 = vmatmul.mubr.f32.gmra.mrb[0].mxu0 %v2467
        %v2556 = vpop.f32.mrb[0].mxu0
        %v2557 = vadd.f32 0.0, %v2556
        %v2558 = vpop.f32.mrb[0].mxu0
        %v2559 = vadd.f32 0.0, %v2558
        %2560 = vmatprep.mubr.f32.mxu0 0.0
        %2561 = vmatmul.mubr.f32.gmra.mrb[0].mxu0 %v2470
        %v2562 = vpop.f32.mrb[0].mxu0
        %v2563 = vadd.f32 0.0, %v2562
        %v2564 = vpop.f32.mrb[0].mxu0
        %v2565 = vadd.f32 0.0, %v2564
        %2566 = vdwg.mxu0
        %v2567 = vadd.f32 %v1966, %v2539
        %v2568 = vadd.f32 %v1967, %v2541
        %v2569 = vadd.f32 %v1968, %v2545
        %v2570 = vadd.f32 %v1969, %v2547
        %v2571 = vadd.f32 %v1970, %v2551
        %v2572 = vadd.f32 %v1971, %v2553
        %v2573 = vadd.f32 %v1972, %v2557
        %v2574 = vadd.f32 %v1973, %v2559
        %s2575 = scalar_lea.vmem %s431, 64
        %v2576 = vld [vmem:[%s2575] sm:$0xff]
        %v2577 = vld [vmem:[%s2575 + $0x8] sm:$0xff]
        %v2578 = vld [vmem:[%s2575 + $0x10] sm:$0xff]
        %v2579 = vld [vmem:[%s2575 + $0x18] sm:$0xff]
        %2581 = vset.pattern.permute.xlu0 0
        %2582 = vperm.xlu0 %2581, %v2576
        %v2583 = vpop.permute.xlu0 %2582
        %2586 = vset.pattern.permute.xlu0 0
        %2587 = vperm.xlu0 %2586, %v2577
        %v2588 = vpop.permute.xlu0 %2587
        %2591 = vset.pattern.permute.xlu0 0
        %2592 = vperm.xlu0 %2591, %v2578
        %v2593 = vpop.permute.xlu0 %2592
        %2596 = vset.pattern.permute.xlu0 0
        %2597 = vperm.xlu0 %2596, %v2579
        %v2598 = vpop.permute.xlu0 %2597
        %v2600 = vadd.f32 %v2567, %v2583
        %v2601 = vadd.f32 %v2568, %v2583
        %v2602 = vadd.f32 %v2569, %v2588
        %v2603 = vadd.f32 %v2570, %v2588
        %v2604 = vadd.f32 %v2571, %v2593
        %v2605 = vadd.f32 %v2572, %v2593
        %v2606 = vadd.f32 %v2573, %v2598
        %v2607 = vadd.f32 %v2574, %v2598
        %v2608 = vmul.f32 %v2600, %v678
        %v2609 = vmul.f32 %v2601, %v682
        %v2610 = vmul.f32 %v2602, %v678
        %v2611 = vmul.f32 %v2603, %v682
        %v2612 = vmul.f32 %v2604, %v678
        %v2613 = vmul.f32 %v2605, %v682
        %v2614 = vmul.f32 %v2606, %v678
        %v2615 = vmul.f32 %v2607, %v682
        %v2616 = vadd.f32 %v1974, %v2563
        %v2617 = vadd.f32 %v1975, %v2565
        %2618 = vrot.lane.b32.xlu0 %v2608, 2
        %v2619 = vpop.permute.xlu0 %2618
        %2620 = vrot.lane.b32.xlu0 %v2610, 2
        %v2621 = vpop.permute.xlu0 %2620
        %2622 = vrot.lane.b32.xlu0 %v2612, 2
        %v2623 = vpop.permute.xlu0 %2622
        %2624 = vrot.lane.b32.xlu0 %v2614, 2
        %v2625 = vpop.permute.xlu0 %2624
        %2626 = vrot.lane.b32.xlu0 %v2609, 2
        %v2627 = vpop.permute.xlu0 %2626
        %2628 = vrot.lane.b32.xlu0 %v2611, 2
        %v2629 = vpop.permute.xlu0 %2628
        %2630 = vrot.lane.b32.xlu0 %v2613, 2
        %v2631 = vpop.permute.xlu0 %2630
        %2632 = vrot.lane.b32.xlu0 %v2615, 2
        %v2633 = vpop.permute.xlu0 %2632
        %v2634 = vsel %vm709, %v2619, %v2627
        %v2635 = vsel %vm709, %v2621, %v2629
        %v2636 = vsel %vm709, %v2623, %v2631
        %v2637 = vsel %vm709, %v2625, %v2633
        %v2638 = vsel %vm709, %v2627, %v2619
        %v2639 = vsel %vm709, %v2629, %v2621
        %v2640 = vsel %vm709, %v2631, %v2623
        %v2641 = vsel %vm709, %v2633, %v2625
        %v2642 = vmul.f32 %v2638, %v501
        %v2643 = vmul.f32 %v2634, %v502
        %v2644 = vmul.f32 %v2639, %v501
        %v2645 = vmul.f32 %v2635, %v502
        %v2646 = vmul.f32 %v2640, %v501
        %v2647 = vmul.f32 %v2636, %v502
        %v2648 = vmul.f32 %v2641, %v501
        %v2649 = vmul.f32 %v2637, %v502
        %2650 = vst [vmem:[#allocation4] sm:$0xff] %v2642
        %2651 = vst [vmem:[#allocation4 + $0x8] sm:$0xff] %v2643
        %2652 = vst [vmem:[#allocation4 + $0x10] sm:$0xff] %v2644
        %2653 = vst [vmem:[#allocation4 + $0x18] sm:$0xff] %v2645
        %2654 = vst [vmem:[#allocation4 + $0x20] sm:$0xff] %v2646
        %2655 = vst [vmem:[#allocation4 + $0x28] sm:$0xff] %v2647
        %2656 = vst [vmem:[#allocation4 + $0x30] sm:$0xff] %v2648
        %2657 = vst [vmem:[#allocation4 + $0x38] sm:$0xff] %v2649
        %2658 = vrot.lane.b32.xlu0 %v2608, 1
        %v2659 = vpop.permute.xlu0 %2658
        %2660 = vrot.lane.b32.xlu0 %v2610, 1
        %v2661 = vpop.permute.xlu0 %2660
        %2662 = vrot.lane.b32.xlu0 %v2612, 1
        %v2663 = vpop.permute.xlu0 %2662
        %2664 = vrot.lane.b32.xlu0 %v2614, 1
        %v2665 = vpop.permute.xlu0 %2664
        %2666 = vrot.lane.b32.xlu0 %v2609, 1
        %v2667 = vpop.permute.xlu0 %2666
        %2668 = vrot.lane.b32.xlu0 %v2611, 1
        %v2669 = vpop.permute.xlu0 %2668
        %2670 = vrot.lane.b32.xlu0 %v2613, 1
        %v2671 = vpop.permute.xlu0 %2670
        %2672 = vrot.lane.b32.xlu0 %v2615, 1
        %v2673 = vpop.permute.xlu0 %2672
        %v2674 = vsel %vm750, %v2659, %v2667
        %v2675 = vsel %vm750, %v2661, %v2669
        %v2676 = vsel %vm750, %v2663, %v2671
        %v2677 = vsel %vm750, %v2665, %v2673
        %v2678 = vsel %vm750, %v2667, %v2659
        %v2679 = vsel %vm750, %v2669, %v2661
        %v2680 = vsel %vm750, %v2671, %v2663
        %v2681 = vsel %vm750, %v2673, %v2665
        %v2682 = vmul.f32 %v2678, %v513
        %v2683 = vmul.f32 %v2674, %v514
        %v2684 = vmul.f32 %v2679, %v513
        %v2685 = vmul.f32 %v2675, %v514
        %v2686 = vmul.f32 %v2680, %v513
        %v2687 = vmul.f32 %v2676, %v514
        %v2688 = vmul.f32 %v2681, %v513
        %v2689 = vmul.f32 %v2677, %v514
        %2690 = vst [vmem:[#allocation4 + $0x40] sm:$0xff] %v2682
        %2691 = vst [vmem:[#allocation4 + $0x48] sm:$0xff] %v2683
        %2692 = vst [vmem:[#allocation4 + $0x50] sm:$0xff] %v2684
        %2693 = vst [vmem:[#allocation4 + $0x58] sm:$0xff] %v2685
        %2694 = vst [vmem:[#allocation4 + $0x60] sm:$0xff] %v2686
        %2695 = vst [vmem:[#allocation4 + $0x68] sm:$0xff] %v2687
        %2696 = vst [vmem:[#allocation4 + $0x70] sm:$0xff] %v2688
        %2697 = vst [vmem:[#allocation4 + $0x78] sm:$0xff] %v2689
        %2698 = vst [vmem:[#allocation4 + $0x80] sm:$0xff] %v2608
        %2699 = vst [vmem:[#allocation4 + $0x88] sm:$0xff] %v2609
        %2700 = vst [vmem:[#allocation4 + $0x90] sm:$0xff] %v2610
        %2701 = vst [vmem:[#allocation4 + $0x98] sm:$0xff] %v2611
        %2702 = vst [vmem:[#allocation4 + $0xa0] sm:$0xff] %v2612
        %2703 = vst [vmem:[#allocation4 + $0xa8] sm:$0xff] %v2613
        %2704 = vst [vmem:[#allocation4 + $0xb0] sm:$0xff] %v2614
        %2705 = vst [vmem:[#allocation4 + $0xb8] sm:$0xff] %v2615
        %2706 = vrot.lane.b32.xlu0 %v2608, 127
        %v2707 = vpop.permute.xlu0 %2706
        %2708 = vrot.lane.b32.xlu0 %v2610, 127
        %v2709 = vpop.permute.xlu0 %2708
        %2710 = vrot.lane.b32.xlu0 %v2612, 127
        %v2711 = vpop.permute.xlu0 %2710
        %2712 = vrot.lane.b32.xlu0 %v2614, 127
        %v2713 = vpop.permute.xlu0 %2712
        %2714 = vrot.lane.b32.xlu0 %v2609, 127
        %v2715 = vpop.permute.xlu0 %2714
        %2716 = vrot.lane.b32.xlu0 %v2611, 127
        %v2717 = vpop.permute.xlu0 %2716
        %2718 = vrot.lane.b32.xlu0 %v2613, 127
        %v2719 = vpop.permute.xlu0 %2718
        %2720 = vrot.lane.b32.xlu0 %v2615, 127
        %v2721 = vpop.permute.xlu0 %2720
        %v2722 = vsel %vm799, %v2707, %v2715
        %v2723 = vsel %vm799, %v2709, %v2717
        %v2724 = vsel %vm799, %v2711, %v2719
        %v2725 = vsel %vm799, %v2713, %v2721
        %v2726 = vsel %vm799, %v2715, %v2707
        %v2727 = vsel %vm799, %v2717, %v2709
        %v2728 = vsel %vm799, %v2719, %v2711
        %v2729 = vsel %vm799, %v2721, %v2713
        %v2730 = vmul.f32 %v2722, %v525
        %v2731 = vmul.f32 %v2726, %v526
        %v2732 = vmul.f32 %v2723, %v525
        %v2733 = vmul.f32 %v2727, %v526
        %v2734 = vmul.f32 %v2724, %v525
        %v2735 = vmul.f32 %v2728, %v526
        %v2736 = vmul.f32 %v2725, %v525
        %v2737 = vmul.f32 %v2729, %v526
        %2738 = vst [vmem:[#allocation4 + $0xc0] sm:$0xff] %v2730
        %2739 = vst [vmem:[#allocation4 + $0xc8] sm:$0xff] %v2731
        %2740 = vst [vmem:[#allocation4 + $0xd0] sm:$0xff] %v2732
        %2741 = vst [vmem:[#allocation4 + $0xd8] sm:$0xff] %v2733
        %2742 = vst [vmem:[#allocation4 + $0xe0] sm:$0xff] %v2734
        %2743 = vst [vmem:[#allocation4 + $0xe8] sm:$0xff] %v2735
        %2744 = vst [vmem:[#allocation4 + $0xf0] sm:$0xff] %v2736
        %2745 = vst [vmem:[#allocation4 + $0xf8] sm:$0xff] %v2737
        %2746 = vrot.lane.b32.xlu0 %v2608, 126
        %v2747 = vpop.permute.xlu0 %2746
        %2748 = vrot.lane.b32.xlu0 %v2610, 126
        %v2749 = vpop.permute.xlu0 %2748
        %2750 = vrot.lane.b32.xlu0 %v2612, 126
        %v2751 = vpop.permute.xlu0 %2750
        %2752 = vrot.lane.b32.xlu0 %v2614, 126
        %v2753 = vpop.permute.xlu0 %2752
        %2754 = vrot.lane.b32.xlu0 %v2609, 126
        %v2755 = vpop.permute.xlu0 %2754
        %2756 = vrot.lane.b32.xlu0 %v2611, 126
        %v2757 = vpop.permute.xlu0 %2756
        %2758 = vrot.lane.b32.xlu0 %v2613, 126
        %v2759 = vpop.permute.xlu0 %2758
        %2760 = vrot.lane.b32.xlu0 %v2615, 126
        %v2761 = vpop.permute.xlu0 %2760
        %v2762 = vsel %vm840, %v2747, %v2755
        %v2763 = vsel %vm840, %v2749, %v2757
        %v2764 = vsel %vm840, %v2751, %v2759
        %v2765 = vsel %vm840, %v2753, %v2761
        %v2766 = vsel %vm840, %v2755, %v2747
        %v2767 = vsel %vm840, %v2757, %v2749
        %v2768 = vsel %vm840, %v2759, %v2751
        %v2769 = vsel %vm840, %v2761, %v2753
        %v2770 = vmul.f32 %v2762, %v537
        %v2771 = vmul.f32 %v2766, %v538
        %v2772 = vmul.f32 %v2763, %v537
        %v2773 = vmul.f32 %v2767, %v538
        %v2774 = vmul.f32 %v2764, %v537
        %v2775 = vmul.f32 %v2768, %v538
        %v2776 = vmul.f32 %v2765, %v537
        %v2777 = vmul.f32 %v2769, %v538
        %2778 = vst [vmem:[#allocation4 + $0x100] sm:$0xff] %v2770
        %2779 = vst [vmem:[#allocation4 + $0x108] sm:$0xff] %v2771
        %2780 = vst [vmem:[#allocation4 + $0x110] sm:$0xff] %v2772
        %2781 = vst [vmem:[#allocation4 + $0x118] sm:$0xff] %v2773
        %2782 = vst [vmem:[#allocation4 + $0x120] sm:$0xff] %v2774
        %2783 = vst [vmem:[#allocation4 + $0x128] sm:$0xff] %v2775
        %2784 = vst [vmem:[#allocation4 + $0x130] sm:$0xff] %v2776
        %2785 = vst [vmem:[#allocation4 + $0x138] sm:$0xff] %v2777
        %s2786 = scalar_lea.vmem %s416, 384
        %v2787 = vld [vmem:[%s2786] sm:$0xff]
        %v2788 = vld [vmem:[%s2786 + $0x8] sm:$0xff]
        %v2789 = vld [vmem:[%s2786 + $0x10] sm:$0xff]
        %v2790 = vld [vmem:[%s2786 + $0x18] sm:$0xff]
        %v2791 = vld [vmem:[%s2786 + $0x20] sm:$0xff]
        %v2792 = vld [vmem:[%s2786 + $0x28] sm:$0xff]
        %v2793 = vld [vmem:[%s2786 + $0x30] sm:$0xff]
        %v2794 = vld [vmem:[%s2786 + $0x38] sm:$0xff]
        %v2795 = vld [vmem:[%s2786 + $0x40] sm:$0xff]
        %v2796 = vld [vmem:[%s2786 + $0x48] sm:$0xff]
        %v2797 = vld [vmem:[%s2786 + $0x50] sm:$0xff]
        %v2798 = vld [vmem:[%s2786 + $0x58] sm:$0xff]
        %v2799 = vld [vmem:[%s2786 + $0x60] sm:$0xff]
        %v2800 = vld [vmem:[%s2786 + $0x68] sm:$0xff]
        %v2801 = vld [vmem:[%s2786 + $0x70] sm:$0xff]
        %v2802 = vld [vmem:[%s2786 + $0x78] sm:$0xff]
        %v2803 = vld [vmem:[#allocation4] sm:$0xff]
        %v2804 = vld [vmem:[#allocation4 + $0x8] sm:$0xff]
        %v2805 = vld [vmem:[#allocation4 + $0x10] sm:$0xff]
        %v2806 = vld [vmem:[#allocation4 + $0x18] sm:$0xff]
        %v2807 = vld [vmem:[#allocation4 + $0x20] sm:$0xff]
        %v2808 = vld [vmem:[#allocation4 + $0x28] sm:$0xff]
        %v2809 = vld [vmem:[#allocation4 + $0x30] sm:$0xff]
        %v2810 = vld [vmem:[#allocation4 + $0x38] sm:$0xff]
        %v2811 = vld [vmem:[#allocation4 + $0x40] sm:$0xff]
        %v2812 = vld [vmem:[#allocation4 + $0x48] sm:$0xff]
        %v2813 = vld [vmem:[#allocation4 + $0x50] sm:$0xff]
        %v2814 = vld [vmem:[#allocation4 + $0x58] sm:$0xff]
        %v2815 = vld [vmem:[#allocation4 + $0x60] sm:$0xff]
        %v2816 = vld [vmem:[#allocation4 + $0x68] sm:$0xff]
        %v2817 = vld [vmem:[#allocation4 + $0x70] sm:$0xff]
        %v2818 = vld [vmem:[#allocation4 + $0x78] sm:$0xff]
        %v2819 = vld [vmem:[#allocation4 + $0x80] sm:$0xff]
        %v2820 = vld [vmem:[#allocation4 + $0x88] sm:$0xff]
        %v2821 = vld [vmem:[#allocation4 + $0x90] sm:$0xff]
        %v2822 = vld [vmem:[#allocation4 + $0x98] sm:$0xff]
        %v2823 = vld [vmem:[#allocation4 + $0xa0] sm:$0xff]
        %v2824 = vld [vmem:[#allocation4 + $0xa8] sm:$0xff]
        %v2825 = vld [vmem:[#allocation4 + $0xb0] sm:$0xff]
        %v2826 = vld [vmem:[#allocation4 + $0xb8] sm:$0xff]
        %v2827 = vld [vmem:[#allocation4 + $0xc0] sm:$0xff]
        %v2828 = vld [vmem:[#allocation4 + $0xc8] sm:$0xff]
        %v2829 = vld [vmem:[#allocation4 + $0xd0] sm:$0xff]
        %v2830 = vld [vmem:[#allocation4 + $0xd8] sm:$0xff]
        %v2831 = vld [vmem:[#allocation4 + $0xe0] sm:$0xff]
        %v2832 = vld [vmem:[#allocation4 + $0xe8] sm:$0xff]
        %v2833 = vld [vmem:[#allocation4 + $0xf0] sm:$0xff]
        %v2834 = vld [vmem:[#allocation4 + $0xf8] sm:$0xff]
        %v2835 = vld [vmem:[#allocation4 + $0x100] sm:$0xff]
        %v2836 = vld [vmem:[#allocation4 + $0x108] sm:$0xff]
        %v2837 = vld [vmem:[#allocation4 + $0x110] sm:$0xff]
        %v2838 = vld [vmem:[#allocation4 + $0x118] sm:$0xff]
        %v2839 = vld [vmem:[#allocation4 + $0x120] sm:$0xff]
        %v2840 = vld [vmem:[#allocation4 + $0x128] sm:$0xff]
        %v2841 = vld [vmem:[#allocation4 + $0x130] sm:$0xff]
        %v2842 = vld [vmem:[#allocation4 + $0x138] sm:$0xff]
        %s2843 = scalar_lea.vmem %s421, 192
        %v2844 = vld [vmem:[%s2843] sm:$0xff]
        %v2845 = vld [vmem:[%s2843 + $0x8] sm:$0xff]
        %v2846 = vld [vmem:[%s2843 + $0x10] sm:$0xff]
        %v2847 = vld [vmem:[%s2843 + $0x18] sm:$0xff]
        %v2848 = vld [vmem:[%s2843 + $0x20] sm:$0xff]
        %v2849 = vld [vmem:[%s2843 + $0x28] sm:$0xff]
        %v2850 = vld [vmem:[%s2843 + $0x30] sm:$0xff]
        %v2851 = vld [vmem:[%s2843 + $0x38] sm:$0xff]
        %2853 = vset.pattern.permute.xlu0 0
        %2854 = vperm.xlu0 %2853, %v2844
        %v2855 = vpop.permute.xlu0 %2854
        %2858 = vset.pattern.permute.xlu0 0
        %2859 = vperm.xlu0 %2858, %v2845
        %v2860 = vpop.permute.xlu0 %2859
        %2863 = vset.pattern.permute.xlu0 0
        %2864 = vperm.xlu0 %2863, %v2846
        %v2865 = vpop.permute.xlu0 %2864
        %2868 = vset.pattern.permute.xlu0 0
        %2869 = vperm.xlu0 %2868, %v2847
        %v2870 = vpop.permute.xlu0 %2869
        %2873 = vset.pattern.permute.xlu0 0
        %2874 = vperm.xlu0 %2873, %v2848
        %v2875 = vpop.permute.xlu0 %2874
        %2878 = vset.pattern.permute.xlu0 0
        %2879 = vperm.xlu0 %2878, %v2849
        %v2880 = vpop.permute.xlu0 %2879
        %2883 = vset.pattern.permute.xlu0 0
        %2884 = vperm.xlu0 %2883, %v2850
        %v2885 = vpop.permute.xlu0 %2884
        %2888 = vset.pattern.permute.xlu0 0
        %2889 = vperm.xlu0 %2888, %v2851
        %v2890 = vpop.permute.xlu0 %2889
        %v2893 = vsel %vm969, %v2788, 0
        %v2896 = vsel %vm969, %v2790, 0
        %v2899 = vsel %vm969, %v2792, 0
        %v2902 = vsel %vm969, %v2794, 0
        %v2905 = vsel %vm969, %v2796, 0
        %v2908 = vsel %vm969, %v2798, 0
        %v2911 = vsel %vm969, %v2800, 0
        %v2914 = vsel %vm969, %v2802, 0
        %2916 = vmatprep.subr.mxu0 %v2804
        %2917 = vmatpush1.msra.mxu0 %v2803
        %2918 = vmatprep.subr.mxu0 %v2806
        %2919 = vmatpush1.msra.mxu0 %v2805
        %2920 = vmatprep.subr.mxu0 %v2808
        %2921 = vmatpush1.msra.mxu0 %v2807
        %2922 = vmatprep.subr.mxu0 %v2810
        %2923 = vmatpush1.msra.mxu0 %v2809
        %2924 = vmatprep.subr.mxu0 %v2812
        %2925 = vmatpush1.msra.mxu0 %v2811
        %2926 = vmatprep.subr.mxu0 %v2814
        %2927 = vmatpush1.msra.mxu0 %v2813
        %2928 = vmatprep.subr.mxu0 %v2816
        %2929 = vmatpush1.msra.mxu0 %v2815
        %2930 = vmatprep.subr.mxu0 %v2818
        %2931 = vmatpush1.msra.mxu0 %v2817
        %2932 = vmatprep.subr.mxu0 %v2820
        %2933 = vmatpush1.msra.mxu0 %v2819
        %2934 = vmatprep.subr.mxu0 %v2822
        %2935 = vmatpush1.msra.mxu0 %v2821
        %2936 = vmatprep.subr.mxu0 %v2824
        %2937 = vmatpush1.msra.mxu0 %v2823
        %2938 = vmatprep.subr.mxu0 %v2826
        %2939 = vmatpush1.msra.mxu0 %v2825
        %2940 = vmatprep.subr.mxu0 %v2828
        %2941 = vmatpush1.msra.mxu0 %v2827
        %2942 = vmatprep.subr.mxu0 %v2830
        %2943 = vmatpush1.msra.mxu0 %v2829
        %2944 = vmatprep.subr.mxu0 %v2832
        %2945 = vmatpush1.msra.mxu0 %v2831
        %2946 = vmatprep.subr.mxu0 %v2834
        %2947 = vmatpush1.msra.mxu0 %v2833
        %2948 = vmatprep.subr.mxu0 %v2836
        %2949 = vmatpush1.msra.mxu0 %v2835
        %2950 = vmatprep.subr.mxu0 %v2838
        %2951 = vmatpush1.msra.mxu0 %v2837
        %2952 = vmatprep.subr.mxu0 %v2840
        %2953 = vmatpush1.msra.mxu0 %v2839
        %2954 = vmatprep.subr.mxu0 %v2842
        %2955 = vmatpush1.msra.mxu0 %v2841
        %2956 = vmatprep.subr.mxu0 0.0
        %2957 = vmatpush1.msra.mxu0 0.0
        %2958 = vmatprep.subr.mxu0 0.0
        %2959 = vmatpush1.msra.mxu0 0.0
        %2960 = vmatprep.subr.mxu0 0.0
        %2961 = vmatpush1.msra.mxu0 0.0
        %2962 = vmatprep.subr.mxu0 0.0
        %2963 = vmatpush1.msra.mxu0 0.0
        %2964 = vmatprep.subr.mxu0 0.0
        %2965 = vmatpush1.msra.mxu0 0.0
        %2966 = vmatprep.subr.mxu0 0.0
        %2967 = vmatpush1.msra.mxu0 0.0
        %2968 = vmatprep.subr.mxu0 0.0
        %2969 = vmatpush1.msra.mxu0 0.0
        %2970 = vmatprep.subr.mxu0 0.0
        %2971 = vmatpush1.msra.mxu0 0.0
        %2972 = vmatprep.subr.mxu0 0.0
        %2973 = vmatpush1.msra.mxu0 0.0
        %2974 = vmatprep.subr.mxu0 0.0
        %2975 = vmatpush1.msra.mxu0 0.0
        %2976 = vmatprep.subr.mxu0 0.0
        %2977 = vmatpush1.msra.mxu0 0.0
        %2978 = vmatprep.subr.mxu0 0.0
        %2979 = vmatpush1.msra.mxu0 0.0
        %2980 = vmatprep.mubr.f32.mxu0 %v2893
        %2981 = vmatmul.mubr.f32.gmra.mrb[0].mxu0 %v2787
        %v2982 = vpop.f32.mrb[0].mxu0
        %v2983 = vadd.f32 %v2855, %v2982
        %v2984 = vpop.f32.mrb[0].mxu0
        %v2985 = vadd.f32 %v2855, %v2984
        %2986 = vmatprep.mubr.f32.mxu0 %v2896
        %2987 = vmatmul.mubr.f32.gmra.mrb[0].mxu0 %v2789
        %v2988 = vpop.f32.mrb[0].mxu0
        %v2989 = vadd.f32 %v2860, %v2988
        %v2990 = vpop.f32.mrb[0].mxu0
        %v2991 = vadd.f32 %v2860, %v2990
        %2992 = vmatprep.mubr.f32.mxu0 %v2899
        %2993 = vmatmul.mubr.f32.gmra.mrb[0].mxu0 %v2791
        %v2994 = vpop.f32.mrb[0].mxu0
        %v2995 = vadd.f32 %v2865, %v2994
        %v2996 = vpop.f32.mrb[0].mxu0
        %v2997 = vadd.f32 %v2865, %v2996
        %2998 = vmatprep.mubr.f32.mxu0 %v2902
        %2999 = vmatmul.mubr.f32.gmra.mrb[0].mxu0 %v2793
        %v3000 = vpop.f32.mrb[0].mxu0
        %v3001 = vadd.f32 %v2870, %v3000
        %v3002 = vpop.f32.mrb[0].mxu0
        %v3003 = vadd.f32 %v2870, %v3002
        %3004 = vmatprep.mubr.f32.mxu0 %v2905
        %3005 = vmatmul.mubr.f32.gmra.mrb[0].mxu0 %v2795
        %v3006 = vpop.f32.mrb[0].mxu0
        %v3007 = vadd.f32 %v2875, %v3006
        %v3008 = vpop.f32.mrb[0].mxu0
        %v3009 = vadd.f32 %v2875, %v3008
        %3010 = vmatprep.mubr.f32.mxu0 %v2908
        %3011 = vmatmul.mubr.f32.gmra.mrb[0].mxu0 %v2797
        %v3012 = vpop.f32.mrb[0].mxu0
        %v3013 = vadd.f32 %v2880, %v3012
        %v3014 = vpop.f32.mrb[0].mxu0
        %v3015 = vadd.f32 %v2880, %v3014
        %3016 = vmatprep.mubr.f32.mxu0 %v2911
        %3017 = vmatmul.mubr.f32.gmra.mrb[0].mxu0 %v2799
        %v3018 = vpop.f32.mrb[0].mxu0
        %v3019 = vadd.f32 %v2885, %v3018
        %v3020 = vpop.f32.mrb[0].mxu0
        %v3021 = vadd.f32 %v2885, %v3020
        %3022 = vmatprep.mubr.f32.mxu0 %v2914
        %3023 = vmatmul.mubr.f32.gmra.mrb[0].mxu0 %v2801
        %v3024 = vpop.f32.mrb[0].mxu0
        %v3025 = vadd.f32 %v2890, %v3024
        %v3026 = vpop.f32.mrb[0].mxu0
        %v3027 = vadd.f32 %v2890, %v3026
        %3028 = vdwg.mxu0
        %v3029 = vtanh.pop %v2983
        %v3030 = vtanh.pop %v2985
        %v3031 = vtanh.pop %v2989
        %v3032 = vtanh.pop %v2991
        %v3033 = vtanh.pop %v2995
        %v3034 = vtanh.pop %v2997
        %v3035 = vtanh.pop %v3001
        %v3036 = vtanh.pop %v3003
        %v3037 = vxor.u32 %v3007, 2147483648
        %v3038 = vxor.u32 %v3009, 2147483648
        %v3039 = vxor.u32 %v3013, 2147483648
        %v3040 = vxor.u32 %v3015, 2147483648
        %v3041 = vxor.u32 %v3019, 2147483648
        %v3042 = vxor.u32 %v3021, 2147483648
        %v3043 = vxor.u32 %v3025, 2147483648
        %v3044 = vxor.u32 %v3027, 2147483648
        %v3045 = vmul.f32 %v3037, 1.442695
        %v3046 = vpow.pop %v3045
        %v3047 = vmul.f32 %v3038, 1.442695
        %v3048 = vpow.pop %v3047
        %v3049 = vmul.f32 %v3039, 1.442695
        %v3050 = vpow.pop %v3049
        %v3051 = vmul.f32 %v3040, 1.442695
        %v3052 = vpow.pop %v3051
        %v3053 = vmul.f32 %v3041, 1.442695
        %v3054 = vpow.pop %v3053
        %v3055 = vmul.f32 %v3042, 1.442695
        %v3056 = vpow.pop %v3055
        %v3057 = vmul.f32 %v3043, 1.442695
        %v3058 = vpow.pop %v3057
        %v3059 = vmul.f32 %v3044, 1.442695
        %v3060 = vpow.pop %v3059
        %v3061 = vadd.f32 %v3046, 1.0
        %v3062 = vadd.f32 %v3048, 1.0
        %v3063 = vadd.f32 %v3050, 1.0
        %v3064 = vadd.f32 %v3052, 1.0
        %v3065 = vadd.f32 %v3054, 1.0
        %v3066 = vadd.f32 %v3056, 1.0
        %v3067 = vadd.f32 %v3058, 1.0
        %v3068 = vadd.f32 %v3060, 1.0
        %v3069 = vrcp.pop %v3061
        %v3070 = vmul.f32 1.0, %v3069
        %v3071 = vrcp.pop %v3062
        %v3072 = vmul.f32 1.0, %v3071
        %v3073 = vrcp.pop %v3063
        %v3074 = vmul.f32 1.0, %v3073
        %v3075 = vrcp.pop %v3064
        %v3076 = vmul.f32 1.0, %v3075
        %v3077 = vrcp.pop %v3065
        %v3078 = vmul.f32 1.0, %v3077
        %v3079 = vrcp.pop %v3066
        %v3080 = vmul.f32 1.0, %v3079
        %v3081 = vrcp.pop %v3067
        %v3082 = vmul.f32 1.0, %v3081
        %v3083 = vrcp.pop %v3068
        %v3084 = vmul.f32 1.0, %v3083
        %v3085 = vmul.f32 %v3029, %v3070
        %v3086 = vmul.f32 %v3030, %v3072
        %v3087 = vmul.f32 %v3031, %v3074
        %v3088 = vmul.f32 %v3032, %v3076
        %v3089 = vmul.f32 %v3033, %v3078
        %v3090 = vmul.f32 %v3034, %v3080
        %v3091 = vmul.f32 %v3035, %v3082
        %v3092 = vmul.f32 %v3036, %v3084
        %s3093 = scalar_lea.vmem %s426, 120
        %v3094 = vld [vmem:[%s3093] sm:$0xff]
        %v3095 = vld [vmem:[%s3093 + $0x8] sm:$0xff]
        %v3096 = vld [vmem:[%s3093 + $0x10] sm:$0xff]
        %v3097 = vld [vmem:[%s3093 + $0x18] sm:$0xff]
        %v3098 = vld [vmem:[%s3093 + $0x20] sm:$0x3]
        %v3100 = vsel %vm969, %v3094, 0
        %v3103 = vsel %vm969, %v3095, 0
        %v3106 = vsel %vm969, %v3096, 0
        %v3109 = vsel %vm969, %v3097, 0
        %v3112 = vsel %vm969, %v3098, 0
        %3114 = vmatprep.subr.mxu0 %v3086
        %3115 = vmatpush1.msra.mxu0 %v3085
        %3116 = vmatprep.subr.mxu0 %v3088
        %3117 = vmatpush1.msra.mxu0 %v3087
        %3118 = vmatprep.subr.mxu0 %v3090
        %3119 = vmatpush1.msra.mxu0 %v3089
        %3120 = vmatprep.subr.mxu0 %v3092
        %3121 = vmatpush1.msra.mxu0 %v3091
        %3122 = vmatprep.subr.mxu0 0.0
        %3123 = vmatpush1.msra.mxu0 0.0
        %3124 = vmatprep.subr.mxu0 0.0
        %3125 = vmatpush1.msra.mxu0 0.0
        %3126 = vmatprep.subr.mxu0 0.0
        %3127 = vmatpush1.msra.mxu0 0.0
        %3128 = vmatprep.subr.mxu0 0.0
        %3129 = vmatpush1.msra.mxu0 0.0
        %3130 = vmatprep.subr.mxu0 0.0
        %3131 = vmatpush1.msra.mxu0 0.0
        %3132 = vmatprep.subr.mxu0 0.0
        %3133 = vmatpush1.msra.mxu0 0.0
        %3134 = vmatprep.subr.mxu0 0.0
        %3135 = vmatpush1.msra.mxu0 0.0
        %3136 = vmatprep.subr.mxu0 0.0
        %3137 = vmatpush1.msra.mxu0 0.0
        %3138 = vmatprep.subr.mxu0 0.0
        %3139 = vmatpush1.msra.mxu0 0.0
        %3140 = vmatprep.subr.mxu0 0.0
        %3141 = vmatpush1.msra.mxu0 0.0
        %3142 = vmatprep.subr.mxu0 0.0
        %3143 = vmatpush1.msra.mxu0 0.0
        %3144 = vmatprep.subr.mxu0 0.0
        %3145 = vmatpush1.msra.mxu0 0.0
        %3146 = vmatprep.subr.mxu0 0.0
        %3147 = vmatpush1.msra.mxu0 0.0
        %3148 = vmatprep.subr.mxu0 0.0
        %3149 = vmatpush1.msra.mxu0 0.0
        %3150 = vmatprep.subr.mxu0 0.0
        %3151 = vmatpush1.msra.mxu0 0.0
        %3152 = vmatprep.subr.mxu0 0.0
        %3153 = vmatpush1.msra.mxu0 0.0
        %3154 = vmatprep.subr.mxu0 0.0
        %3155 = vmatpush1.msra.mxu0 0.0
        %3156 = vmatprep.subr.mxu0 0.0
        %3157 = vmatpush1.msra.mxu0 0.0
        %3158 = vmatprep.subr.mxu0 0.0
        %3159 = vmatpush1.msra.mxu0 0.0
        %3160 = vmatprep.subr.mxu0 0.0
        %3161 = vmatpush1.msra.mxu0 0.0
        %3162 = vmatprep.subr.mxu0 0.0
        %3163 = vmatpush1.msra.mxu0 0.0
        %3164 = vmatprep.subr.mxu0 0.0
        %3165 = vmatpush1.msra.mxu0 0.0
        %3166 = vmatprep.subr.mxu0 0.0
        %3167 = vmatpush1.msra.mxu0 0.0
        %3168 = vmatprep.subr.mxu0 0.0
        %3169 = vmatpush1.msra.mxu0 0.0
        %3170 = vmatprep.subr.mxu0 0.0
        %3171 = vmatpush1.msra.mxu0 0.0
        %3172 = vmatprep.subr.mxu0 0.0
        %3173 = vmatpush1.msra.mxu0 0.0
        %3174 = vmatprep.subr.mxu0 0.0
        %3175 = vmatpush1.msra.mxu0 0.0
        %3176 = vmatprep.subr.mxu0 0.0
        %3177 = vmatpush1.msra.mxu0 0.0
        %3178 = vmatprep.mubr.f32.mxu0 0.0
        %3179 = vmatmul.mubr.f32.gmra.mrb[0].mxu0 %v3100
        %v3180 = vpop.f32.mrb[0].mxu0
        %v3181 = vpop.f32.mrb[0].mxu0
        %3182 = vmatprep.mubr.f32.mxu0 0.0
        %3183 = vmatmul.mubr.f32.gmra.mrb[0].mxu0 %v3103
        %v3184 = vpop.f32.mrb[0].mxu0
        %v3185 = vpop.f32.mrb[0].mxu0
        %3186 = vmatprep.mubr.f32.mxu0 0.0
        %3187 = vmatmul.mubr.f32.gmra.mrb[0].mxu0 %v3106
        %v3188 = vpop.f32.mrb[0].mxu0
        %v3189 = vpop.f32.mrb[0].mxu0
        %3190 = vmatprep.mubr.f32.mxu0 0.0
        %3191 = vmatmul.mubr.f32.gmra.mrb[0].mxu0 %v3109
        %v3192 = vpop.f32.mrb[0].mxu0
        %v3193 = vpop.f32.mrb[0].mxu0
        %3194 = vmatprep.mubr.f32.mxu0 0.0
        %3195 = vmatmul.mubr.f32.gmra.mrb[0].mxu0 %v3112
        %v3196 = vpop.f32.mrb[0].mxu0
        %v3197 = vadd.f32 0.0, %v3196
        %v3198 = vpop.f32.mrb[0].mxu0
        %v3199 = vadd.f32 0.0, %v3198
        %3200 = vdwg.mxu0
        %v3201 = vadd.f32 %v2616, %v3197
        %v3202 = vadd.f32 %v2617, %v3199
        %v3203 = vld [vmem:[%s435] sm:$0x3]
        %3205 = vset.pattern.permute.xlu0 0
        %3206 = vperm.xlu0 %3205, %v3203
        %v3207 = vpop.permute.xlu0 %3206
        %v3209 = vadd.f32 %v3201, %v3207
        %v3210 = vadd.f32 %v3202, %v3207
        %v3211 = vmul.f32 %v3209, %v678
        %v3212 = vmul.f32 %v3210, %v682
        %v3213 = vcombine.low %v678, %v682
        %v3215 = vunpack.c.l.s4 1983009808
        %v3216 = vunpack.c.0.s8 %v3215
        %v3217 = vlaneseq
        %v3218 = vshrl.u32 %v3217, 7
        %v3219 = vsub.s32 %v3216, %v3218
        %v3220 = vrot.slane %v3213, %v3219
        %v3222 = vmul.f32 %v540, %v3220
        %v3225 = vunpack.c.l.s4 1983009808
        %v3226 = vunpack.c.0.s8 %v3225
        %v3227 = vlaneseq
        %v3228 = vshrl.u32 %v3227, 7
        %v3229 = vsub.s32 %v3226, %v3228
        %v3230 = vrot.slane %v3222, %v3229
        %v3231 = vcombine.high %v3230, %v3230
        %v3234 = vadd.f32 %v3211, %v3230
        %v3235 = vadd.f32 %v3212, %v3231
        %p3236 = scmp.lt.s32.totalorder %s21, 3
        // Predicated region
        $region61: #{vits_residual_coupling_block.1} parent=55 // pred_check
          %p3237 = pneg %p3236
        $region62: #{vits_residual_coupling_block.1} parent=55 // pred_check_branch
          %3239 = sbr.rel (%p3237) target = $region64
        $region63: #{vits_residual_coupling_block.1} parent=55 // pred_region
          %v3242 = vcombine.low %v3234, %v3235
          %v3244 = vunpack.c.l.s4 1983009808
          %v3245 = vunpack.c.0.s8 %v3244
          %v3246 = vlaneseq
          %v3247 = vshrl.u32 %v3246, 7
          %v3248 = vsub.s32 %v3245, %v3247
          %v3249 = vrot.slane %v3242, %v3248
          %3251 = vst [vmem:[#allocation2] sm:$0xf] %v3249
          %3252 = vst [vmem:[#allocation3] sm:$0xf] %v539
        $region64: #{vits_residual_coupling_block.1} parent=55 // pred_fallthru
          _
        %p3253 = scmp.eq.s32.totalorder %s21, 3
        // Predicated region
        $region65: #{vits_residual_coupling_block.1} parent=55 // pred_check
          %p3254 = pneg %p3253
        $region66: #{vits_residual_coupling_block.1} parent=55 // pred_check_branch
          %3256 = sbr.rel (%p3254) target = $region68
        $region67: #{vits_residual_coupling_block.1} parent=55 // pred_region
          %v3259 = vcombine.low %v3234, %v3235
          %3261 = vst [vmem:[#allocation5] sm:$0x33] %v3259
          %v3262 = vcombine.low %v539, %v539
          %v3264 = vunpack.c.l.s4 1983009808
          %v3265 = vunpack.c.0.s8 %v3264
          %v3266 = vlaneseq
          %v3267 = vshrl.u32 %v3266, 7
          %v3268 = vsub.s32 %v3265, %v3267
          %v3269 = vrot.slane %v3262, %v3268
          %3271 = vst [vmem:[#allocation5] sm:$0xcc] %v3269
        $region68: #{vits_residual_coupling_block.1} parent=55 // pred_fallthru
          _
        // Predicated region
        $region69: #{vits_residual_coupling_block.1} parent=55 // pred_check
          %p3272 = pneg %p258
        $region70: #{vits_residual_coupling_block.1} parent=55 // pred_check_branch
          %3274 = sbr.rel (%p3272) target = $region72
        $region71: #{vits_residual_coupling_block.1} parent=55 // pred_region
          %s3276 = ssub.s32 128, 128
          %3277 = vsyncadd [#allocation6], %s3276
          %s3279 = sshll.u32 [#allocation5], 4
          %s3280 = int_to_ptr.vmem [resolvable:$true] %s3279
          %3282 = dma.vmem_to_hbm [thread:$0]  %s3280, 128, %s9, [#allocation6]
        $region72: #{vits_residual_coupling_block.1} parent=55 // pred_fallthru
          _
        // Predicated region
        $region73: #{vits_residual_coupling_block.1} parent=55 // pred_check
          %p3283 = pneg %p258
        $region74: #{vits_residual_coupling_block.1} parent=55 // pred_check_branch
          %3285 = sbr.rel (%p3283) target = $region76
        $region75: #{vits_residual_coupling_block.1} parent=55 // pred_region
          %3286 = dma.done [#allocation6], 128
        $region76: #{vits_residual_coupling_block.1} parent=55 // pred_fallthru
          _
      $region56: #{vits_residual_coupling_block.1} parent=5 // pred_fallthru
        _
      %p3287 = scmp.le.s32.totalorder 2, %s16
      // Predicated region
      $region77: #{vits_residual_coupling_block.1} parent=5 // pred_check
        %p3288 = pneg %p3287
      $region78: #{vits_residual_coupling_block.1} parent=5 // pred_check_branch
        %3290 = sbr.rel (%p3288) target = $region80
      $region79: #{vits_residual_coupling_block.1} parent=5 // pred_region
        %s3291 = ssub.s32 %s16, 2
      $region80: #{vits_residual_coupling_block.1} parent=5 // pred_fallthru
        _
    $region6: #{vits_residual_coupling_block.1} parent=1 // loop_footer
      %s20 = sadd.s32 1, %s16
    $region7: #{vits_residual_coupling_block.1} parent=1 // loop_footer_branch
      %15 = sbr.rel target = $region3
    $region8: #{vits_residual_coupling_block.1} parent=1 // loop_exit
      _
    %3292 = vsyncpa [#allocation6], 1
    %s3293 = scalar_lea.sflag [#allocation6], 1
    %3294 = vsyncpa %s3293, 1

</llo_original>
